<compile_context>
chip_gen: v5e
topology: v5e:2x2
jax: 0.10.0
libtpu: 0.0.40
codegen_flags: <defaults>
</compile_context>

<pallas_src>
import functools
import math
from collections import namedtuple

import jax
import jax.numpy as jnp
from jax.experimental import pallas as pl
from jax.experimental.pallas import tpu as pltpu


Dims = namedtuple("Dims", ["in_dim", "n_hid", "num_types", "num_relations",
                           "n_heads", "d_k", "n_layers"])

# Explicit scoped-VMEM budget: above the per-gen defaults, below v7x's 64 MiB.
_VMEM_LIMIT = 48 * 1024 * 1024
_CPARAMS = pltpu.CompilerParams(dimension_semantics=("parallel",),
                                vmem_limit_bytes=_VMEM_LIMIT)


# ---------------------------------------------------------------------------
# Tiling helpers
# ---------------------------------------------------------------------------
def _pick_rows_tile(m, cap=512):
    """Largest power-of-two row tile <= cap that still leaves >= 2 grid steps.

    Bigger tiles amortize the ~0.35us/step pipeline overhead; >=2 parallel
    steps lets the grid split across v7x's two TensorCores.
    """
    limit = min(cap, max(8, m // 2))
    t = 8
    while t * 2 <= limit:
        t *= 2
    return t


def _build_type_groups(node_type, num_types, tm):
    """Type-sorted, tile-padded row layout for grouped per-type matmuls.

    Returns (gather_idx, inv_pos, tile_type, tm):
      gather_idx (P,)      padded-row -> original-row index (pad rows -> 0)
      inv_pos    (N,)      original-row -> padded-row index (for gather-back)
      tile_type  (P//tm,)  node type of each row tile (scalar-prefetched)
    P is a static upper bound; pad tiles compute garbage that is discarded.
    """
    n = node_type.shape[0]
    n_tiles = pl.cdiv(n, tm) + num_types          # static upper bound
    p = n_tiles * tm
    node_type = node_type.astype(jnp.int32)
    counts = jnp.bincount(node_type, length=num_types).astype(jnp.int32)
    padded_counts = ((counts + tm - 1) // tm) * tm
    group_start = jnp.concatenate(
        [jnp.zeros((1,), jnp.int32), jnp.cumsum(padded_counts)[:-1].astype(jnp.int32)])
    count_start = jnp.concatenate(
        [jnp.zeros((1,), jnp.int32), jnp.cumsum(counts)[:-1].astype(jnp.int32)])
    order = jnp.argsort(node_type).astype(jnp.int32)   # original idx sorted by type
    sorted_t = node_type[order]
    rank = jnp.arange(n, dtype=jnp.int32) - count_start[sorted_t]
    pos = group_start[sorted_t] + rank                 # padded position per node
    gather_idx = jnp.zeros((p,), jnp.int32).at[pos].set(order)
    inv_pos = jnp.zeros((n,), jnp.int32).at[order].set(pos)
    tile_type = jnp.zeros((n_tiles,), jnp.int32).at[pos // tm].set(sorted_t)
    return gather_idx, inv_pos, tile_type, tm


# ---------------------------------------------------------------------------
# Pallas kernels: type-grouped per-type linears (adapt / Q / A-update)
# ---------------------------------------------------------------------------
def _grouped_linear_kernel(tt_ref, x_ref, w_ref, b_ref, o_ref, *, act):
    del tt_ref  # only used by the index_maps (weight selection)
    y = jnp.dot(x_ref[...], w_ref[0], preferred_element_type=jnp.float32) + b_ref[0]
    if act == "tanh":
        y = jnp.tanh(y)           # f32 transcendental on the EUP (v5e: no bf16 EUP)
    o_ref[...] = y


def grouped_typed_linear(x, w, b, groups, act="none"):
    """out[n] = act(x[n] @ w[type(n)] + b[type(n)]) as a grouped matmul."""
    gather_idx, inv_pos, tile_type, tm = groups
    p = gather_idx.shape[0]
    t, din, dout = w.shape
    assert p % tm == 0
    x_pad = x[gather_idx].astype(jnp.bfloat16)        # bf16 MXU operand
    out_pad = pl.pallas_call(
        functools.partial(_grouped_linear_kernel, act=act),
        out_shape=jax.ShapeDtypeStruct((p, dout), jnp.float32),
        grid_spec=pltpu.PrefetchScalarGridSpec(
            num_scalar_prefetch=1,
            grid=(p // tm,),
            in_specs=[
                pl.BlockSpec((tm, din), lambda i, tt: (i, 0)),
                pl.BlockSpec((1, din, dout), lambda i, tt: (tt[i], 0, 0)),
                pl.BlockSpec((1, 1, dout), lambda i, tt: (tt[i], 0, 0)),
            ],
            out_specs=pl.BlockSpec((tm, dout), lambda i, tt: (i, 0)),
        ),
        compiler_params=_CPARAMS,
    )(tile_type, x_pad, w, b)
    return out_pad[inv_pos]


def _grouped_update_kernel(tt_ref, g_ref, x_ref, a_ref, w_ref, b_ref, o_ref):
    del tt_ref
    y = jnp.dot(g_ref[...], w_ref[0], preferred_element_type=jnp.float32) + b_ref[0]
    a = a_ref[...]                                    # (tm, 1) f32: sigmoid(skip[t])
    o_ref[...] = y * a + x_ref[...] * (1.0 - a)


def grouped_typed_update(g, x, alpha, w, b, groups):
    """out[n] = (g[n] @ Wa[type(n)] + ba[type(n)]) * alpha[n] + x[n]*(1-alpha[n])."""
    gather_idx, inv_pos, tile_type, tm = groups
    p = gather_idx.shape[0]
    t, dh, dout = w.shape
    assert p % tm == 0
    g_pad = g[gather_idx].astype(jnp.bfloat16)
    x_pad = x[gather_idx]                             # f32 residual path
    a_pad = alpha[gather_idx][:, None]                # (P, 1)
    out_pad = pl.pallas_call(
        _grouped_update_kernel,
        out_shape=jax.ShapeDtypeStruct((p, dout), jnp.float32),
        grid_spec=pltpu.PrefetchScalarGridSpec(
            num_scalar_prefetch=1,
            grid=(p // tm,),
            in_specs=[
                pl.BlockSpec((tm, dh), lambda i, tt: (i, 0)),
                pl.BlockSpec((tm, dout), lambda i, tt: (i, 0)),
                pl.BlockSpec((tm, 1), lambda i, tt: (i, 0)),
                pl.BlockSpec((1, dh, dout), lambda i, tt: (tt[i], 0, 0)),
                pl.BlockSpec((1, 1, dout), lambda i, tt: (tt[i], 0, 0)),
            ],
            out_specs=pl.BlockSpec((tm, dout), lambda i, tt: (i, 0)),
        ),
        compiler_params=_CPARAMS,
    )(tile_type, g_pad, x_pad, a_pad, w, b)
    return out_pad[inv_pos]


# ---------------------------------------------------------------------------
# Pallas kernel: fused per-edge pipeline
#   RelTemporalEncoding linear -> K|V (src-type-selected) -> per-head relation
#   transforms -> attention logits.  All intermediates live in VMEM.
# ---------------------------------------------------------------------------
def _edge_kernel(dte_ref, xj_ref, q_ref, ohs_ref, ohr_ref, pri_ref,
                 linw_ref, linb_ref, kvw_ref, kvb_ref, ratt_ref, rmsg_ref,
                 msg_ref, logit_ref, *, num_types, num_relations, n_heads, d_k,
                 scale):
    nh = n_heads * d_k
    # RelTemporalEncoding: src_vec = x_j + emb(t) @ lin_w + lin_b   (dropout=id)
    dte = jnp.dot(dte_ref[...], linw_ref[...],
                  preferred_element_type=jnp.float32) + linb_ref[...]
    src_vec = xj_ref[...] + dte                       # (te, nh) f32
    src_bf = src_vec.astype(jnp.bfloat16)

    # Source-type-selected K|V linear; K and V concatenated along Dout so each
    # type is a single wider (te, nh) @ (nh, 2*nh) MXU pass.
    # TODO(synk): for large num_types, group edges by (src_type, relation) with
    # scalar-prefetched tile offsets instead of masking over T here.
    kv = jnp.zeros((src_vec.shape[0], 2 * nh), jnp.float32)
    for t in range(num_types):
        y = jnp.dot(src_bf, kvw_ref[t],
                    preferred_element_type=jnp.float32) + kvb_ref[t]
        kv = kv + ohs_ref[:, t:t + 1] * y

    q = q_ref[...]                                    # (te, nh) f32
    logit_cols = []
    msg_cols = []
    for h in range(n_heads):
        lo = h * d_k
        kh = kv[:, lo:lo + d_k]                       # (te, d_k)
        vh = kv[:, nh + lo:nh + lo + d_k]
        qh = q[:, lo:lo + d_k]
        k_rel = jnp.zeros_like(kh)
        m_rel = jnp.zeros_like(vh)
        for r in range(num_relations):
            sel = ohr_ref[:, r:r + 1]
            a = ratt_ref[r * n_heads + h]             # (d_k, d_k), no block-diag
            m = rmsg_ref[r * n_heads + h]
            k_rel = k_rel + sel * jnp.dot(kh, a, preferred_element_type=jnp.float32)
            m_rel = m_rel + sel * jnp.dot(vh, m, preferred_element_type=jnp.float32)
        # attention logit: per-head multiply + lane reduce (no indicator matmul)
        logit_cols.append(jnp.sum(qh * k_rel, axis=-1, keepdims=True))
        msg_cols.append(m_rel)

    logits = jnp.concatenate(logit_cols, axis=1)      # (te, H)
    logit_ref[...] = logits * pri_ref[...] * scale
    msg_ref[...] = jnp.concatenate(msg_cols, axis=1)  # (te, nh)


def fused_edge_compute(lp, dims, te, dte_in, xj, q_e, oh_src, oh_rel, pri_e):
    e_pad = xj.shape[0]
    nh, H, dk = dims.n_hid, dims.n_heads, dims.d_k
    T, R = dims.num_types, dims.num_relations
    kern = functools.partial(_edge_kernel, num_types=T, num_relations=R,
                             n_heads=H, d_k=dk, scale=1.0 / math.sqrt(dk))
    msg, logits = pl.pallas_call(
        kern,
        out_shape=(jax.ShapeDtypeStruct((e_pad, nh), jnp.float32),
                   jax.ShapeDtypeStruct((e_pad, H), jnp.float32)),
        grid_spec=pltpu.PrefetchScalarGridSpec(
            num_scalar_prefetch=0,
            grid=(e_pad // te,),
            in_specs=[
                pl.BlockSpec((te, 2 * nh), lambda i: (i, 0)),        # emb[t]
                pl.BlockSpec((te, nh), lambda i: (i, 0)),            # x[src]
                pl.BlockSpec((te, nh), lambda i: (i, 0)),            # q[dst]
                pl.BlockSpec((te, T), lambda i: (i, 0)),             # onehot src type
                pl.BlockSpec((te, R), lambda i: (i, 0)),             # onehot relation
                pl.BlockSpec((te, H), lambda i: (i, 0)),             # relation_pri
                pl.BlockSpec((2 * nh, nh), lambda i: (0, 0)),        # lin_w (RTE)
                pl.BlockSpec((1, nh), lambda i: (0, 0)),             # lin_b
                pl.BlockSpec((T, nh, 2 * nh), lambda i: (0, 0, 0)),  # K|V weights
                pl.BlockSpec((T, 1, 2 * nh), lambda i: (0, 0, 0)),   # K|V biases
                pl.BlockSpec((R * H, dk, dk), lambda i: (0, 0, 0)),  # rel_att
                pl.BlockSpec((R * H, dk, dk), lambda i: (0, 0, 0)),  # rel_msg
            ],
            out_specs=[
                pl.BlockSpec((te, nh), lambda i: (i, 0)),
                pl.BlockSpec((te, H), lambda i: (i, 0)),
            ],
        ),
        compiler_params=_CPARAMS,
    )(dte_in, xj, q_e, oh_src, oh_rel, pri_e,
      lp["lin_w"], lp["lin_b"], lp["kv_w"], lp["kv_b"],
      lp["rel_att"], lp["rel_msg"])
    return msg, logits


# ---------------------------------------------------------------------------
# Parameter construction (deterministic, synthetic)
# ---------------------------------------------------------------------------
def _linear_params(key, fan_in, fan_out, num):
    kw, kb = jax.random.split(key)
    bound = 1.0 / math.sqrt(fan_in)
    w = jax.random.uniform(kw, (num, fan_in, fan_out), jnp.float32, -bound, bound)
    b = jax.random.uniform(kb, (num, 1, fan_out), jnp.float32, -bound, bound)
    return w, b


def _glorot(key, shape):
    stdv = math.sqrt(6.0 / (shape[-2] + shape[-1]))
    return jax.random.uniform(key, shape, jnp.float32, -stdv, stdv)


def _rel_temporal_table(n_hid, max_len=240):
    position = jnp.arange(0.0, max_len, dtype=jnp.float32)[:, None]
    div_term = 1.0 / (10000.0 ** jnp.arange(0.0, n_hid * 2, 2.0, dtype=jnp.float32)
                      / n_hid / 2.0)
    emb = jnp.zeros((max_len, n_hid * 2), jnp.float32)
    emb = emb.at[:, 0::2].set(jnp.sin(position * div_term) / math.sqrt(n_hid))
    emb = emb.at[:, 1::2].set(jnp.cos(position * div_term) / math.sqrt(n_hid))
    return emb


def init_gnn_params(key, in_dim, n_hid, num_types, num_relations, n_heads,
                    n_layers, max_len=240):
    d_k = n_hid // n_heads
    keys = jax.random.split(key, 1 + n_layers)
    adapt_w, adapt_b = _linear_params(keys[0], in_dim, n_hid, num_types)
    emb_table = _rel_temporal_table(n_hid, max_len)
    layers = []
    for l in range(n_layers):
        lk = jax.random.split(keys[1 + l], 7)
        k_w, k_b = _linear_params(lk[0], n_hid, n_hid, num_types)
        q_w, q_b = _linear_params(lk[1], n_hid, n_hid, num_types)
        v_w, v_b = _linear_params(lk[2], n_hid, n_hid, num_types)
        a_w, a_b = _linear_params(lk[3], n_hid, n_hid, num_types)
        rel_att = _glorot(lk[4], (num_relations, n_heads, d_k, d_k))
        rel_msg = _glorot(lk[5], (num_relations, n_heads, d_k, d_k))
        lin_w, lin_b = _linear_params(lk[6], n_hid * 2, n_hid, 1)
        layers.append(dict(
            q_w=q_w.astype(jnp.bfloat16), q_b=q_b,
            # K|V fused along Dout -> one (nh, 2*nh) MXU pass per source type.
            kv_w=jnp.concatenate([k_w, v_w], axis=2).astype(jnp.bfloat16),
            kv_b=jnp.concatenate([k_b, v_b], axis=2),
            a_w=a_w.astype(jnp.bfloat16), a_b=a_b,
            # relation transforms kept per-head (no block-diagonal zeros)
            rel_att=rel_att.reshape(num_relations * n_heads, d_k, d_k),
            rel_msg=rel_msg.reshape(num_relations * n_heads, d_k, d_k),
            relation_pri=jnp.ones((num_types, num_relations, num_types, n_heads),
                                  jnp.float32),
            skip=jnp.ones((num_types,), jnp.float32),
            emb_table=emb_table,
            lin_w=lin_w[0].astype(jnp.bfloat16),    # (2*n_hid, n_hid)
            lin_b=lin_b[0],                         # (1, n_hid)
        ))
    params = dict(adapt_w=adapt_w.astype(jnp.bfloat16), adapt_b=adapt_b,
                  layers=layers)
    dims = Dims(in_dim, n_hid, num_types, num_relations, n_heads, d_k, n_layers)
    return params, dims


# ---------------------------------------------------------------------------
# Forward pass
# ---------------------------------------------------------------------------
def hgt_conv(lp, dims, x, node_type, groups, edge_index, edge_type, edge_time):
    nh, H, dk = dims.n_hid, dims.n_heads, dims.d_k
    T, R = dims.num_types, dims.num_relations
    n = x.shape[0]
    e = edge_index.shape[1]

    # per-target-type Q projection, computed once per node (grouped matmul)
    q_node = grouped_typed_linear(x, lp["q_w"], lp["q_b"], groups)      # (N, nh)

    # pad the edge list to a multiple of the row tile so every kernel block is
    # full; pad rows point at node 0 / relation 0 and are sliced off afterwards.
    te = _pick_rows_tile(e)
    e_pad = pl.cdiv(e, te) * te
    pad = e_pad - e
    src = jnp.pad(edge_index[0], (0, pad))
    dst = jnp.pad(edge_index[1], (0, pad))
    et = jnp.pad(edge_type, (0, pad))
    ett = jnp.pad(edge_time, (0, pad))

    # data-dependent gathers stay in plain JAX
    dte_in = lp["emb_table"][ett].astype(jnp.bfloat16)                  # (Ep, 2nh)
    xj = x[src]                                                         # (Ep, nh)
    q_e = q_node[dst]                                                   # (Ep, nh)
    oh_src = jax.nn.one_hot(node_type[src], T, dtype=jnp.float32)       # (Ep, T)
    oh_rel = jax.nn.one_hot(et, R, dtype=jnp.float32)                   # (Ep, R)
    pri_e = lp["relation_pri"][node_type[dst], et, node_type[src], :]   # (Ep, H)

    msg, logits = fused_edge_compute(lp, dims, te, dte_in, xj, q_e,
                                     oh_src, oh_rel, pri_e)
    msg, logits, dst = msg[:e], logits[:e], dst[:e]

    # TODO(synk): per-target-node segment softmax + scatter-add aggregation is
    # a data-dependent scatter; kept in plain JAX (segment_max / segment_sum).
    seg_max = jax.ops.segment_max(logits, dst, num_segments=n)
    att = jnp.exp(logits - seg_max[dst])
    seg_sum = jax.ops.segment_sum(att, dst, num_segments=n)
    att = att / (seg_sum[dst] + 1e-16)
    weighted = (msg.reshape(e, H, dk) * att[:, :, None]).reshape(e, nh)
    aggr = jax.ops.segment_sum(weighted, dst, num_segments=n)           # (N, nh)

    # update: exact-erf GELU (plain JAX, fuses into the gather), then
    # type-grouped A-linear with the sigmoid skip gate inside the kernel.
    g = jax.nn.gelu(aggr, approximate=False)
    alpha = jax.nn.sigmoid(lp["skip"])[node_type]                       # (N,)
    return grouped_typed_update(g, x, alpha, lp["a_w"], lp["a_b"], groups)


def gnn_forward(params, dims, node_feature, node_type, edge_time, edge_type,
                edge_index):
    tm = _pick_rows_tile(node_feature.shape[0])
    groups = _build_type_groups(node_type, dims.num_types, tm)
    # adapt_ws[type] + tanh (dropout = identity in eval)
    h = grouped_typed_linear(node_feature, params["adapt_w"], params["adapt_b"],
                             groups, act="tanh")
    for lp in params["layers"]:
        h = hgt_conv(lp, dims, h, node_type, groups, edge_index, edge_type,
                     edge_time)
    return h


gnn_forward_jit = jax.jit(gnn_forward, static_argnums=(1,))


# ---------------------------------------------------------------------------
if __name__ == "__main__":
    N, E = 64, 128
    IN_DIM, N_HID = 16, 32
    NUM_TYPES, NUM_RELATIONS, N_HEADS, N_LAYERS = 2, 2, 4, 2
    MAX_LEN = 240

    key = jax.random.PRNGKey(0)
    kp, kf, kt, ke, ket, kei = jax.random.split(key, 6)

    params, dims = init_gnn_params(kp, IN_DIM, N_HID, NUM_TYPES, NUM_RELATIONS,
                                   N_HEADS, N_LAYERS, MAX_LEN)

    node_feature = jax.random.normal(kf, (N, IN_DIM), jnp.float32)
    node_type = jax.random.randint(kt, (N,), 0, NUM_TYPES, jnp.int32)
    edge_index = jax.random.randint(kei, (2, E), 0, N, jnp.int32)
    edge_type = jax.random.randint(ke, (E,), 0, NUM_RELATIONS, jnp.int32)
    edge_time = jax.random.randint(ket, (E,), 0, MAX_LEN, jnp.int32)

    out = gnn_forward_jit(params, dims, node_feature, node_type, edge_time,
                          edge_type, edge_index)
    out = jax.block_until_ready(out)
    assert out.shape == (N, N_HID) and out.dtype == jnp.float32
    assert bool(jnp.all(jnp.isfinite(out)))
    print("KERNEL_OK")
</pallas_src>

<mosaic_0001>
module attributes {stable_mosaic.version = 11 : i64} {
  func.func @_grouped_linear_kernel(%arg0: i32, %arg1: memref<4xi32, #tpu.memory_space<smem>>, %arg2: memref<32x16xbf16, #tpu.memory_space<vmem>>, %arg3: memref<1x16x32xbf16, #tpu.memory_space<vmem>>, %arg4: memref<1x1x32xf32, #tpu.memory_space<vmem>>, %arg5: memref<32x32xf32, #tpu.memory_space<vmem>>) attributes {dimension_semantics = [#tpu.dimension_semantics<parallel>], iteration_bounds = array<i64: 4>, scalar_prefetch = 1 : i64, scratch_operands = 0 : i64, tpu.core_type = #tpu.core_type<tc>, window_params = [{transform_indices = @transform_0, window_bounds = array<i64: 32, 16>}, {transform_indices = @transform_1, window_bounds = array<i64: 1, 16, 32>}, {transform_indices = @transform_2, window_bounds = array<i64: 1, 1, 32>}, {transform_indices = @transform_3, window_bounds = array<i64: 32, 32>}]} {
    %c0 = arith.constant 0 : index
    %c0_0 = arith.constant 0 : index
    %0 = vector.load %arg2[%c0, %c0_0] : memref<32x16xbf16, #tpu.memory_space<vmem>>, vector<32x16xbf16>
    %c0_1 = arith.constant 0 : index
    %c0_2 = arith.constant 0 : index
    %c0_3 = arith.constant 0 : index
    %1 = vector.load %arg3[%c0_1, %c0_2, %c0_3] : memref<1x16x32xbf16, #tpu.memory_space<vmem>>, vector<1x16x32xbf16>
    %2 = vector.shape_cast %1 : vector<1x16x32xbf16> to vector<16x32xbf16>
    %cst = arith.constant dense<0.000000e+00> : vector<32x32xf32>
    %3 = tpu.matmul %0, %2, %cst {dimension_numbers = #tpu.dot_dimension_numbers<[1], [0], [0], [1], [0, 0, 1, 1], [], []>} : vector<32x16xbf16>, vector<16x32xbf16>, vector<32x32xf32> -> vector<32x32xf32>
    %c0_4 = arith.constant 0 : index
    %c0_5 = arith.constant 0 : index
    %c0_6 = arith.constant 0 : index
    %4 = vector.load %arg4[%c0_4, %c0_5, %c0_6] : memref<1x1x32xf32, #tpu.memory_space<vmem>>, vector<1x1x32xf32>
    %5 = vector.shape_cast %4 : vector<1x1x32xf32> to vector<1x32xf32>
    %6 = vector.broadcast %5 : vector<1x32xf32> to vector<32x32xf32>
    %7 = arith.addf %3, %6 : vector<32x32xf32>
    %8 = math.tanh %7 : vector<32x32xf32>
    %c0_7 = arith.constant 0 : index
    %c0_8 = arith.constant 0 : index
    %9 = vector.load %arg5[%c0_7, %c0_8] : memref<32x32xf32, #tpu.memory_space<vmem>>, vector<32x32xf32>
    tpu.vector_store %arg5[%c0_7, %c0_8], %8 {strides = array<i32>} : memref<32x32xf32, #tpu.memory_space<vmem>>, vector<32x32xf32>,
    return
  }
  func.func @transform_0(%arg0: i32, %arg1: memref<4xi32, #tpu.memory_space<smem>>) -> (i32, i32) {
    %c0_i32 = arith.constant 0 : i32
    %c0_i32_0 = arith.constant 0 : i32
    return %arg0, %c0_i32 : i32, i32
  }
  func.func @transform_1(%arg0: i32, %arg1: memref<4xi32, #tpu.memory_space<smem>>) -> (i32, i32, i32) {
    %0 = arith.index_cast %arg0 : i32 to index
    %1 = memref.load %arg1[%0] : memref<4xi32, #tpu.memory_space<smem>>
    %c0_i32 = arith.constant 0 : i32
    %c0_i32_0 = arith.constant 0 : i32
    %c0_i32_1 = arith.constant 0 : i32
    return %1, %c0_i32, %c0_i32_0 : i32, i32, i32
  }
  func.func @transform_2(%arg0: i32, %arg1: memref<4xi32, #tpu.memory_space<smem>>) -> (i32, i32, i32) {
    %0 = arith.index_cast %arg0 : i32 to index
    %1 = memref.load %arg1[%0] : memref<4xi32, #tpu.memory_space<smem>>
    %c0_i32 = arith.constant 0 : i32
    %c0_i32_0 = arith.constant 0 : i32
    %c0_i32_1 = arith.constant 0 : i32
    return %1, %c0_i32, %c0_i32_0 : i32, i32, i32
  }
  func.func @transform_3(%arg0: i32, %arg1: memref<4xi32, #tpu.memory_space<smem>>) -> (i32, i32) {
    %c0_i32 = arith.constant 0 : i32
    %c0_i32_0 = arith.constant 0 : i32
    return %arg0, %c0_i32 : i32, i32
  }
}

module attributes {stable_mosaic.version = 11 : i64} {
  func.func @_grouped_linear_kernel(%arg0: i32, %arg1: memref<4xi32, #tpu.memory_space<smem>>, %arg2: memref<32x32xbf16, #tpu.memory_space<vmem>>, %arg3: memref<1x32x32xbf16, #tpu.memory_space<vmem>>, %arg4: memref<1x1x32xf32, #tpu.memory_space<vmem>>, %arg5: memref<32x32xf32, #tpu.memory_space<vmem>>) attributes {dimension_semantics = [#tpu.dimension_semantics<parallel>], iteration_bounds = array<i64: 4>, scalar_prefetch = 1 : i64, scratch_operands = 0 : i64, tpu.core_type = #tpu.core_type<tc>, window_params = [{transform_indices = @transform_0, window_bounds = array<i64: 32, 32>}, {transform_indices = @transform_1, window_bounds = array<i64: 1, 32, 32>}, {transform_indices = @transform_2, window_bounds = array<i64: 1, 1, 32>}, {transform_indices = @transform_3, window_bounds = array<i64: 32, 32>}]} {
    %c0 = arith.constant 0 : index
    %c0_0 = arith.constant 0 : index
    %0 = vector.load %arg2[%c0, %c0_0] : memref<32x32xbf16, #tpu.memory_space<vmem>>, vector<32x32xbf16>
    %c0_1 = arith.constant 0 : index
    %c0_2 = arith.constant 0 : index
    %c0_3 = arith.constant 0 : index
    %1 = vector.load %arg3[%c0_1, %c0_2, %c0_3] : memref<1x32x32xbf16, #tpu.memory_space<vmem>>, vector<1x32x32xbf16>
    %2 = vector.shape_cast %1 : vector<1x32x32xbf16> to vector<32x32xbf16>
    %cst = arith.constant dense<0.000000e+00> : vector<32x32xf32>
    %3 = tpu.matmul %0, %2, %cst {dimension_numbers = #tpu.dot_dimension_numbers<[1], [0], [0], [1], [0, 0, 1, 1], [], []>} : vector<32x32xbf16>, vector<32x32xbf16>, vector<32x32xf32> -> vector<32x32xf32>
    %c0_4 = arith.constant 0 : index
    %c0_5 = arith.constant 0 : index
    %c0_6 = arith.constant 0 : index
    %4 = vector.load %arg4[%c0_4, %c0_5, %c0_6] : memref<1x1x32xf32, #tpu.memory_space<vmem>>, vector<1x1x32xf32>
    %5 = vector.shape_cast %4 : vector<1x1x32xf32> to vector<1x32xf32>
    %6 = vector.broadcast %5 : vector<1x32xf32> to vector<32x32xf32>
    %7 = arith.addf %3, %6 : vector<32x32xf32>
    %c0_7 = arith.constant 0 : index
    %c0_8 = arith.constant 0 : index
    %8 = vector.load %arg5[%c0_7, %c0_8] : memref<32x32xf32, #tpu.memory_space<vmem>>, vector<32x32xf32>
    tpu.vector_store %arg5[%c0_7, %c0_8], %7 {strides = array<i32>} : memref<32x32xf32, #tpu.memory_space<vmem>>, vector<32x32xf32>,
    return
  }
  func.func @transform_0(%arg0: i32, %arg1: memref<4xi32, #tpu.memory_space<smem>>) -> (i32, i32) {
    %c0_i32 = arith.constant 0 : i32
    %c0_i32_0 = arith.constant 0 : i32
    return %arg0, %c0_i32 : i32, i32
  }
  func.func @transform_1(%arg0: i32, %arg1: memref<4xi32, #tpu.memory_space<smem>>) -> (i32, i32, i32) {
    %0 = arith.index_cast %arg0 : i32 to index
    %1 = memref.load %arg1[%0] : memref<4xi32, #tpu.memory_space<smem>>
    %c0_i32 = arith.constant 0 : i32
    %c0_i32_0 = arith.constant 0 : i32
    %c0_i32_1 = arith.constant 0 : i32
    return %1, %c0_i32, %c0_i32_0 : i32, i32, i32
  }
  func.func @transform_2(%arg0: i32, %arg1: memref<4xi32, #tpu.memory_space<smem>>) -> (i32, i32, i32) {
    %0 = arith.index_cast %arg0 : i32 to index
    %1 = memref.load %arg1[%0] : memref<4xi32, #tpu.memory_space<smem>>
    %c0_i32 = arith.constant 0 : i32
    %c0_i32_0 = arith.constant 0 : i32
    %c0_i32_1 = arith.constant 0 : i32
    return %1, %c0_i32, %c0_i32_0 : i32, i32, i32
  }
  func.func @transform_3(%arg0: i32, %arg1: memref<4xi32, #tpu.memory_space<smem>>) -> (i32, i32) {
    %c0_i32 = arith.constant 0 : i32
    %c0_i32_0 = arith.constant 0 : i32
    return %arg0, %c0_i32 : i32, i32
  }
}

module attributes {stable_mosaic.version = 11 : i64} {
  func.func @_edge_kernel(%arg0: i32, %arg1: memref<64x64xbf16, #tpu.memory_space<vmem>>, %arg2: memref<64x32xf32, #tpu.memory_space<vmem>>, %arg3: memref<64x32xf32, #tpu.memory_space<vmem>>, %arg4: memref<64x2xf32, #tpu.memory_space<vmem>>, %arg5: memref<64x2xf32, #tpu.memory_space<vmem>>, %arg6: memref<64x4xf32, #tpu.memory_space<vmem>>, %arg7: memref<64x32xbf16, #tpu.memory_space<vmem>>, %arg8: memref<1x32xf32, #tpu.memory_space<vmem>>, %arg9: memref<2x32x64xbf16, #tpu.memory_space<vmem>>, %arg10: memref<2x1x64xf32, #tpu.memory_space<vmem>>, %arg11: memref<8x8x8xf32, #tpu.memory_space<vmem>>, %arg12: memref<8x8x8xf32, #tpu.memory_space<vmem>>, %arg13: memref<64x32xf32, #tpu.memory_space<vmem>>, %arg14: memref<64x4xf32, #tpu.memory_space<vmem>>) attributes {dimension_semantics = [#tpu.dimension_semantics<parallel>], iteration_bounds = array<i64: 2>, scalar_prefetch = 0 : i64, scratch_operands = 0 : i64, tpu.core_type = #tpu.core_type<tc>, window_params = [{transform_indices = @transform_0, window_bounds = array<i64: 64, 64>}, {transform_indices = @transform_1, window_bounds = array<i64: 64, 32>}, {transform_indices = @transform_2, window_bounds = array<i64: 64, 32>}, {transform_indices = @transform_3, window_bounds = array<i64: 64, 2>}, {transform_indices = @transform_4, window_bounds = array<i64: 64, 2>}, {transform_indices = @transform_5, window_bounds = array<i64: 64, 4>}, {pipeline_mode = #tpu.pipeline_mode<synchronous>, transform_indices = @transform_6, window_bounds = array<i64: 64, 32>}, {pipeline_mode = #tpu.pipeline_mode<synchronous>, transform_indices = @transform_7, window_bounds = array<i64: 1, 32>}, {pipeline_mode = #tpu.pipeline_mode<synchronous>, transform_indices = @transform_8, window_bounds = array<i64: 2, 32, 64>}, {pipeline_mode = #tpu.pipeline_mode<synchronous>, transform_indices = @transform_9, window_bounds = array<i64: 2, 1, 64>}, {pipeline_mode = #tpu.pipeline_mode<synchronous>, transform_indices = @transform_10, window_bounds = array<i64: 8, 8, 8>}, {pipeline_mode = #tpu.pipeline_mode<synchronous>, transform_indices = @transform_11, window_bounds = array<i64: 8, 8, 8>}, {transform_indices = @transform_12, window_bounds = array<i64: 64, 32>}, {transform_indices = @transform_13, window_bounds = array<i64: 64, 4>}]} {
    %c0 = arith.constant 0 : index
    %c0_0 = arith.constant 0 : index
    %0 = vector.load %arg1[%c0, %c0_0] : memref<64x64xbf16, #tpu.memory_space<vmem>>, vector<64x64xbf16>
    %c0_1 = arith.constant 0 : index
    %c0_2 = arith.constant 0 : index
    %1 = vector.load %arg7[%c0_1, %c0_2] : memref<64x32xbf16, #tpu.memory_space<vmem>>, vector<64x32xbf16>
    %cst = arith.constant dense<0.000000e+00> : vector<64x32xf32>
    %2 = tpu.matmul %0, %1, %cst {dimension_numbers = #tpu.dot_dimension_numbers<[1], [0], [0], [1], [0, 0, 1, 1], [], []>} : vector<64x64xbf16>, vector<64x32xbf16>, vector<64x32xf32> -> vector<64x32xf32>
    %c0_3 = arith.constant 0 : index
    %c0_4 = arith.constant 0 : index
    %3 = vector.load %arg8[%c0_3, %c0_4] : memref<1x32xf32, #tpu.memory_space<vmem>>, vector<1x32xf32>
    %4 = vector.broadcast %3 : vector<1x32xf32> to vector<64x32xf32>
    %5 = arith.addf %2, %4 : vector<64x32xf32>
    %c0_5 = arith.constant 0 : index
    %c0_6 = arith.constant 0 : index
    %6 = vector.load %arg2[%c0_5, %c0_6] : memref<64x32xf32, #tpu.memory_space<vmem>>, vector<64x32xf32>
    %7 = arith.addf %6, %5 : vector<64x32xf32>
    %8 = arith.truncf %7 : vector<64x32xf32> to vector<64x32xbf16>
    %cst_7 = arith.constant 0.000000e+00 : f32
    %9 = vector.broadcast %cst_7 : f32 to vector<64x64xf32>
    %c0_8 = arith.constant 0 : index
    %c0_9 = arith.constant 0 : index
    %c0_10 = arith.constant 0 : index
    %10 = vector.load %arg9[%c0_8, %c0_9, %c0_10] : memref<2x32x64xbf16, #tpu.memory_space<vmem>>, vector<1x32x64xbf16>
    %11 = vector.shape_cast %10 : vector<1x32x64xbf16> to vector<32x64xbf16>
    %cst_11 = arith.constant dense<0.000000e+00> : vector<64x64xf32>
    %12 = tpu.matmul %8, %11, %cst_11 {dimension_numbers = #tpu.dot_dimension_numbers<[1], [0], [0], [1], [0, 0, 1, 1], [], []>} : vector<64x32xbf16>, vector<32x64xbf16>, vector<64x64xf32> -> vector<64x64xf32>
    %c0_12 = arith.constant 0 : index
    %c0_13 = arith.constant 0 : index
    %c0_14 = arith.constant 0 : index
    %13 = vector.load %arg10[%c0_12, %c0_13, %c0_14] : memref<2x1x64xf32, #tpu.memory_space<vmem>>, vector<1x1x64xf32>
    %14 = vector.shape_cast %13 : vector<1x1x64xf32> to vector<1x64xf32>
    %15 = vector.broadcast %14 : vector<1x64xf32> to vector<64x64xf32>
    %16 = arith.addf %12, %15 : vector<64x64xf32>
    %c0_15 = arith.constant 0 : index
    %c0_16 = arith.constant 0 : index
    %17 = vector.load %arg4[%c0_15, %c0_16] : memref<64x2xf32, #tpu.memory_space<vmem>>, vector<64x1xf32>
    %18 = vector.broadcast %17 : vector<64x1xf32> to vector<64x64xf32>
    %19 = arith.mulf %18, %16 : vector<64x64xf32>
    %20 = arith.addf %9, %19 : vector<64x64xf32>
    %c1 = arith.constant 1 : index
    %c0_17 = arith.constant 0 : index
    %c0_18 = arith.constant 0 : index
    %21 = vector.load %arg9[%c1, %c0_17, %c0_18] : memref<2x32x64xbf16, #tpu.memory_space<vmem>>, vector<1x32x64xbf16>
    %22 = vector.shape_cast %21 : vector<1x32x64xbf16> to vector<32x64xbf16>
    %cst_19 = arith.constant dense<0.000000e+00> : vector<64x64xf32>
    %23 = tpu.matmul %8, %22, %cst_19 {dimension_numbers = #tpu.dot_dimension_numbers<[1], [0], [0], [1], [0, 0, 1, 1], [], []>} : vector<64x32xbf16>, vector<32x64xbf16>, vector<64x64xf32> -> vector<64x64xf32>
    %c1_20 = arith.constant 1 : index
    %c0_21 = arith.constant 0 : index
    %c0_22 = arith.constant 0 : index
    %24 = vector.load %arg10[%c1_20, %c0_21, %c0_22] : memref<2x1x64xf32, #tpu.memory_space<vmem>>, vector<1x1x64xf32>
    %25 = vector.shape_cast %24 : vector<1x1x64xf32> to vector<1x64xf32>
    %26 = vector.broadcast %25 : vector<1x64xf32> to vector<64x64xf32>
    %27 = arith.addf %23, %26 : vector<64x64xf32>
    %c0_23 = arith.constant 0 : index
    %c1_24 = arith.constant 1 : index
    %28 = vector.load %arg4[%c0_23, %c1_24] : memref<64x2xf32, #tpu.memory_space<vmem>>, vector<64x1xf32>
    %29 = vector.broadcast %28 : vector<64x1xf32> to vector<64x64xf32>
    %30 = arith.mulf %29, %27 : vector<64x64xf32>
    %31 = arith.addf %20, %30 : vector<64x64xf32>
    %c0_25 = arith.constant 0 : index
    %c0_26 = arith.constant 0 : index
    %32 = vector.load %arg3[%c0_25, %c0_26] : memref<64x32xf32, #tpu.memory_space<vmem>>, vector<64x32xf32>
    %33 = vector.extract_strided_slice %31 {offsets = [0, 0], sizes = [64, 8], strides = [1, 1]} : vector<64x64xf32> to vector<64x8xf32>
    %34 = vector.extract_strided_slice %31 {offsets = [0, 32], sizes = [64, 8], strides = [1, 1]} : vector<64x64xf32> to vector<64x8xf32>
    %35 = vector.extract_strided_slice %32 {offsets = [0, 0], sizes = [64, 8], strides = [1, 1]} : vector<64x32xf32> to vector<64x8xf32>
    %cst_27 = arith.constant 0.000000e+00 : f32
    %36 = vector.broadcast %cst_27 : f32 to vector<64x8xf32>
    %cst_28 = arith.constant 0.000000e+00 : f32
    %37 = vector.broadcast %cst_28 : f32 to vector<64x8xf32>
    %c0_29 = arith.constant 0 : index
    %c0_30 = arith.constant 0 : index
    %38 = vector.load %arg5[%c0_29, %c0_30] : memref<64x2xf32, #tpu.memory_space<vmem>>, vector<64x1xf32>
    %c0_31 = arith.constant 0 : index
    %c0_32 = arith.constant 0 : index
    %c0_33 = arith.constant 0 : index
    %39 = vector.load %arg11[%c0_31, %c0_32, %c0_33] : memref<8x8x8xf32, #tpu.memory_space<vmem>>, vector<1x8x8xf32>
    %40 = vector.shape_cast %39 : vector<1x8x8xf32> to vector<8x8xf32>
    %c0_34 = arith.constant 0 : index
    %c0_35 = arith.constant 0 : index
    %c0_36 = arith.constant 0 : index
    %41 = vector.load %arg12[%c0_34, %c0_35, %c0_36] : memref<8x8x8xf32, #tpu.memory_space<vmem>>, vector<1x8x8xf32>
    %42 = vector.shape_cast %41 : vector<1x8x8xf32> to vector<8x8xf32>
    %cst_37 = arith.constant dense<0.000000e+00> : vector<64x8xf32>
    %43 = tpu.matmul %33, %40, %cst_37 {dimension_numbers = #tpu.dot_dimension_numbers<[1], [0], [0], [1], [0, 0, 1, 1], [], []>} : vector<64x8xf32>, vector<8x8xf32>, vector<64x8xf32> -> vector<64x8xf32>
    %44 = vector.broadcast %38 : vector<64x1xf32> to vector<64x8xf32>
    %45 = arith.mulf %44, %43 : vector<64x8xf32>
    %46 = arith.addf %36, %45 : vector<64x8xf32>
    %cst_38 = arith.constant dense<0.000000e+00> : vector<64x8xf32>
    %47 = tpu.matmul %34, %42, %cst_38 {dimension_numbers = #tpu.dot_dimension_numbers<[1], [0], [0], [1], [0, 0, 1, 1], [], []>} : vector<64x8xf32>, vector<8x8xf32>, vector<64x8xf32> -> vector<64x8xf32>
    %48 = vector.broadcast %38 : vector<64x1xf32> to vector<64x8xf32>
    %49 = arith.mulf %48, %47 : vector<64x8xf32>
    %50 = arith.addf %37, %49 : vector<64x8xf32>
    %c0_39 = arith.constant 0 : index
    %c1_40 = arith.constant 1 : index
    %51 = vector.load %arg5[%c0_39, %c1_40] : memref<64x2xf32, #tpu.memory_space<vmem>>, vector<64x1xf32>
    %c4 = arith.constant 4 : index
    %c0_41 = arith.constant 0 : index
    %c0_42 = arith.constant 0 : index
    %52 = vector.load %arg11[%c4, %c0_41, %c0_42] : memref<8x8x8xf32, #tpu.memory_space<vmem>>, vector<1x8x8xf32>
    %53 = vector.shape_cast %52 : vector<1x8x8xf32> to vector<8x8xf32>
    %c4_43 = arith.constant 4 : index
    %c0_44 = arith.constant 0 : index
    %c0_45 = arith.constant 0 : index
    %54 = vector.load %arg12[%c4_43, %c0_44, %c0_45] : memref<8x8x8xf32, #tpu.memory_space<vmem>>, vector<1x8x8xf32>
    %55 = vector.shape_cast %54 : vector<1x8x8xf32> to vector<8x8xf32>
    %cst_46 = arith.constant dense<0.000000e+00> : vector<64x8xf32>
    %56 = tpu.matmul %33, %53, %cst_46 {dimension_numbers = #tpu.dot_dimension_numbers<[1], [0], [0], [1], [0, 0, 1, 1], [], []>} : vector<64x8xf32>, vector<8x8xf32>, vector<64x8xf32> -> vector<64x8xf32>
    %57 = vector.broadcast %51 : vector<64x1xf32> to vector<64x8xf32>
    %58 = arith.mulf %57, %56 : vector<64x8xf32>
    %59 = arith.addf %46, %58 : vector<64x8xf32>
    %cst_47 = arith.constant dense<0.000000e+00> : vector<64x8xf32>
    %60 = tpu.matmul %34, %55, %cst_47 {dimension_numbers = #tpu.dot_dimension_numbers<[1], [0], [0], [1], [0, 0, 1, 1], [], []>} : vector<64x8xf32>, vector<8x8xf32>, vector<64x8xf32> -> vector<64x8xf32>
    %61 = vector.broadcast %51 : vector<64x1xf32> to vector<64x8xf32>
    %62 = arith.mulf %61, %60 : vector<64x8xf32>
    %63 = arith.addf %50, %62 : vector<64x8xf32>
    %64 = arith.mulf %35, %59 : vector<64x8xf32>
    %cst_48 = arith.constant dense<0.000000e+00> : vector<64xf32>
    %65 = vector.multi_reduction <add>, %64, %cst_48 [1] : vector<64x8xf32> to vector<64xf32>
    %66 = vector.shape_cast %65 : vector<64xf32> to vector<64x1xf32>
    %67 = vector.extract_strided_slice %31 {offsets = [0, 8], sizes = [64, 8], strides = [1, 1]} : vector<64x64xf32> to vector<64x8xf32>
    %68 = vector.extract_strided_slice %31 {offsets = [0, 40], sizes = [64, 8], strides = [1, 1]} : vector<64x64xf32> to vector<64x8xf32>
    %69 = vector.extract_strided_slice %32 {offsets = [0, 8], sizes = [64, 8], strides = [1, 1]} : vector<64x32xf32> to vector<64x8xf32>
    %cst_49 = arith.constant 0.000000e+00 : f32
    %70 = vector.broadcast %cst_49 : f32 to vector<64x8xf32>
    %cst_50 = arith.constant 0.000000e+00 : f32
    %71 = vector.broadcast %cst_50 : f32 to vector<64x8xf32>
    %c0_51 = arith.constant 0 : index
    %c0_52 = arith.constant 0 : index
    %72 = vector.load %arg5[%c0_51, %c0_52] : memref<64x2xf32, #tpu.memory_space<vmem>>, vector<64x1xf32>
    %c1_53 = arith.constant 1 : index
    %c0_54 = arith.constant 0 : index
    %c0_55 = arith.constant 0 : index
    %73 = vector.load %arg11[%c1_53, %c0_54, %c0_55] : memref<8x8x8xf32, #tpu.memory_space<vmem>>, vector<1x8x8xf32>
    %74 = vector.shape_cast %73 : vector<1x8x8xf32> to vector<8x8xf32>
    %c1_56 = arith.constant 1 : index
    %c0_57 = arith.constant 0 : index
    %c0_58 = arith.constant 0 : index
    %75 = vector.load %arg12[%c1_56, %c0_57, %c0_58] : memref<8x8x8xf32, #tpu.memory_space<vmem>>, vector<1x8x8xf32>
    %76 = vector.shape_cast %75 : vector<1x8x8xf32> to vector<8x8xf32>
    %cst_59 = arith.constant dense<0.000000e+00> : vector<64x8xf32>
    %77 = tpu.matmul %67, %74, %cst_59 {dimension_numbers = #tpu.dot_dimension_numbers<[1], [0], [0], [1], [0, 0, 1, 1], [], []>} : vector<64x8xf32>, vector<8x8xf32>, vector<64x8xf32> -> vector<64x8xf32>
    %78 = vector.broadcast %72 : vector<64x1xf32> to vector<64x8xf32>
    %79 = arith.mulf %78, %77 : vector<64x8xf32>
    %80 = arith.addf %70, %79 : vector<64x8xf32>
    %cst_60 = arith.constant dense<0.000000e+00> : vector<64x8xf32>
    %81 = tpu.matmul %68, %76, %cst_60 {dimension_numbers = #tpu.dot_dimension_numbers<[1], [0], [0], [1], [0, 0, 1, 1], [], []>} : vector<64x8xf32>, vector<8x8xf32>, vector<64x8xf32> -> vector<64x8xf32>
    %82 = vector.broadcast %72 : vector<64x1xf32> to vector<64x8xf32>
    %83 = arith.mulf %82, %81 : vector<64x8xf32>
    %84 = arith.addf %71, %83 : vector<64x8xf32>
    %c0_61 = arith.constant 0 : index
    %c1_62 = arith.constant 1 : index
    %85 = vector.load %arg5[%c0_61, %c1_62] : memref<64x2xf32, #tpu.memory_space<vmem>>, vector<64x1xf32>
    %c5 = arith.constant 5 : index
    %c0_63 = arith.constant 0 : index
    %c0_64 = arith.constant 0 : index
    %86 = vector.load %arg11[%c5, %c0_63, %c0_64] : memref<8x8x8xf32, #tpu.memory_space<vmem>>, vector<1x8x8xf32>
    %87 = vector.shape_cast %86 : vector<1x8x8xf32> to vector<8x8xf32>
    %c5_65 = arith.constant 5 : index
    %c0_66 = arith.constant 0 : index
    %c0_67 = arith.constant 0 : index
    %88 = vector.load %arg12[%c5_65, %c0_66, %c0_67] : memref<8x8x8xf32, #tpu.memory_space<vmem>>, vector<1x8x8xf32>
    %89 = vector.shape_cast %88 : vector<1x8x8xf32> to vector<8x8xf32>
    %cst_68 = arith.constant dense<0.000000e+00> : vector<64x8xf32>
    %90 = tpu.matmul %67, %87, %cst_68 {dimension_numbers = #tpu.dot_dimension_numbers<[1], [0], [0], [1], [0, 0, 1, 1], [], []>} : vector<64x8xf32>, vector<8x8xf32>, vector<64x8xf32> -> vector<64x8xf32>
    %91 = vector.broadcast %85 : vector<64x1xf32> to vector<64x8xf32>
    %92 = arith.mulf %91, %90 : vector<64x8xf32>
    %93 = arith.addf %80, %92 : vector<64x8xf32>
    %cst_69 = arith.constant dense<0.000000e+00> : vector<64x8xf32>
    %94 = tpu.matmul %68, %89, %cst_69 {dimension_numbers = #tpu.dot_dimension_numbers<[1], [0], [0], [1], [0, 0, 1, 1], [], []>} : vector<64x8xf32>, vector<8x8xf32>, vector<64x8xf32> -> vector<64x8xf32>
    %95 = vector.broadcast %85 : vector<64x1xf32> to vector<64x8xf32>
    %96 = arith.mulf %95, %94 : vector<64x8xf32>
    %97 = arith.addf %84, %96 : vector<64x8xf32>
    %98 = arith.mulf %69, %93 : vector<64x8xf32>
    %cst_70 = arith.constant dense<0.000000e+00> : vector<64xf32>
    %99 = vector.multi_reduction <add>, %98, %cst_70 [1] : vector<64x8xf32> to vector<64xf32>
    %100 = vector.shape_cast %99 : vector<64xf32> to vector<64x1xf32>
    %101 = vector.extract_strided_slice %31 {offsets = [0, 16], sizes = [64, 8], strides = [1, 1]} : vector<64x64xf32> to vector<64x8xf32>
    %102 = vector.extract_strided_slice %31 {offsets = [0, 48], sizes = [64, 8], strides = [1, 1]} : vector<64x64xf32> to vector<64x8xf32>
    %103 = vector.extract_strided_slice %32 {offsets = [0, 16], sizes = [64, 8], strides = [1, 1]} : vector<64x32xf32> to vector<64x8xf32>
    %cst_71 = arith.constant 0.000000e+00 : f32
    %104 = vector.broadcast %cst_71 : f32 to vector<64x8xf32>
    %cst_72 = arith.constant 0.000000e+00 : f32
    %105 = vector.broadcast %cst_72 : f32 to vector<64x8xf32>
    %c0_73 = arith.constant 0 : index
    %c0_74 = arith.constant 0 : index
    %106 = vector.load %arg5[%c0_73, %c0_74] : memref<64x2xf32, #tpu.memory_space<vmem>>, vector<64x1xf32>
    %c2 = arith.constant 2 : index
    %c0_75 = arith.constant 0 : index
    %c0_76 = arith.constant 0 : index
    %107 = vector.load %arg11[%c2, %c0_75, %c0_76] : memref<8x8x8xf32, #tpu.memory_space<vmem>>, vector<1x8x8xf32>
    %108 = vector.shape_cast %107 : vector<1x8x8xf32> to vector<8x8xf32>
    %c2_77 = arith.constant 2 : index
    %c0_78 = arith.constant 0 : index
    %c0_79 = arith.constant 0 : index
    %109 = vector.load %arg12[%c2_77, %c0_78, %c0_79] : memref<8x8x8xf32, #tpu.memory_space<vmem>>, vector<1x8x8xf32>
    %110 = vector.shape_cast %109 : vector<1x8x8xf32> to vector<8x8xf32>
    %cst_80 = arith.constant dense<0.000000e+00> : vector<64x8xf32>
    %111 = tpu.matmul %101, %108, %cst_80 {dimension_numbers = #tpu.dot_dimension_numbers<[1], [0], [0], [1], [0, 0, 1, 1], [], []>} : vector<64x8xf32>, vector<8x8xf32>, vector<64x8xf32> -> vector<64x8xf32>
    %112 = vector.broadcast %106 : vector<64x1xf32> to vector<64x8xf32>
    %113 = arith.mulf %112, %111 : vector<64x8xf32>
    %114 = arith.addf %104, %113 : vector<64x8xf32>
    %cst_81 = arith.constant dense<0.000000e+00> : vector<64x8xf32>
    %115 = tpu.matmul %102, %110, %cst_81 {dimension_numbers = #tpu.dot_dimension_numbers<[1], [0], [0], [1], [0, 0, 1, 1], [], []>} : vector<64x8xf32>, vector<8x8xf32>, vector<64x8xf32> -> vector<64x8xf32>
    %116 = vector.broadcast %106 : vector<64x1xf32> to vector<64x8xf32>
    %117 = arith.mulf %116, %115 : vector<64x8xf32>
    %118 = arith.addf %105, %117 : vector<64x8xf32>
    %c0_82 = arith.constant 0 : index
    %c1_83 = arith.constant 1 : index
    %119 = vector.load %arg5[%c0_82, %c1_83] : memref<64x2xf32, #tpu.memory_space<vmem>>, vector<64x1xf32>
    %c6 = arith.constant 6 : index
    %c0_84 = arith.constant 0 : index
    %c0_85 = arith.constant 0 : index
    %120 = vector.load %arg11[%c6, %c0_84, %c0_85] : memref<8x8x8xf32, #tpu.memory_space<vmem>>, vector<1x8x8xf32>
    %121 = vector.shape_cast %120 : vector<1x8x8xf32> to vector<8x8xf32>
    %c6_86 = arith.constant 6 : index
    %c0_87 = arith.constant 0 : index
    %c0_88 = arith.constant 0 : index
    %122 = vector.load %arg12[%c6_86, %c0_87, %c0_88] : memref<8x8x8xf32, #tpu.memory_space<vmem>>, vector<1x8x8xf32>
    %123 = vector.shape_cast %122 : vector<1x8x8xf32> to vector<8x8xf32>
    %cst_89 = arith.constant dense<0.000000e+00> : vector<64x8xf32>
    %124 = tpu.matmul %101, %121, %cst_89 {dimension_numbers = #tpu.dot_dimension_numbers<[1], [0], [0], [1], [0, 0, 1, 1], [], []>} : vector<64x8xf32>, vector<8x8xf32>, vector<64x8xf32> -> vector<64x8xf32>
    %125 = vector.broadcast %119 : vector<64x1xf32> to vector<64x8xf32>
    %126 = arith.mulf %125, %124 : vector<64x8xf32>
    %127 = arith.addf %114, %126 : vector<64x8xf32>
    %cst_90 = arith.constant dense<0.000000e+00> : vector<64x8xf32>
    %128 = tpu.matmul %102, %123, %cst_90 {dimension_numbers = #tpu.dot_dimension_numbers<[1], [0], [0], [1], [0, 0, 1, 1], [], []>} : vector<64x8xf32>, vector<8x8xf32>, vector<64x8xf32> -> vector<64x8xf32>
    %129 = vector.broadcast %119 : vector<64x1xf32> to vector<64x8xf32>
    %130 = arith.mulf %129, %128 : vector<64x8xf32>
    %131 = arith.addf %118, %130 : vector<64x8xf32>
    %132 = arith.mulf %103, %127 : vector<64x8xf32>
    %cst_91 = arith.constant dense<0.000000e+00> : vector<64xf32>
    %133 = vector.multi_reduction <add>, %132, %cst_91 [1] : vector<64x8xf32> to vector<64xf32>
    %134 = vector.shape_cast %133 : vector<64xf32> to vector<64x1xf32>
    %135 = vector.extract_strided_slice %31 {offsets = [0, 24], sizes = [64, 8], strides = [1, 1]} : vector<64x64xf32> to vector<64x8xf32>
    %136 = vector.extract_strided_slice %31 {offsets = [0, 56], sizes = [64, 8], strides = [1, 1]} : vector<64x64xf32> to vector<64x8xf32>
    %137 = vector.extract_strided_slice %32 {offsets = [0, 24], sizes = [64, 8], strides = [1, 1]} : vector<64x32xf32> to vector<64x8xf32>
    %cst_92 = arith.constant 0.000000e+00 : f32
    %138 = vector.broadcast %cst_92 : f32 to vector<64x8xf32>
    %cst_93 = arith.constant 0.000000e+00 : f32
    %139 = vector.broadcast %cst_93 : f32 to vector<64x8xf32>
    %c0_94 = arith.constant 0 : index
    %c0_95 = arith.constant 0 : index
    %140 = vector.load %arg5[%c0_94, %c0_95] : memref<64x2xf32, #tpu.memory_space<vmem>>, vector<64x1xf32>
    %c3 = arith.constant 3 : index
    %c0_96 = arith.constant 0 : index
    %c0_97 = arith.constant 0 : index
    %141 = vector.load %arg11[%c3, %c0_96, %c0_97] : memref<8x8x8xf32, #tpu.memory_space<vmem>>, vector<1x8x8xf32>
    %142 = vector.shape_cast %141 : vector<1x8x8xf32> to vector<8x8xf32>
    %c3_98 = arith.constant 3 : index
    %c0_99 = arith.constant 0 : index
    %c0_100 = arith.constant 0 : index
    %143 = vector.load %arg12[%c3_98, %c0_99, %c0_100] : memref<8x8x8xf32, #tpu.memory_space<vmem>>, vector<1x8x8xf32>
    %144 = vector.shape_cast %143 : vector<1x8x8xf32> to vector<8x8xf32>
    %cst_101 = arith.constant dense<0.000000e+00> : vector<64x8xf32>
    %145 = tpu.matmul %135, %142, %cst_101 {dimension_numbers = #tpu.dot_dimension_numbers<[1], [0], [0], [1], [0, 0, 1, 1], [], []>} : vector<64x8xf32>, vector<8x8xf32>, vector<64x8xf32> -> vector<64x8xf32>
    %146 = vector.broadcast %140 : vector<64x1xf32> to vector<64x8xf32>
    %147 = arith.mulf %146, %145 : vector<64x8xf32>
    %148 = arith.addf %138, %147 : vector<64x8xf32>
    %cst_102 = arith.constant dense<0.000000e+00> : vector<64x8xf32>
    %149 = tpu.matmul %136, %144, %cst_102 {dimension_numbers = #tpu.dot_dimension_numbers<[1], [0], [0], [1], [0, 0, 1, 1], [], []>} : vector<64x8xf32>, vector<8x8xf32>, vector<64x8xf32> -> vector<64x8xf32>
    %150 = vector.broadcast %140 : vector<64x1xf32> to vector<64x8xf32>
    %151 = arith.mulf %150, %149 : vector<64x8xf32>
    %152 = arith.addf %139, %151 : vector<64x8xf32>
    %c0_103 = arith.constant 0 : index
    %c1_104 = arith.constant 1 : index
    %153 = vector.load %arg5[%c0_103, %c1_104] : memref<64x2xf32, #tpu.memory_space<vmem>>, vector<64x1xf32>
    %c7 = arith.constant 7 : index
    %c0_105 = arith.constant 0 : index
    %c0_106 = arith.constant 0 : index
    %154 = vector.load %arg11[%c7, %c0_105, %c0_106] : memref<8x8x8xf32, #tpu.memory_space<vmem>>, vector<1x8x8xf32>
    %155 = vector.shape_cast %154 : vector<1x8x8xf32> to vector<8x8xf32>
    %c7_107 = arith.constant 7 : index
    %c0_108 = arith.constant 0 : index
    %c0_109 = arith.constant 0 : index
    %156 = vector.load %arg12[%c7_107, %c0_108, %c0_109] : memref<8x8x8xf32, #tpu.memory_space<vmem>>, vector<1x8x8xf32>
    %157 = vector.shape_cast %156 : vector<1x8x8xf32> to vector<8x8xf32>
    %cst_110 = arith.constant dense<0.000000e+00> : vector<64x8xf32>
    %158 = tpu.matmul %135, %155, %cst_110 {dimension_numbers = #tpu.dot_dimension_numbers<[1], [0], [0], [1], [0, 0, 1, 1], [], []>} : vector<64x8xf32>, vector<8x8xf32>, vector<64x8xf32> -> vector<64x8xf32>
    %159 = vector.broadcast %153 : vector<64x1xf32> to vector<64x8xf32>
    %160 = arith.mulf %159, %158 : vector<64x8xf32>
    %161 = arith.addf %148, %160 : vector<64x8xf32>
    %cst_111 = arith.constant dense<0.000000e+00> : vector<64x8xf32>
    %162 = tpu.matmul %136, %157, %cst_111 {dimension_numbers = #tpu.dot_dimension_numbers<[1], [0], [0], [1], [0, 0, 1, 1], [], []>} : vector<64x8xf32>, vector<8x8xf32>, vector<64x8xf32> -> vector<64x8xf32>
    %163 = vector.broadcast %153 : vector<64x1xf32> to vector<64x8xf32>
    %164 = arith.mulf %163, %162 : vector<64x8xf32>
    %165 = arith.addf %152, %164 : vector<64x8xf32>
    %166 = arith.mulf %137, %161 : vector<64x8xf32>
    %cst_112 = arith.constant dense<0.000000e+00> : vector<64xf32>
    %167 = vector.multi_reduction <add>, %166, %cst_112 [1] : vector<64x8xf32> to vector<64xf32>
    %168 = vector.shape_cast %167 : vector<64xf32> to vector<64x1xf32>
    %169 = tpu.concatenate %66, %100, %134, %168 in 1 : vector<64x1xf32>, vector<64x1xf32>, vector<64x1xf32>, vector<64x1xf32> -> vector<64x4xf32>
    %c0_113 = arith.constant 0 : index
    %c0_114 = arith.constant 0 : index
    %170 = vector.load %arg6[%c0_113, %c0_114] : memref<64x4xf32, #tpu.memory_space<vmem>>, vector<64x4xf32>
    %171 = arith.mulf %169, %170 : vector<64x4xf32>
    %cst_115 = arith.constant 0.353553385 : f32
    %172 = vector.broadcast %cst_115 : f32 to vector<64x4xf32>
    %173 = arith.mulf %171, %172 : vector<64x4xf32>
    %c0_116 = arith.constant 0 : index
    %c0_117 = arith.constant 0 : index
    %174 = vector.load %arg14[%c0_116, %c0_117] : memref<64x4xf32, #tpu.memory_space<vmem>>, vector<64x4xf32>
    tpu.vector_store %arg14[%c0_116, %c0_117], %173 {strides = array<i32>} : memref<64x4xf32, #tpu.memory_space<vmem>>, vector<64x4xf32>,
    %175 = tpu.concatenate %63, %97, %131, %165 in 1 : vector<64x8xf32>, vector<64x8xf32>, vector<64x8xf32>, vector<64x8xf32> -> vector<64x32xf32>
    %c0_118 = arith.constant 0 : index
    %c0_119 = arith.constant 0 : index
    %176 = vector.load %arg13[%c0_118, %c0_119] : memref<64x32xf32, #tpu.memory_space<vmem>>, vector<64x32xf32>
    tpu.vector_store %arg13[%c0_118, %c0_119], %175 {strides = array<i32>} : memref<64x32xf32, #tpu.memory_space<vmem>>, vector<64x32xf32>,
    return
  }
  func.func @transform_0(%arg0: i32) -> (i32, i32) {
    %c0_i32 = arith.constant 0 : i32
    %c0_i32_0 = arith.constant 0 : i32
    return %arg0, %c0_i32 : i32, i32
  }
  func.func @transform_1(%arg0: i32) -> (i32, i32) {
    %c0_i32 = arith.constant 0 : i32
    %c0_i32_0 = arith.constant 0 : i32
    return %arg0, %c0_i32 : i32, i32
  }
  func.func @transform_2(%arg0: i32) -> (i32, i32) {
    %c0_i32 = arith.constant 0 : i32
    %c0_i32_0 = arith.constant 0 : i32
    return %arg0, %c0_i32 : i32, i32
  }
  func.func @transform_3(%arg0: i32) -> (i32, i32) {
    %c0_i32 = arith.constant 0 : i32
    %c0_i32_0 = arith.constant 0 : i32
    return %arg0, %c0_i32 : i32, i32
  }
  func.func @transform_4(%arg0: i32) -> (i32, i32) {
    %c0_i32 = arith.constant 0 : i32
    %c0_i32_0 = arith.constant 0 : i32
    return %arg0, %c0_i32 : i32, i32
  }
  func.func @transform_5(%arg0: i32) -> (i32, i32) {
    %c0_i32 = arith.constant 0 : i32
    %c0_i32_0 = arith.constant 0 : i32
    return %arg0, %c0_i32 : i32, i32
  }
  func.func @transform_6(%arg0: i32) -> (i32, i32) {
    %c0_i32 = arith.constant 0 : i32
    %c0_i32_0 = arith.constant 0 : i32
    %c0_i32_1 = arith.constant 0 : i32
    return %c0_i32, %c0_i32_0 : i32, i32
  }
  func.func @transform_7(%arg0: i32) -> (i32, i32) {
    %c0_i32 = arith.constant 0 : i32
    %c0_i32_0 = arith.constant 0 : i32
    %c0_i32_1 = arith.constant 0 : i32
    return %c0_i32, %c0_i32_0 : i32, i32
  }
  func.func @transform_8(%arg0: i32) -> (i32, i32, i32) {
    %c0_i32 = arith.constant 0 : i32
    %c0_i32_0 = arith.constant 0 : i32
    %c0_i32_1 = arith.constant 0 : i32
    %c0_i32_2 = arith.constant 0 : i32
    return %c0_i32, %c0_i32_0, %c0_i32_1 : i32, i32, i32
  }
  func.func @transform_9(%arg0: i32) -> (i32, i32, i32) {
    %c0_i32 = arith.constant 0 : i32
    %c0_i32_0 = arith.constant 0 : i32
    %c0_i32_1 = arith.constant 0 : i32
    %c0_i32_2 = arith.constant 0 : i32
    return %c0_i32, %c0_i32_0, %c0_i32_1 : i32, i32, i32
  }
  func.func @transform_10(%arg0: i32) -> (i32, i32, i32) {
    %c0_i32 = arith.constant 0 : i32
    %c0_i32_0 = arith.constant 0 : i32
    %c0_i32_1 = arith.constant 0 : i32
    %c0_i32_2 = arith.constant 0 : i32
    return %c0_i32, %c0_i32_0, %c0_i32_1 : i32, i32, i32
  }
  func.func @transform_11(%arg0: i32) -> (i32, i32, i32) {
    %c0_i32 = arith.constant 0 : i32
    %c0_i32_0 = arith.constant 0 : i32
    %c0_i32_1 = arith.constant 0 : i32
    %c0_i32_2 = arith.constant 0 : i32
    return %c0_i32, %c0_i32_0, %c0_i32_1 : i32, i32, i32
  }
  func.func @transform_12(%arg0: i32) -> (i32, i32) {
    %c0_i32 = arith.constant 0 : i32
    %c0_i32_0 = arith.constant 0 : i32
    return %arg0, %c0_i32 : i32, i32
  }
  func.func @transform_13(%arg0: i32) -> (i32, i32) {
    %c0_i32 = arith.constant 0 : i32
    %c0_i32_0 = arith.constant 0 : i32
    return %arg0, %c0_i32 : i32, i32
  }
}

module attributes {stable_mosaic.version = 11 : i64} {
  func.func @_grouped_update_kernel(%arg0: i32, %arg1: memref<4xi32, #tpu.memory_space<smem>>, %arg2: memref<32x32xbf16, #tpu.memory_space<vmem>>, %arg3: memref<32x32xf32, #tpu.memory_space<vmem>>, %arg4: memref<32x1xf32, #tpu.memory_space<vmem>>, %arg5: memref<1x32x32xbf16, #tpu.memory_space<vmem>>, %arg6: memref<1x1x32xf32, #tpu.memory_space<vmem>>, %arg7: memref<32x32xf32, #tpu.memory_space<vmem>>) attributes {dimension_semantics = [#tpu.dimension_semantics<parallel>], iteration_bounds = array<i64: 4>, scalar_prefetch = 1 : i64, scratch_operands = 0 : i64, tpu.core_type = #tpu.core_type<tc>, window_params = [{transform_indices = @transform_0, window_bounds = array<i64: 32, 32>}, {transform_indices = @transform_1, window_bounds = array<i64: 32, 32>}, {transform_indices = @transform_2, window_bounds = array<i64: 32, 1>}, {transform_indices = @transform_3, window_bounds = array<i64: 1, 32, 32>}, {transform_indices = @transform_4, window_bounds = array<i64: 1, 1, 32>}, {transform_indices = @transform_5, window_bounds = array<i64: 32, 32>}]} {
    %c0 = arith.constant 0 : index
    %c0_0 = arith.constant 0 : index
    %0 = vector.load %arg2[%c0, %c0_0] : memref<32x32xbf16, #tpu.memory_space<vmem>>, vector<32x32xbf16>
    %c0_1 = arith.constant 0 : index
    %c0_2 = arith.constant 0 : index
    %c0_3 = arith.constant 0 : index
    %1 = vector.load %arg5[%c0_1, %c0_2, %c0_3] : memref<1x32x32xbf16, #tpu.memory_space<vmem>>, vector<1x32x32xbf16>
    %2 = vector.shape_cast %1 : vector<1x32x32xbf16> to vector<32x32xbf16>
    %cst = arith.constant dense<0.000000e+00> : vector<32x32xf32>
    %3 = tpu.matmul %0, %2, %cst {dimension_numbers = #tpu.dot_dimension_numbers<[1], [0], [0], [1], [0, 0, 1, 1], [], []>} : vector<32x32xbf16>, vector<32x32xbf16>, vector<32x32xf32> -> vector<32x32xf32>
    %c0_4 = arith.constant 0 : index
    %c0_5 = arith.constant 0 : index
    %c0_6 = arith.constant 0 : index
    %4 = vector.load %arg6[%c0_4, %c0_5, %c0_6] : memref<1x1x32xf32, #tpu.memory_space<vmem>>, vector<1x1x32xf32>
    %5 = vector.shape_cast %4 : vector<1x1x32xf32> to vector<1x32xf32>
    %6 = vector.broadcast %5 : vector<1x32xf32> to vector<32x32xf32>
    %7 = arith.addf %3, %6 : vector<32x32xf32>
    %c0_7 = arith.constant 0 : index
    %c0_8 = arith.constant 0 : index
    %8 = vector.load %arg4[%c0_7, %c0_8] : memref<32x1xf32, #tpu.memory_space<vmem>>, vector<32x1xf32>
    %9 = vector.broadcast %8 : vector<32x1xf32> to vector<32x32xf32>
    %10 = arith.mulf %7, %9 : vector<32x32xf32>
    %c0_9 = arith.constant 0 : index
    %c0_10 = arith.constant 0 : index
    %11 = vector.load %arg3[%c0_9, %c0_10] : memref<32x32xf32, #tpu.memory_space<vmem>>, vector<32x32xf32>
    %cst_11 = arith.constant 1.000000e+00 : f32
    %12 = vector.broadcast %cst_11 : f32 to vector<32x1xf32>
    %13 = arith.subf %12, %8 : vector<32x1xf32>
    %14 = vector.broadcast %13 : vector<32x1xf32> to vector<32x32xf32>
    %15 = arith.mulf %11, %14 : vector<32x32xf32>
    %16 = arith.addf %10, %15 : vector<32x32xf32>
    %c0_12 = arith.constant 0 : index
    %c0_13 = arith.constant 0 : index
    %17 = vector.load %arg7[%c0_12, %c0_13] : memref<32x32xf32, #tpu.memory_space<vmem>>, vector<32x32xf32>
    tpu.vector_store %arg7[%c0_12, %c0_13], %16 {strides = array<i32>} : memref<32x32xf32, #tpu.memory_space<vmem>>, vector<32x32xf32>,
    return
  }
  func.func @transform_0(%arg0: i32, %arg1: memref<4xi32, #tpu.memory_space<smem>>) -> (i32, i32) {
    %c0_i32 = arith.constant 0 : i32
    %c0_i32_0 = arith.constant 0 : i32
    return %arg0, %c0_i32 : i32, i32
  }
  func.func @transform_1(%arg0: i32, %arg1: memref<4xi32, #tpu.memory_space<smem>>) -> (i32, i32) {
    %c0_i32 = arith.constant 0 : i32
    %c0_i32_0 = arith.constant 0 : i32
    return %arg0, %c0_i32 : i32, i32
  }
  func.func @transform_2(%arg0: i32, %arg1: memref<4xi32, #tpu.memory_space<smem>>) -> (i32, i32) {
    %c0_i32 = arith.constant 0 : i32
    %c0_i32_0 = arith.constant 0 : i32
    return %arg0, %c0_i32 : i32, i32
  }
  func.func @transform_3(%arg0: i32, %arg1: memref<4xi32, #tpu.memory_space<smem>>) -> (i32, i32, i32) {
    %0 = arith.index_cast %arg0 : i32 to index
    %1 = memref.load %arg1[%0] : memref<4xi32, #tpu.memory_space<smem>>
    %c0_i32 = arith.constant 0 : i32
    %c0_i32_0 = arith.constant 0 : i32
    %c0_i32_1 = arith.constant 0 : i32
    return %1, %c0_i32, %c0_i32_0 : i32, i32, i32
  }
  func.func @transform_4(%arg0: i32, %arg1: memref<4xi32, #tpu.memory_space<smem>>) -> (i32, i32, i32) {
    %0 = arith.index_cast %arg0 : i32 to index
    %1 = memref.load %arg1[%0] : memref<4xi32, #tpu.memory_space<smem>>
    %c0_i32 = arith.constant 0 : i32
    %c0_i32_0 = arith.constant 0 : i32
    %c0_i32_1 = arith.constant 0 : i32
    return %1, %c0_i32, %c0_i32_0 : i32, i32, i32
  }
  func.func @transform_5(%arg0: i32, %arg1: memref<4xi32, #tpu.memory_space<smem>>) -> (i32, i32) {
    %c0_i32 = arith.constant 0 : i32
    %c0_i32_0 = arith.constant 0 : i32
    return %arg0, %c0_i32 : i32, i32
  }
}

</mosaic_0001>

<llo_original>
// kernel: gnn_forward.7
$region0: #{gnn_forward.7}
  #allocation0 [shape = 'u32[]', space=smem, size = 0x4, offset = 0x4, fixed_abs, tag = 'smem constant byte address 0x4 - core index']
  #allocation1 [shape = 'u32[72,128]{1,0:T(1,128)}', space=vmem, size = 0x9000, scoped, tag = 'internal scratch']
  #allocation2 [shape = 's32[1]{0}', space=sflag, size = 0x4, scoped, tag = 'scoped memory for gnn_forward.7']
  #allocation3 [shape = 'u8[512]{0}', space=smem, size = 0x200, scoped, tag = 'prefetched SMEM operand 0']
  %s0 = inlined_call_operand.vmem [shape: s32[4], index: 0, kind: input, shape index: {}]
  %s1 = inlined_call_operand.vmem [shape: bf16[128,16], index: 1, kind: input, shape index: {}]
  %s2 = inlined_call_operand.vmem [shape: bf16[2,16,32], index: 2, kind: input, shape index: {}]
  %s3 = inlined_call_operand.vmem [shape: f32[2,1,32], index: 3, kind: input, shape index: {}]
  %s4 = inlined_call_operand.vmem [shape: f32[128,32], index: 4, kind: output, shape index: {}]
  %s5 = sld [smem:[#allocation0]]
  $region45: #{gnn_forward.7} parent=0
    _
  %s7 = ssub.s32 1, %s5
  %s8 = scalar_select 0, %s7, %s5
  %s10 = sshll.u32 %s0, 4
  %s11 = int_to_ptr.vmem [resolvable:$true] %s10
  %13 = dma.vmem_to_smem %s11, 16, [#allocation3], [#allocation2]
  %15 = dma.done [#allocation2], 16
  %16 = sfence
  loop: start=0, step=1, limit=6
  $region2: #{gnn_forward.7} parent=0 // loop_pre_header
    _
  $region3: #{gnn_forward.7} parent=0 // loop_header
    %s18 = sphi 0, %s22
    %p19 = scmp.ge.s32.totalorder %s18, 6
    %s28 = sphi 0, %s30
    %s31 = sphi 0, %s28
    %s32 = sphi 0, %s31
    %s48 = sphi 0, %s32
    %s56 = sphi 0, %s58
    %s59 = sphi 0, %s56
    %s60 = sphi 0, %s59
    %s76 = sphi 0, %s60
    %s84 = sphi 0, %s86
    %s87 = sphi 0, %s84
    %s88 = sphi 0, %s87
    %s104 = sphi 0, %s88
    %s110 = sphi 0, %s112
    %s113 = sphi 0, %s110
    %s114 = sphi 0, %s113
    %s130 = sphi 0, %s114
  $region4: #{gnn_forward.7} parent=0 // loop_header_branch
    %21 = sbr.rel (%p19) target = $region8
  $region5: #{gnn_forward.7} parent=0 // loop_body
    %s23 = ssub.s32 %s18, 1
    %s24 = ssub.s32 %s18, 2
    %s25 = sadd.s32 %s18, 1
    %s26 = ssub.s32 %s18, %s25
    %p27 = scmp.eq.s32.totalorder %s26, 0
    %s29 = sadd.s32 %s28, 1
    %s30 = scalar_select %p27, %s28, %s29
    %p33 = pneg %p27
    %p34 = scmp.eq.s32.totalorder %s18, 3
    %p35 = por %p33, %p34
    %p36 = scmp.ne.s32.totalorder %s28, %s31
    %p37 = scmp.eq.s32.totalorder %s18, 0
    %p38 = por %p36, %p37
    %p39 = scmp.ne.s32.totalorder %s28, %s31
    %p40 = scmp.eq.s32.totalorder %s23, 3
    %p41 = por %p39, %p40
    %p42 = scmp.ne.s32.totalorder %s31, %s32
    %p43 = scmp.eq.s32.totalorder %s23, 0
    %p44 = por %p42, %p43
    %p45 = scmp.ne.s32.totalorder %s31, %s32
    %p46 = scmp.eq.s32.totalorder %s24, 3
    %p47 = por %p45, %p46
    %p49 = scmp.ne.s32.totalorder %s32, %s48
    %p50 = scmp.eq.s32.totalorder %s24, 0
    %p51 = por %p49, %p50
    %s52 = sld [smem:[#allocation3 + %s18]]
    %s53 = sld [smem:[#allocation3 + %s25]]
    %s54 = ssub.s32 %s52, %s53
    %p55 = scmp.eq.s32.totalorder %s54, 0
    %s57 = sadd.s32 %s56, 1
    %s58 = scalar_select %p55, %s56, %s57
    %p61 = pneg %p55
    %p62 = scmp.eq.s32.totalorder %s18, 3
    %p63 = por %p61, %p62
    %p64 = scmp.ne.s32.totalorder %s56, %s59
    %p65 = scmp.eq.s32.totalorder %s18, 0
    %p66 = por %p64, %p65
    %p67 = scmp.ne.s32.totalorder %s56, %s59
    %p68 = scmp.eq.s32.totalorder %s23, 3
    %p69 = por %p67, %p68
    %p70 = scmp.ne.s32.totalorder %s59, %s60
    %p71 = scmp.eq.s32.totalorder %s23, 0
    %p72 = por %p70, %p71
    %p73 = scmp.ne.s32.totalorder %s59, %s60
    %p74 = scmp.eq.s32.totalorder %s24, 3
    %p75 = por %p73, %p74
    %p77 = scmp.ne.s32.totalorder %s60, %s76
    %p78 = scmp.eq.s32.totalorder %s24, 0
    %p79 = por %p77, %p78
    %s80 = sld [smem:[#allocation3 + %s18]]
    %s81 = sld [smem:[#allocation3 + %s25]]
    %s82 = ssub.s32 %s80, %s81
    %p83 = scmp.eq.s32.totalorder %s82, 0
    %s85 = sadd.s32 %s84, 1
    %s86 = scalar_select %p83, %s84, %s85
    %p89 = pneg %p83
    %p90 = scmp.eq.s32.totalorder %s18, 3
    %p91 = por %p89, %p90
    %p92 = scmp.ne.s32.totalorder %s84, %s87
    %p93 = scmp.eq.s32.totalorder %s18, 0
    %p94 = por %p92, %p93
    %p95 = scmp.ne.s32.totalorder %s84, %s87
    %p96 = scmp.eq.s32.totalorder %s23, 3
    %p97 = por %p95, %p96
    %p98 = scmp.ne.s32.totalorder %s87, %s88
    %p99 = scmp.eq.s32.totalorder %s23, 0
    %p100 = por %p98, %p99
    %p101 = scmp.ne.s32.totalorder %s87, %s88
    %p102 = scmp.eq.s32.totalorder %s24, 3
    %p103 = por %p101, %p102
    %p105 = scmp.ne.s32.totalorder %s88, %s104
    %p106 = scmp.eq.s32.totalorder %s24, 0
    %p107 = por %p105, %p106
    %s108 = ssub.s32 %s18, %s25
    %p109 = scmp.eq.s32.totalorder %s108, 0
    %s111 = sadd.s32 %s110, 1
    %s112 = scalar_select %p109, %s110, %s111
    %p115 = pneg %p109
    %p116 = scmp.eq.s32.totalorder %s18, 3
    %p117 = por %p115, %p116
    %p118 = scmp.ne.s32.totalorder %s110, %s113
    %p119 = scmp.eq.s32.totalorder %s18, 0
    %p120 = por %p118, %p119
    %p121 = scmp.ne.s32.totalorder %s110, %s113
    %p122 = scmp.eq.s32.totalorder %s23, 3
    %p123 = por %p121, %p122
    %p124 = scmp.ne.s32.totalorder %s113, %s114
    %p125 = scmp.eq.s32.totalorder %s23, 0
    %p126 = por %p124, %p125
    %p127 = scmp.ne.s32.totalorder %s113, %s114
    %p128 = scmp.eq.s32.totalorder %s24, 3
    %p129 = por %p127, %p128
    %p131 = scmp.ne.s32.totalorder %s114, %s130
    %p132 = scmp.eq.s32.totalorder %s24, 0
    %p133 = por %p131, %p132
    %p134 = scmp.le.s32.totalorder 1, %s18
    %p135 = scmp.lt.s32.totalorder %s18, 5
    %p136 = pnand %p134, %p135
    %p137 = pneg %p136
    // Predicated region
    $region9: #{gnn_forward.7} parent=5 // pred_check
      _
    $region10: #{gnn_forward.7} parent=5 // pred_check_branch
      %139 = sbr.rel (%p136) target = $region12
    $region11: #{gnn_forward.7} parent=5 // pred_region
      %s140 = ssub.s32 %s18, 1
    $region12: #{gnn_forward.7} parent=5 // pred_fallthru
      _
    %p141 = scmp.lt.s32.totalorder %s18, 4
    // Predicated region
    $region13: #{gnn_forward.7} parent=5 // pred_check
      %p142 = pneg %p141
    $region14: #{gnn_forward.7} parent=5 // pred_check_branch
      %144 = sbr.rel (%p142) target = $region16
    $region15: #{gnn_forward.7} parent=5 // pred_region
      // Predicated region
      $region17: #{gnn_forward.7} parent=15 // pred_check
        %p145 = pneg %p38
      $region18: #{gnn_forward.7} parent=15 // pred_check_branch
        %147 = sbr.rel (%p145) target = $region20
      $region19: #{gnn_forward.7} parent=15 // pred_region
        %s148 = smul.u32 4, %s18
        %p149 = scmp.lt.s32.totalorder %s148, 15
        %s150 = scalar_select %p149, %s148, 15
        %s151 = smul.addr %s150, 4
        %s152 = scalar_lea.vmem %s1, %s151
        %s153 = smul.u32 4, %s18
      $region20: #{gnn_forward.7} parent=15 // pred_fallthru
        _
      // Predicated region
      $region21: #{gnn_forward.7} parent=15 // pred_check
        %p154 = pneg %p66
      $region22: #{gnn_forward.7} parent=15 // pred_check_branch
        %156 = sbr.rel (%p154) target = $region24
      $region23: #{gnn_forward.7} parent=15 // pred_region
        %s157 = sld [smem:[#allocation3 + %s18]]
        %p158 = scmp.lt.s32.totalorder %s157, 1
        %s159 = scalar_select %p158, %s157, 1
        %s160 = smul.addr %s159, 2
        %s161 = smul.addr %s160, 4
        %s162 = scalar_lea.vmem %s2, %s161
        %s163 = sld [smem:[#allocation3 + %s18]]
      $region24: #{gnn_forward.7} parent=15 // pred_fallthru
        _
      // Predicated region
      $region25: #{gnn_forward.7} parent=15 // pred_check
        %p164 = pneg %p94
      $region26: #{gnn_forward.7} parent=15 // pred_check_branch
        %166 = sbr.rel (%p164) target = $region28
      $region27: #{gnn_forward.7} parent=15 // pred_region
        %s167 = sld [smem:[#allocation3 + %s18]]
        %p168 = scmp.lt.s32.totalorder %s167, 1
        %s169 = scalar_select %p168, %s167, 1
        %s170 = scalar_lea.vmem %s3, %s169
        %s171 = sld [smem:[#allocation3 + %s18]]
      $region28: #{gnn_forward.7} parent=15 // pred_fallthru
        _
    $region16: #{gnn_forward.7} parent=5 // pred_fallthru
      _
    %p172 = scmp.le.s32.totalorder 1, %s18
    %p173 = scmp.lt.s32.totalorder %s18, 5
    %p174 = pnand %p172, %p173
    %p175 = pneg %p174
    // Predicated region
    $region29: #{gnn_forward.7} parent=5 // pred_check
      _
    $region30: #{gnn_forward.7} parent=5 // pred_check_branch
      %177 = sbr.rel (%p174) target = $region32
    $region31: #{gnn_forward.7} parent=5 // pred_region
      %s178 = ssub.s32 %s18, 1
      %s179 = smul.u32 4, %s23
      %p180 = scmp.lt.s32.totalorder %s179, 15
      %s181 = scalar_select %p180, %s179, 15
      %s182 = smul.addr %s181, 4
      %s183 = scalar_lea.vmem %s1, %s182
      %p184 = pneg %p44
      %p185 = pneg %p41
      %s186 = sld [smem:[#allocation3 + %s23]]
      %p187 = scmp.lt.s32.totalorder %s186, 1
      %s188 = scalar_select %p187, %s186, 1
      %s189 = smul.addr %s188, 2
      %s190 = smul.addr %s189, 4
      %s191 = scalar_lea.vmem %s2, %s190
      %p192 = pneg %p72
      %p193 = pneg %p69
      %s194 = sld [smem:[#allocation3 + %s23]]
      %p195 = scmp.lt.s32.totalorder %s194, 1
      %s196 = scalar_select %p195, %s194, 1
      %s197 = scalar_lea.vmem %s3, %s196
      %p198 = pneg %p100
      %p199 = pneg %p97
      %p200 = pneg %p126
      %p201 = pneg %p123
      %s202 = smul.u32 4, %s23
      %p203 = scmp.lt.s32.totalorder %s202, 15
      %s204 = scalar_select %p203, %s202, 15
      %s205 = smul.addr %s204, 8
      %s206 = scalar_lea.vmem %s4, %s205
      %s207 = smul.u32 4, %s23
      %p208 = scmp.lt.s32.totalorder %s207, 15
      %s209 = scalar_select %p208, %s207, 15
      %s210 = smul.addr %s209, 4
      %s211 = scalar_lea.vmem %s1, %s210
      %s212 = smul.u32 4, %s23
      %s213 = sld [smem:[#allocation3 + %s23]]
      %p214 = scmp.lt.s32.totalorder %s213, 1
      %s215 = scalar_select %p214, %s213, 1
      %s216 = smul.addr %s215, 2
      %s217 = smul.addr %s216, 4
      %s218 = scalar_lea.vmem %s2, %s217
      %s219 = sld [smem:[#allocation3 + %s23]]
      %s220 = sld [smem:[#allocation3 + %s23]]
      %p221 = scmp.lt.s32.totalorder %s220, 1
      %s222 = scalar_select %p221, %s220, 1
      %s223 = scalar_lea.vmem %s3, %s222
      %s224 = sld [smem:[#allocation3 + %s23]]
      %s225 = smul.u32 4, %s23
      %p226 = scmp.lt.s32.totalorder %s225, 15
      %s227 = scalar_select %p226, %s225, 15
      %s228 = smul.addr %s227, 8
      %s229 = scalar_lea.vmem %s4, %s228
      %s230 = smul.u32 4, %s23
      %v232 = vld [vmem:[%s211] sm:$0xf]
      %v233 = vld [vmem:[%s211 + $0x4] sm:$0xf]
      %v234 = vld [vmem:[%s211 + $0x8] sm:$0xf]
      %v235 = vld [vmem:[%s211 + $0xc] sm:$0xf]
      %v236 = vld [vmem:[%s218] sm:$0xf]
      %v237 = vld [vmem:[%s218 + $0x4] sm:$0xf]
      %v238 = vld [vmem:[%s223] sm:$0x1]
      %v240 = vperm.slane %v238, 0
      %v246 = vunpack.c.l.b16 %v232
      %v247 = vunpack.c.l.b16 %v233
      %v248 = vunpack.c.l.b16 %v234
      %v249 = vunpack.c.l.b16 %v235
      %v250 = vpack.c.b16 %v247, %v246
      %v251 = vpack.c.b16 %v249, %v248
      %v254 = vunpack.c.l.b16 %v236
      %v255 = vunpack.c.l.b16 %v237
      %v256 = vpack.c.b16 %v255, %v254
      %vm258 = vcmask 130048
      %v260 = vsel %vm258, %v250, 0
      %v263 = vsel %vm258, %v251, 0
      %265 = vmatpush.bf16.msra.mxu0 0
      %266 = vmatpush.bf16.msra.mxu0 0
      %267 = vmatpush.bf16.msra.mxu0 0
      %268 = vmatpush.bf16.msra.mxu0 0
      %269 = vmatpush.bf16.msra.mxu0 0
      %270 = vmatpush.bf16.msra.mxu0 0
      %271 = vmatpush.bf16.msra.mxu0 0
      %272 = vmatpush.bf16.msra.mxu0 %v256
      %273 = vmatmul.bf16.gmra.mxu0 %v260
      %v274 = vpop.f32.mrf.mxu0
      %v275 = vadd.f32 %v240, %v274
      %v276 = vpop.f32.mrf.mxu0
      %v277 = vadd.f32 %v240, %v276
      %278 = vmatmul.bf16.gmra.mxu0 %v263
      %v279 = vpop.f32.mrf.mxu0
      %v280 = vadd.f32 %v240, %v279
      %v281 = vpop.f32.mrf.mxu0
      %v282 = vadd.f32 %v240, %v281
      %283 = vdwg.mxu0
      %v284 = vtanh.pop %v275
      %v285 = vtanh.pop %v277
      %v286 = vtanh.pop %v280
      %v287 = vtanh.pop %v282
      %vm288 = vcmask 261120
      %289 = vst.msk [vmem:[%s229] sm:$0xff] %vm288, %v284
      %290 = vst.msk [vmem:[%s229 + $0x8] sm:$0xff] %vm288, %v285
      %291 = vst.msk [vmem:[%s229 + $0x10] sm:$0xff] %vm288, %v286
      %292 = vst.msk [vmem:[%s229 + $0x18] sm:$0xff] %vm288, %v287
      %s293 = smul.u32 4, %s23
      %p294 = scmp.lt.s32.totalorder %s293, 15
      %s295 = scalar_select %p294, %s293, 15
      %s296 = smul.addr %s295, 8
      %s297 = scalar_lea.vmem %s4, %s296
      // Predicated region
      $region33: #{gnn_forward.7} parent=31 // pred_check
        %p298 = pneg %p123
      $region34: #{gnn_forward.7} parent=31 // pred_check_branch
        %300 = sbr.rel (%p298) target = $region36
      $region35: #{gnn_forward.7} parent=31 // pred_region
        %s301 = smul.u32 4, %s23
      $region36: #{gnn_forward.7} parent=31 // pred_fallthru
        _
    $region32: #{gnn_forward.7} parent=5 // pred_fallthru
      _
    %p302 = scmp.le.s32.totalorder 2, %s18
    // Predicated region
    $region37: #{gnn_forward.7} parent=5 // pred_check
      %p303 = pneg %p302
    $region38: #{gnn_forward.7} parent=5 // pred_check_branch
      %305 = sbr.rel (%p303) target = $region40
    $region39: #{gnn_forward.7} parent=5 // pred_region
      %s306 = ssub.s32 %s18, 2
      // Predicated region
      $region41: #{gnn_forward.7} parent=39 // pred_check
        %p307 = pneg %p129
      $region42: #{gnn_forward.7} parent=39 // pred_check_branch
        %309 = sbr.rel (%p307) target = $region44
      $region43: #{gnn_forward.7} parent=39 // pred_region
        %s310 = smul.u32 4, %s24
        %p311 = scmp.lt.s32.totalorder %s310, 15
        %s312 = scalar_select %p311, %s310, 15
        %s313 = smul.addr %s312, 8
        %s314 = scalar_lea.vmem %s4, %s313
      $region44: #{gnn_forward.7} parent=39 // pred_fallthru
        _
    $region40: #{gnn_forward.7} parent=5 // pred_fallthru
      _
  $region6: #{gnn_forward.7} parent=0 // loop_footer
    %s22 = sadd.s32 1, %s18
  $region7: #{gnn_forward.7} parent=0 // loop_footer_branch
    %17 = sbr.rel target = $region3
  $region8: #{gnn_forward.7} parent=0 // loop_exit
    _

// kernel: gnn_forward.8
$region0: #{gnn_forward.8}
  #allocation0 [shape = 'u32[]', space=smem, size = 0x4, offset = 0x4, fixed_abs, tag = 'smem constant byte address 0x4 - core index']
  #allocation1 [shape = 'u32[72,128]{1,0:T(1,128)}', space=vmem, size = 0x9000, scoped, tag = 'internal scratch']
  #allocation2 [shape = 's32[1]{0}', space=sflag, size = 0x4, scoped, tag = 'scoped memory for gnn_forward.8']
  #allocation3 [shape = 'u8[512]{0}', space=smem, size = 0x200, scoped, tag = 'prefetched SMEM operand 0']
  %s0 = inlined_call_operand.vmem [shape: s32[4], index: 0, kind: input, shape index: {}]
  %s1 = inlined_call_operand.vmem [shape: bf16[128,32], index: 1, kind: input, shape index: {}]
  %s2 = inlined_call_operand.vmem [shape: bf16[2,32,32], index: 2, kind: input, shape index: {}]
  %s3 = inlined_call_operand.vmem [shape: f32[2,1,32], index: 3, kind: input, shape index: {}]
  %s4 = inlined_call_operand.vmem [shape: f32[128,32], index: 4, kind: output, shape index: {}]
  %s5 = sld [smem:[#allocation0]]
  $region45: #{gnn_forward.8} parent=0
    _
  %s7 = ssub.s32 1, %s5
  %s8 = scalar_select 0, %s7, %s5
  %s10 = sshll.u32 %s0, 4
  %s11 = int_to_ptr.vmem [resolvable:$true] %s10
  %13 = dma.vmem_to_smem %s11, 16, [#allocation3], [#allocation2]
  %15 = dma.done [#allocation2], 16
  %16 = sfence
  loop: start=0, step=1, limit=6
  $region2: #{gnn_forward.8} parent=0 // loop_pre_header
    _
  $region3: #{gnn_forward.8} parent=0 // loop_header
    %s18 = sphi 0, %s22
    %p19 = scmp.ge.s32.totalorder %s18, 6
    %s28 = sphi 0, %s30
    %s31 = sphi 0, %s28
    %s32 = sphi 0, %s31
    %s48 = sphi 0, %s32
    %s56 = sphi 0, %s58
    %s59 = sphi 0, %s56
    %s60 = sphi 0, %s59
    %s76 = sphi 0, %s60
    %s84 = sphi 0, %s86
    %s87 = sphi 0, %s84
    %s88 = sphi 0, %s87
    %s104 = sphi 0, %s88
    %s110 = sphi 0, %s112
    %s113 = sphi 0, %s110
    %s114 = sphi 0, %s113
    %s130 = sphi 0, %s114
  $region4: #{gnn_forward.8} parent=0 // loop_header_branch
    %21 = sbr.rel (%p19) target = $region8
  $region5: #{gnn_forward.8} parent=0 // loop_body
    %s23 = ssub.s32 %s18, 1
    %s24 = ssub.s32 %s18, 2
    %s25 = sadd.s32 %s18, 1
    %s26 = ssub.s32 %s18, %s25
    %p27 = scmp.eq.s32.totalorder %s26, 0
    %s29 = sadd.s32 %s28, 1
    %s30 = scalar_select %p27, %s28, %s29
    %p33 = pneg %p27
    %p34 = scmp.eq.s32.totalorder %s18, 3
    %p35 = por %p33, %p34
    %p36 = scmp.ne.s32.totalorder %s28, %s31
    %p37 = scmp.eq.s32.totalorder %s18, 0
    %p38 = por %p36, %p37
    %p39 = scmp.ne.s32.totalorder %s28, %s31
    %p40 = scmp.eq.s32.totalorder %s23, 3
    %p41 = por %p39, %p40
    %p42 = scmp.ne.s32.totalorder %s31, %s32
    %p43 = scmp.eq.s32.totalorder %s23, 0
    %p44 = por %p42, %p43
    %p45 = scmp.ne.s32.totalorder %s31, %s32
    %p46 = scmp.eq.s32.totalorder %s24, 3
    %p47 = por %p45, %p46
    %p49 = scmp.ne.s32.totalorder %s32, %s48
    %p50 = scmp.eq.s32.totalorder %s24, 0
    %p51 = por %p49, %p50
    %s52 = sld [smem:[#allocation3 + %s18]]
    %s53 = sld [smem:[#allocation3 + %s25]]
    %s54 = ssub.s32 %s52, %s53
    %p55 = scmp.eq.s32.totalorder %s54, 0
    %s57 = sadd.s32 %s56, 1
    %s58 = scalar_select %p55, %s56, %s57
    %p61 = pneg %p55
    %p62 = scmp.eq.s32.totalorder %s18, 3
    %p63 = por %p61, %p62
    %p64 = scmp.ne.s32.totalorder %s56, %s59
    %p65 = scmp.eq.s32.totalorder %s18, 0
    %p66 = por %p64, %p65
    %p67 = scmp.ne.s32.totalorder %s56, %s59
    %p68 = scmp.eq.s32.totalorder %s23, 3
    %p69 = por %p67, %p68
    %p70 = scmp.ne.s32.totalorder %s59, %s60
    %p71 = scmp.eq.s32.totalorder %s23, 0
    %p72 = por %p70, %p71
    %p73 = scmp.ne.s32.totalorder %s59, %s60
    %p74 = scmp.eq.s32.totalorder %s24, 3
    %p75 = por %p73, %p74
    %p77 = scmp.ne.s32.totalorder %s60, %s76
    %p78 = scmp.eq.s32.totalorder %s24, 0
    %p79 = por %p77, %p78
    %s80 = sld [smem:[#allocation3 + %s18]]
    %s81 = sld [smem:[#allocation3 + %s25]]
    %s82 = ssub.s32 %s80, %s81
    %p83 = scmp.eq.s32.totalorder %s82, 0
    %s85 = sadd.s32 %s84, 1
    %s86 = scalar_select %p83, %s84, %s85
    %p89 = pneg %p83
    %p90 = scmp.eq.s32.totalorder %s18, 3
    %p91 = por %p89, %p90
    %p92 = scmp.ne.s32.totalorder %s84, %s87
    %p93 = scmp.eq.s32.totalorder %s18, 0
    %p94 = por %p92, %p93
    %p95 = scmp.ne.s32.totalorder %s84, %s87
    %p96 = scmp.eq.s32.totalorder %s23, 3
    %p97 = por %p95, %p96
    %p98 = scmp.ne.s32.totalorder %s87, %s88
    %p99 = scmp.eq.s32.totalorder %s23, 0
    %p100 = por %p98, %p99
    %p101 = scmp.ne.s32.totalorder %s87, %s88
    %p102 = scmp.eq.s32.totalorder %s24, 3
    %p103 = por %p101, %p102
    %p105 = scmp.ne.s32.totalorder %s88, %s104
    %p106 = scmp.eq.s32.totalorder %s24, 0
    %p107 = por %p105, %p106
    %s108 = ssub.s32 %s18, %s25
    %p109 = scmp.eq.s32.totalorder %s108, 0
    %s111 = sadd.s32 %s110, 1
    %s112 = scalar_select %p109, %s110, %s111
    %p115 = pneg %p109
    %p116 = scmp.eq.s32.totalorder %s18, 3
    %p117 = por %p115, %p116
    %p118 = scmp.ne.s32.totalorder %s110, %s113
    %p119 = scmp.eq.s32.totalorder %s18, 0
    %p120 = por %p118, %p119
    %p121 = scmp.ne.s32.totalorder %s110, %s113
    %p122 = scmp.eq.s32.totalorder %s23, 3
    %p123 = por %p121, %p122
    %p124 = scmp.ne.s32.totalorder %s113, %s114
    %p125 = scmp.eq.s32.totalorder %s23, 0
    %p126 = por %p124, %p125
    %p127 = scmp.ne.s32.totalorder %s113, %s114
    %p128 = scmp.eq.s32.totalorder %s24, 3
    %p129 = por %p127, %p128
    %p131 = scmp.ne.s32.totalorder %s114, %s130
    %p132 = scmp.eq.s32.totalorder %s24, 0
    %p133 = por %p131, %p132
    %p134 = scmp.le.s32.totalorder 1, %s18
    %p135 = scmp.lt.s32.totalorder %s18, 5
    %p136 = pnand %p134, %p135
    %p137 = pneg %p136
    // Predicated region
    $region9: #{gnn_forward.8} parent=5 // pred_check
      _
    $region10: #{gnn_forward.8} parent=5 // pred_check_branch
      %139 = sbr.rel (%p136) target = $region12
    $region11: #{gnn_forward.8} parent=5 // pred_region
      %s140 = ssub.s32 %s18, 1
    $region12: #{gnn_forward.8} parent=5 // pred_fallthru
      _
    %p141 = scmp.lt.s32.totalorder %s18, 4
    // Predicated region
    $region13: #{gnn_forward.8} parent=5 // pred_check
      %p142 = pneg %p141
    $region14: #{gnn_forward.8} parent=5 // pred_check_branch
      %144 = sbr.rel (%p142) target = $region16
    $region15: #{gnn_forward.8} parent=5 // pred_region
      // Predicated region
      $region17: #{gnn_forward.8} parent=15 // pred_check
        %p145 = pneg %p38
      $region18: #{gnn_forward.8} parent=15 // pred_check_branch
        %147 = sbr.rel (%p145) target = $region20
      $region19: #{gnn_forward.8} parent=15 // pred_region
        %s148 = smul.u32 4, %s18
        %p149 = scmp.lt.s32.totalorder %s148, 15
        %s150 = scalar_select %p149, %s148, 15
        %s151 = smul.addr %s150, 4
        %s152 = scalar_lea.vmem %s1, %s151
        %s153 = smul.u32 4, %s18
      $region20: #{gnn_forward.8} parent=15 // pred_fallthru
        _
      // Predicated region
      $region21: #{gnn_forward.8} parent=15 // pred_check
        %p154 = pneg %p66
      $region22: #{gnn_forward.8} parent=15 // pred_check_branch
        %156 = sbr.rel (%p154) target = $region24
      $region23: #{gnn_forward.8} parent=15 // pred_region
        %s157 = sld [smem:[#allocation3 + %s18]]
        %p158 = scmp.lt.s32.totalorder %s157, 1
        %s159 = scalar_select %p158, %s157, 1
        %s160 = smul.addr %s159, 4
        %s161 = smul.addr %s160, 4
        %s162 = scalar_lea.vmem %s2, %s161
        %s163 = sld [smem:[#allocation3 + %s18]]
      $region24: #{gnn_forward.8} parent=15 // pred_fallthru
        _
      // Predicated region
      $region25: #{gnn_forward.8} parent=15 // pred_check
        %p164 = pneg %p94
      $region26: #{gnn_forward.8} parent=15 // pred_check_branch
        %166 = sbr.rel (%p164) target = $region28
      $region27: #{gnn_forward.8} parent=15 // pred_region
        %s167 = sld [smem:[#allocation3 + %s18]]
        %p168 = scmp.lt.s32.totalorder %s167, 1
        %s169 = scalar_select %p168, %s167, 1
        %s170 = scalar_lea.vmem %s3, %s169
        %s171 = sld [smem:[#allocation3 + %s18]]
      $region28: #{gnn_forward.8} parent=15 // pred_fallthru
        _
    $region16: #{gnn_forward.8} parent=5 // pred_fallthru
      _
    %p172 = scmp.le.s32.totalorder 1, %s18
    %p173 = scmp.lt.s32.totalorder %s18, 5
    %p174 = pnand %p172, %p173
    %p175 = pneg %p174
    // Predicated region
    $region29: #{gnn_forward.8} parent=5 // pred_check
      _
    $region30: #{gnn_forward.8} parent=5 // pred_check_branch
      %177 = sbr.rel (%p174) target = $region32
    $region31: #{gnn_forward.8} parent=5 // pred_region
      %s178 = ssub.s32 %s18, 1
      %s179 = smul.u32 4, %s23
      %p180 = scmp.lt.s32.totalorder %s179, 15
      %s181 = scalar_select %p180, %s179, 15
      %s182 = smul.addr %s181, 4
      %s183 = scalar_lea.vmem %s1, %s182
      %p184 = pneg %p44
      %p185 = pneg %p41
      %s186 = sld [smem:[#allocation3 + %s23]]
      %p187 = scmp.lt.s32.totalorder %s186, 1
      %s188 = scalar_select %p187, %s186, 1
      %s189 = smul.addr %s188, 4
      %s190 = smul.addr %s189, 4
      %s191 = scalar_lea.vmem %s2, %s190
      %p192 = pneg %p72
      %p193 = pneg %p69
      %s194 = sld [smem:[#allocation3 + %s23]]
      %p195 = scmp.lt.s32.totalorder %s194, 1
      %s196 = scalar_select %p195, %s194, 1
      %s197 = scalar_lea.vmem %s3, %s196
      %p198 = pneg %p100
      %p199 = pneg %p97
      %p200 = pneg %p126
      %p201 = pneg %p123
      %s202 = smul.u32 4, %s23
      %p203 = scmp.lt.s32.totalorder %s202, 15
      %s204 = scalar_select %p203, %s202, 15
      %s205 = smul.addr %s204, 8
      %s206 = scalar_lea.vmem %s4, %s205
      %s207 = smul.u32 4, %s23
      %p208 = scmp.lt.s32.totalorder %s207, 15
      %s209 = scalar_select %p208, %s207, 15
      %s210 = smul.addr %s209, 4
      %s211 = scalar_lea.vmem %s1, %s210
      %s212 = smul.u32 4, %s23
      %s213 = sld [smem:[#allocation3 + %s23]]
      %p214 = scmp.lt.s32.totalorder %s213, 1
      %s215 = scalar_select %p214, %s213, 1
      %s216 = smul.addr %s215, 4
      %s217 = smul.addr %s216, 4
      %s218 = scalar_lea.vmem %s2, %s217
      %s219 = sld [smem:[#allocation3 + %s23]]
      %s220 = sld [smem:[#allocation3 + %s23]]
      %p221 = scmp.lt.s32.totalorder %s220, 1
      %s222 = scalar_select %p221, %s220, 1
      %s223 = scalar_lea.vmem %s3, %s222
      %s224 = sld [smem:[#allocation3 + %s23]]
      %s225 = smul.u32 4, %s23
      %p226 = scmp.lt.s32.totalorder %s225, 15
      %s227 = scalar_select %p226, %s225, 15
      %s228 = smul.addr %s227, 8
      %s229 = scalar_lea.vmem %s4, %s228
      %s230 = smul.u32 4, %s23
      %v232 = vld [vmem:[%s211] sm:$0xf]
      %v233 = vld [vmem:[%s211 + $0x4] sm:$0xf]
      %v234 = vld [vmem:[%s211 + $0x8] sm:$0xf]
      %v235 = vld [vmem:[%s211 + $0xc] sm:$0xf]
      %v236 = vld [vmem:[%s218] sm:$0xf]
      %v237 = vld [vmem:[%s218 + $0x4] sm:$0xf]
      %v238 = vld [vmem:[%s218 + $0x8] sm:$0xf]
      %v239 = vld [vmem:[%s218 + $0xc] sm:$0xf]
      %v240 = vld [vmem:[%s223] sm:$0x1]
      %v242 = vperm.slane %v240, 0
      %v248 = vunpack.c.l.b16 %v232
      %v249 = vunpack.c.l.b16 %v233
      %v250 = vunpack.c.l.b16 %v234
      %v251 = vunpack.c.l.b16 %v235
      %v252 = vpack.c.b16 %v249, %v248
      %v253 = vpack.c.b16 %v251, %v250
      %v258 = vunpack.c.l.b16 %v236
      %v259 = vunpack.c.l.b16 %v237
      %v260 = vunpack.c.l.b16 %v238
      %v261 = vunpack.c.l.b16 %v239
      %v262 = vpack.c.b16 %v259, %v258
      %v263 = vpack.c.b16 %v261, %v260
      %vm266 = vcmask 261120
      %v268 = vsel %vm266, %v252, 0
      %v271 = vsel %vm266, %v253, 0
      %273 = vmatpush.bf16.msra.mxu0 0
      %274 = vmatpush.bf16.msra.mxu0 0
      %275 = vmatpush.bf16.msra.mxu0 0
      %276 = vmatpush.bf16.msra.mxu0 0
      %277 = vmatpush.bf16.msra.mxu0 0
      %278 = vmatpush.bf16.msra.mxu0 0
      %279 = vmatpush.bf16.msra.mxu0 %v263
      %280 = vmatpush.bf16.msra.mxu0 %v262
      %281 = vmatmul.bf16.gmra.mxu0 %v268
      %v282 = vpop.f32.mrf.mxu0
      %v283 = vadd.f32 %v242, %v282
      %v284 = vpop.f32.mrf.mxu0
      %v285 = vadd.f32 %v242, %v284
      %286 = vmatmul.bf16.gmra.mxu0 %v271
      %v287 = vpop.f32.mrf.mxu0
      %v288 = vadd.f32 %v242, %v287
      %v289 = vpop.f32.mrf.mxu0
      %v290 = vadd.f32 %v242, %v289
      %291 = vdwg.mxu0
      %292 = vst.msk [vmem:[%s229] sm:$0xff] %vm266, %v283
      %293 = vst.msk [vmem:[%s229 + $0x8] sm:$0xff] %vm266, %v285
      %294 = vst.msk [vmem:[%s229 + $0x10] sm:$0xff] %vm266, %v288
      %295 = vst.msk [vmem:[%s229 + $0x18] sm:$0xff] %vm266, %v290
      %s296 = smul.u32 4, %s23
      %p297 = scmp.lt.s32.totalorder %s296, 15
      %s298 = scalar_select %p297, %s296, 15
      %s299 = smul.addr %s298, 8
      %s300 = scalar_lea.vmem %s4, %s299
      // Predicated region
      $region33: #{gnn_forward.8} parent=31 // pred_check
        %p301 = pneg %p123
      $region34: #{gnn_forward.8} parent=31 // pred_check_branch
        %303 = sbr.rel (%p301) target = $region36
      $region35: #{gnn_forward.8} parent=31 // pred_region
        %s304 = smul.u32 4, %s23
      $region36: #{gnn_forward.8} parent=31 // pred_fallthru
        _
    $region32: #{gnn_forward.8} parent=5 // pred_fallthru
      _
    %p305 = scmp.le.s32.totalorder 2, %s18
    // Predicated region
    $region37: #{gnn_forward.8} parent=5 // pred_check
      %p306 = pneg %p305
    $region38: #{gnn_forward.8} parent=5 // pred_check_branch
      %308 = sbr.rel (%p306) target = $region40
    $region39: #{gnn_forward.8} parent=5 // pred_region
      %s309 = ssub.s32 %s18, 2
      // Predicated region
      $region41: #{gnn_forward.8} parent=39 // pred_check
        %p310 = pneg %p129
      $region42: #{gnn_forward.8} parent=39 // pred_check_branch
        %312 = sbr.rel (%p310) target = $region44
      $region43: #{gnn_forward.8} parent=39 // pred_region
        %s313 = smul.u32 4, %s24
        %p314 = scmp.lt.s32.totalorder %s313, 15
        %s315 = scalar_select %p314, %s313, 15
        %s316 = smul.addr %s315, 8
        %s317 = scalar_lea.vmem %s4, %s316
      $region44: #{gnn_forward.8} parent=39 // pred_fallthru
        _
    $region40: #{gnn_forward.8} parent=5 // pred_fallthru
      _
  $region6: #{gnn_forward.8} parent=0 // loop_footer
    %s22 = sadd.s32 1, %s18
  $region7: #{gnn_forward.8} parent=0 // loop_footer_branch
    %17 = sbr.rel target = $region3
  $region8: #{gnn_forward.8} parent=0 // loop_exit
    _

// kernel: gnn_forward.9
$region0: #{gnn_forward.9}
  #allocation0 [shape = 'u32[]', space=smem, size = 0x4, offset = 0x4, fixed_abs, tag = 'smem constant byte address 0x4 - core index']
  #allocation1 [shape = 'u32[72,128]{1,0:T(1,128)}', space=vmem, size = 0x9000, scoped, tag = 'internal scratch']
  %s0 = inlined_call_operand.vmem [shape: bf16[128,64], index: 0, kind: input, shape index: {}]
  %s1 = inlined_call_operand.vmem [shape: f32[128,32], index: 1, kind: input, shape index: {}]
  %s2 = inlined_call_operand.vmem [shape: f32[128,32], index: 2, kind: input, shape index: {}]
  %s3 = inlined_call_operand.vmem [shape: f32[128,2], index: 3, kind: input, shape index: {}]
  %s4 = inlined_call_operand.vmem [shape: f32[128,2], index: 4, kind: input, shape index: {}]
  %s5 = inlined_call_operand.vmem [shape: f32[128,4], index: 5, kind: input, shape index: {}]
  %s6 = inlined_call_operand.vmem [shape: bf16[64,32], index: 6, kind: input, shape index: {}]
  %s7 = inlined_call_operand.vmem [shape: f32[1,32], index: 7, kind: input, shape index: {}]
  %s8 = inlined_call_operand.vmem [shape: bf16[2,32,64], index: 8, kind: input, shape index: {}]
  %s9 = inlined_call_operand.vmem [shape: f32[2,1,64], index: 9, kind: input, shape index: {}]
  %s10 = inlined_call_operand.vmem [shape: f32[8,8,8], index: 10, kind: input, shape index: {}]
  %s11 = inlined_call_operand.vmem [shape: f32[8,8,8], index: 11, kind: input, shape index: {}]
  %s12 = inlined_call_operand.vmem [shape: f32[128,32], index: 12, kind: output, shape index: {0}]
  %s13 = inlined_call_operand.vmem [shape: f32[128,4], index: 13, kind: output, shape index: {1}]
  %14 = xla_tuple %s12, %s13
  %s15 = sld [smem:[#allocation0]]
  $region89: #{gnn_forward.9} parent=0
    _
  %s17 = ssub.s32 1, %s15
  %s18 = scalar_select 0, %s17, %s15
  loop: start=0, step=1, limit=4
  $region2: #{gnn_forward.9} parent=0 // loop_pre_header
    _
  $region3: #{gnn_forward.9} parent=0 // loop_header
    %s20 = sphi 0, %s24
    %p21 = scmp.ge.s32.totalorder %s20, 4
    %s30 = sphi 0, %s32
    %s33 = sphi 0, %s30
    %s34 = sphi 0, %s33
    %s50 = sphi 0, %s34
    %s56 = sphi 0, %s58
    %s59 = sphi 0, %s56
    %s60 = sphi 0, %s59
    %s76 = sphi 0, %s60
    %s82 = sphi 0, %s84
    %s85 = sphi 0, %s82
    %s86 = sphi 0, %s85
    %s102 = sphi 0, %s86
    %s108 = sphi 0, %s110
    %s111 = sphi 0, %s108
    %s112 = sphi 0, %s111
    %s128 = sphi 0, %s112
    %s134 = sphi 0, %s136
    %s137 = sphi 0, %s134
    %s138 = sphi 0, %s137
    %s154 = sphi 0, %s138
    %s160 = sphi 0, %s162
    %s163 = sphi 0, %s160
    %s164 = sphi 0, %s163
    %s180 = sphi 0, %s164
    %s184 = sphi 0, %s184
    %s186 = sphi 0, %s184
    %s187 = sphi 0, %s186
    %s201 = sphi 0, %s187
    %s205 = sphi 0, %s205
    %s207 = sphi 0, %s205
    %s208 = sphi 0, %s207
    %s222 = sphi 0, %s208
    %s226 = sphi 0, %s226
    %s228 = sphi 0, %s226
    %s229 = sphi 0, %s228
    %s243 = sphi 0, %s229
    %s247 = sphi 0, %s247
    %s249 = sphi 0, %s247
    %s250 = sphi 0, %s249
    %s264 = sphi 0, %s250
    %s268 = sphi 0, %s268
    %s270 = sphi 0, %s268
    %s271 = sphi 0, %s270
    %s285 = sphi 0, %s271
    %s289 = sphi 0, %s289
    %s291 = sphi 0, %s289
    %s292 = sphi 0, %s291
    %s306 = sphi 0, %s292
    %s312 = sphi 0, %s314
    %s315 = sphi 0, %s312
    %s316 = sphi 0, %s315
    %s332 = sphi 0, %s316
    %s338 = sphi 0, %s340
    %s341 = sphi 0, %s338
    %s342 = sphi 0, %s341
    %s358 = sphi 0, %s342
  $region4: #{gnn_forward.9} parent=0 // loop_header_branch
    %23 = sbr.rel (%p21) target = $region8
  $region5: #{gnn_forward.9} parent=0 // loop_body
    %s25 = ssub.s32 %s20, 1
    %s26 = ssub.s32 %s20, 2
    %s27 = sadd.s32 %s20, 1
    %s28 = ssub.s32 %s20, %s27
    %p29 = scmp.eq.s32.totalorder %s28, 0
    %s31 = sadd.s32 %s30, 1
    %s32 = scalar_select %p29, %s30, %s31
    %p35 = pneg %p29
    %p36 = scmp.eq.s32.totalorder %s20, 1
    %p37 = por %p35, %p36
    %p38 = scmp.ne.s32.totalorder %s30, %s33
    %p39 = scmp.eq.s32.totalorder %s20, 0
    %p40 = por %p38, %p39
    %p41 = scmp.ne.s32.totalorder %s30, %s33
    %p42 = scmp.eq.s32.totalorder %s25, 1
    %p43 = por %p41, %p42
    %p44 = scmp.ne.s32.totalorder %s33, %s34
    %p45 = scmp.eq.s32.totalorder %s25, 0
    %p46 = por %p44, %p45
    %p47 = scmp.ne.s32.totalorder %s33, %s34
    %p48 = scmp.eq.s32.totalorder %s26, 1
    %p49 = por %p47, %p48
    %p51 = scmp.ne.s32.totalorder %s34, %s50
    %p52 = scmp.eq.s32.totalorder %s26, 0
    %p53 = por %p51, %p52
    %s54 = ssub.s32 %s20, %s27
    %p55 = scmp.eq.s32.totalorder %s54, 0
    %s57 = sadd.s32 %s56, 1
    %s58 = scalar_select %p55, %s56, %s57
    %p61 = pneg %p55
    %p62 = scmp.eq.s32.totalorder %s20, 1
    %p63 = por %p61, %p62
    %p64 = scmp.ne.s32.totalorder %s56, %s59
    %p65 = scmp.eq.s32.totalorder %s20, 0
    %p66 = por %p64, %p65
    %p67 = scmp.ne.s32.totalorder %s56, %s59
    %p68 = scmp.eq.s32.totalorder %s25, 1
    %p69 = por %p67, %p68
    %p70 = scmp.ne.s32.totalorder %s59, %s60
    %p71 = scmp.eq.s32.totalorder %s25, 0
    %p72 = por %p70, %p71
    %p73 = scmp.ne.s32.totalorder %s59, %s60
    %p74 = scmp.eq.s32.totalorder %s26, 1
    %p75 = por %p73, %p74
    %p77 = scmp.ne.s32.totalorder %s60, %s76
    %p78 = scmp.eq.s32.totalorder %s26, 0
    %p79 = por %p77, %p78
    %s80 = ssub.s32 %s20, %s27
    %p81 = scmp.eq.s32.totalorder %s80, 0
    %s83 = sadd.s32 %s82, 1
    %s84 = scalar_select %p81, %s82, %s83
    %p87 = pneg %p81
    %p88 = scmp.eq.s32.totalorder %s20, 1
    %p89 = por %p87, %p88
    %p90 = scmp.ne.s32.totalorder %s82, %s85
    %p91 = scmp.eq.s32.totalorder %s20, 0
    %p92 = por %p90, %p91
    %p93 = scmp.ne.s32.totalorder %s82, %s85
    %p94 = scmp.eq.s32.totalorder %s25, 1
    %p95 = por %p93, %p94
    %p96 = scmp.ne.s32.totalorder %s85, %s86
    %p97 = scmp.eq.s32.totalorder %s25, 0
    %p98 = por %p96, %p97
    %p99 = scmp.ne.s32.totalorder %s85, %s86
    %p100 = scmp.eq.s32.totalorder %s26, 1
    %p101 = por %p99, %p100
    %p103 = scmp.ne.s32.totalorder %s86, %s102
    %p104 = scmp.eq.s32.totalorder %s26, 0
    %p105 = por %p103, %p104
    %s106 = ssub.s32 %s20, %s27
    %p107 = scmp.eq.s32.totalorder %s106, 0
    %s109 = sadd.s32 %s108, 1
    %s110 = scalar_select %p107, %s108, %s109
    %p113 = pneg %p107
    %p114 = scmp.eq.s32.totalorder %s20, 1
    %p115 = por %p113, %p114
    %p116 = scmp.ne.s32.totalorder %s108, %s111
    %p117 = scmp.eq.s32.totalorder %s20, 0
    %p118 = por %p116, %p117
    %p119 = scmp.ne.s32.totalorder %s108, %s111
    %p120 = scmp.eq.s32.totalorder %s25, 1
    %p121 = por %p119, %p120
    %p122 = scmp.ne.s32.totalorder %s111, %s112
    %p123 = scmp.eq.s32.totalorder %s25, 0
    %p124 = por %p122, %p123
    %p125 = scmp.ne.s32.totalorder %s111, %s112
    %p126 = scmp.eq.s32.totalorder %s26, 1
    %p127 = por %p125, %p126
    %p129 = scmp.ne.s32.totalorder %s112, %s128
    %p130 = scmp.eq.s32.totalorder %s26, 0
    %p131 = por %p129, %p130
    %s132 = ssub.s32 %s20, %s27
    %p133 = scmp.eq.s32.totalorder %s132, 0
    %s135 = sadd.s32 %s134, 1
    %s136 = scalar_select %p133, %s134, %s135
    %p139 = pneg %p133
    %p140 = scmp.eq.s32.totalorder %s20, 1
    %p141 = por %p139, %p140
    %p142 = scmp.ne.s32.totalorder %s134, %s137
    %p143 = scmp.eq.s32.totalorder %s20, 0
    %p144 = por %p142, %p143
    %p145 = scmp.ne.s32.totalorder %s134, %s137
    %p146 = scmp.eq.s32.totalorder %s25, 1
    %p147 = por %p145, %p146
    %p148 = scmp.ne.s32.totalorder %s137, %s138
    %p149 = scmp.eq.s32.totalorder %s25, 0
    %p150 = por %p148, %p149
    %p151 = scmp.ne.s32.totalorder %s137, %s138
    %p152 = scmp.eq.s32.totalorder %s26, 1
    %p153 = por %p151, %p152
    %p155 = scmp.ne.s32.totalorder %s138, %s154
    %p156 = scmp.eq.s32.totalorder %s26, 0
    %p157 = por %p155, %p156
    %s158 = ssub.s32 %s20, %s27
    %p159 = scmp.eq.s32.totalorder %s158, 0
    %s161 = sadd.s32 %s160, 1
    %s162 = scalar_select %p159, %s160, %s161
    %p165 = pneg %p159
    %p166 = scmp.eq.s32.totalorder %s20, 1
    %p167 = por %p165, %p166
    %p168 = scmp.ne.s32.totalorder %s160, %s163
    %p169 = scmp.eq.s32.totalorder %s20, 0
    %p170 = por %p168, %p169
    %p171 = scmp.ne.s32.totalorder %s160, %s163
    %p172 = scmp.eq.s32.totalorder %s25, 1
    %p173 = por %p171, %p172
    %p174 = scmp.ne.s32.totalorder %s163, %s164
    %p175 = scmp.eq.s32.totalorder %s25, 0
    %p176 = por %p174, %p175
    %p177 = scmp.ne.s32.totalorder %s163, %s164
    %p178 = scmp.eq.s32.totalorder %s26, 1
    %p179 = por %p177, %p178
    %p181 = scmp.ne.s32.totalorder %s164, %s180
    %p182 = scmp.eq.s32.totalorder %s26, 0
    %p183 = por %p181, %p182
    %s185 = sadd.s32 %s184, 1
    %p188 = scmp.eq.s32.totalorder %s20, 1
    %p189 = scmp.ne.s32.totalorder %s184, %s186
    %p190 = scmp.eq.s32.totalorder %s20, 0
    %p191 = por %p189, %p190
    %p192 = scmp.ne.s32.totalorder %s184, %s186
    %p193 = scmp.eq.s32.totalorder %s25, 1
    %p194 = por %p192, %p193
    %p195 = scmp.ne.s32.totalorder %s186, %s187
    %p196 = scmp.eq.s32.totalorder %s25, 0
    %p197 = por %p195, %p196
    %p198 = scmp.ne.s32.totalorder %s186, %s187
    %p199 = scmp.eq.s32.totalorder %s26, 1
    %p200 = por %p198, %p199
    %p202 = scmp.ne.s32.totalorder %s187, %s201
    %p203 = scmp.eq.s32.totalorder %s26, 0
    %p204 = por %p202, %p203
    %s206 = sadd.s32 %s205, 1
    %p209 = scmp.eq.s32.totalorder %s20, 1
    %p210 = scmp.ne.s32.totalorder %s205, %s207
    %p211 = scmp.eq.s32.totalorder %s20, 0
    %p212 = por %p210, %p211
    %p213 = scmp.ne.s32.totalorder %s205, %s207
    %p214 = scmp.eq.s32.totalorder %s25, 1
    %p215 = por %p213, %p214
    %p216 = scmp.ne.s32.totalorder %s207, %s208
    %p217 = scmp.eq.s32.totalorder %s25, 0
    %p218 = por %p216, %p217
    %p219 = scmp.ne.s32.totalorder %s207, %s208
    %p220 = scmp.eq.s32.totalorder %s26, 1
    %p221 = por %p219, %p220
    %p223 = scmp.ne.s32.totalorder %s208, %s222
    %p224 = scmp.eq.s32.totalorder %s26, 0
    %p225 = por %p223, %p224
    %s227 = sadd.s32 %s226, 1
    %p230 = scmp.eq.s32.totalorder %s20, 1
    %p231 = scmp.ne.s32.totalorder %s226, %s228
    %p232 = scmp.eq.s32.totalorder %s20, 0
    %p233 = por %p231, %p232
    %p234 = scmp.ne.s32.totalorder %s226, %s228
    %p235 = scmp.eq.s32.totalorder %s25, 1
    %p236 = por %p234, %p235
    %p237 = scmp.ne.s32.totalorder %s228, %s229
    %p238 = scmp.eq.s32.totalorder %s25, 0
    %p239 = por %p237, %p238
    %p240 = scmp.ne.s32.totalorder %s228, %s229
    %p241 = scmp.eq.s32.totalorder %s26, 1
    %p242 = por %p240, %p241
    %p244 = scmp.ne.s32.totalorder %s229, %s243
    %p245 = scmp.eq.s32.totalorder %s26, 0
    %p246 = por %p244, %p245
    %s248 = sadd.s32 %s247, 1
    %p251 = scmp.eq.s32.totalorder %s20, 1
    %p252 = scmp.ne.s32.totalorder %s247, %s249
    %p253 = scmp.eq.s32.totalorder %s20, 0
    %p254 = por %p252, %p253
    %p255 = scmp.ne.s32.totalorder %s247, %s249
    %p256 = scmp.eq.s32.totalorder %s25, 1
    %p257 = por %p255, %p256
    %p258 = scmp.ne.s32.totalorder %s249, %s250
    %p259 = scmp.eq.s32.totalorder %s25, 0
    %p260 = por %p258, %p259
    %p261 = scmp.ne.s32.totalorder %s249, %s250
    %p262 = scmp.eq.s32.totalorder %s26, 1
    %p263 = por %p261, %p262
    %p265 = scmp.ne.s32.totalorder %s250, %s264
    %p266 = scmp.eq.s32.totalorder %s26, 0
    %p267 = por %p265, %p266
    %s269 = sadd.s32 %s268, 1
    %p272 = scmp.eq.s32.totalorder %s20, 1
    %p273 = scmp.ne.s32.totalorder %s268, %s270
    %p274 = scmp.eq.s32.totalorder %s20, 0
    %p275 = por %p273, %p274
    %p276 = scmp.ne.s32.totalorder %s268, %s270
    %p277 = scmp.eq.s32.totalorder %s25, 1
    %p278 = por %p276, %p277
    %p279 = scmp.ne.s32.totalorder %s270, %s271
    %p280 = scmp.eq.s32.totalorder %s25, 0
    %p281 = por %p279, %p280
    %p282 = scmp.ne.s32.totalorder %s270, %s271
    %p283 = scmp.eq.s32.totalorder %s26, 1
    %p284 = por %p282, %p283
    %p286 = scmp.ne.s32.totalorder %s271, %s285
    %p287 = scmp.eq.s32.totalorder %s26, 0
    %p288 = por %p286, %p287
    %s290 = sadd.s32 %s289, 1
    %p293 = scmp.eq.s32.totalorder %s20, 1
    %p294 = scmp.ne.s32.totalorder %s289, %s291
    %p295 = scmp.eq.s32.totalorder %s20, 0
    %p296 = por %p294, %p295
    %p297 = scmp.ne.s32.totalorder %s289, %s291
    %p298 = scmp.eq.s32.totalorder %s25, 1
    %p299 = por %p297, %p298
    %p300 = scmp.ne.s32.totalorder %s291, %s292
    %p301 = scmp.eq.s32.totalorder %s25, 0
    %p302 = por %p300, %p301
    %p303 = scmp.ne.s32.totalorder %s291, %s292
    %p304 = scmp.eq.s32.totalorder %s26, 1
    %p305 = por %p303, %p304
    %p307 = scmp.ne.s32.totalorder %s292, %s306
    %p308 = scmp.eq.s32.totalorder %s26, 0
    %p309 = por %p307, %p308
    %s310 = ssub.s32 %s20, %s27
    %p311 = scmp.eq.s32.totalorder %s310, 0
    %s313 = sadd.s32 %s312, 1
    %s314 = scalar_select %p311, %s312, %s313
    %p317 = pneg %p311
    %p318 = scmp.eq.s32.totalorder %s20, 1
    %p319 = por %p317, %p318
    %p320 = scmp.ne.s32.totalorder %s312, %s315
    %p321 = scmp.eq.s32.totalorder %s20, 0
    %p322 = por %p320, %p321
    %p323 = scmp.ne.s32.totalorder %s312, %s315
    %p324 = scmp.eq.s32.totalorder %s25, 1
    %p325 = por %p323, %p324
    %p326 = scmp.ne.s32.totalorder %s315, %s316
    %p327 = scmp.eq.s32.totalorder %s25, 0
    %p328 = por %p326, %p327
    %p329 = scmp.ne.s32.totalorder %s315, %s316
    %p330 = scmp.eq.s32.totalorder %s26, 1
    %p331 = por %p329, %p330
    %p333 = scmp.ne.s32.totalorder %s316, %s332
    %p334 = scmp.eq.s32.totalorder %s26, 0
    %p335 = por %p333, %p334
    %s336 = ssub.s32 %s20, %s27
    %p337 = scmp.eq.s32.totalorder %s336, 0
    %s339 = sadd.s32 %s338, 1
    %s340 = scalar_select %p337, %s338, %s339
    %p343 = pneg %p337
    %p344 = scmp.eq.s32.totalorder %s20, 1
    %p345 = por %p343, %p344
    %p346 = scmp.ne.s32.totalorder %s338, %s341
    %p347 = scmp.eq.s32.totalorder %s20, 0
    %p348 = por %p346, %p347
    %p349 = scmp.ne.s32.totalorder %s338, %s341
    %p350 = scmp.eq.s32.totalorder %s25, 1
    %p351 = por %p349, %p350
    %p352 = scmp.ne.s32.totalorder %s341, %s342
    %p353 = scmp.eq.s32.totalorder %s25, 0
    %p354 = por %p352, %p353
    %p355 = scmp.ne.s32.totalorder %s341, %s342
    %p356 = scmp.eq.s32.totalorder %s26, 1
    %p357 = por %p355, %p356
    %p359 = scmp.ne.s32.totalorder %s342, %s358
    %p360 = scmp.eq.s32.totalorder %s26, 0
    %p361 = por %p359, %p360
    %p362 = scmp.le.s32.totalorder 1, %s20
    %p363 = scmp.lt.s32.totalorder %s20, 3
    %p364 = pnand %p362, %p363
    %p365 = pneg %p364
    // Predicated region
    $region9: #{gnn_forward.9} parent=5 // pred_check
      _
    $region10: #{gnn_forward.9} parent=5 // pred_check_branch
      %367 = sbr.rel (%p364) target = $region12
    $region11: #{gnn_forward.9} parent=5 // pred_region
      %s368 = ssub.s32 %s20, 1
      // Predicated region
      $region13: #{gnn_forward.9} parent=11 // pred_check
        %p369 = pneg %p197
      $region14: #{gnn_forward.9} parent=11 // pred_check_branch
        %371 = sbr.rel (%p369) target = $region16
      $region15: #{gnn_forward.9} parent=11 // pred_region
        _
      $region16: #{gnn_forward.9} parent=11 // pred_fallthru
        _
      // Predicated region
      $region17: #{gnn_forward.9} parent=11 // pred_check
        %p372 = pneg %p218
      $region18: #{gnn_forward.9} parent=11 // pred_check_branch
        %374 = sbr.rel (%p372) target = $region20
      $region19: #{gnn_forward.9} parent=11 // pred_region
        _
      $region20: #{gnn_forward.9} parent=11 // pred_fallthru
        _
      // Predicated region
      $region21: #{gnn_forward.9} parent=11 // pred_check
        %p375 = pneg %p239
      $region22: #{gnn_forward.9} parent=11 // pred_check_branch
        %377 = sbr.rel (%p375) target = $region24
      $region23: #{gnn_forward.9} parent=11 // pred_region
        _
      $region24: #{gnn_forward.9} parent=11 // pred_fallthru
        _
      // Predicated region
      $region25: #{gnn_forward.9} parent=11 // pred_check
        %p378 = pneg %p260
      $region26: #{gnn_forward.9} parent=11 // pred_check_branch
        %380 = sbr.rel (%p378) target = $region28
      $region27: #{gnn_forward.9} parent=11 // pred_region
        _
      $region28: #{gnn_forward.9} parent=11 // pred_fallthru
        _
      // Predicated region
      $region29: #{gnn_forward.9} parent=11 // pred_check
        %p381 = pneg %p281
      $region30: #{gnn_forward.9} parent=11 // pred_check_branch
        %383 = sbr.rel (%p381) target = $region32
      $region31: #{gnn_forward.9} parent=11 // pred_region
        _
      $region32: #{gnn_forward.9} parent=11 // pred_fallthru
        _
      // Predicated region
      $region33: #{gnn_forward.9} parent=11 // pred_check
        %p384 = pneg %p302
      $region34: #{gnn_forward.9} parent=11 // pred_check_branch
        %386 = sbr.rel (%p384) target = $region36
      $region35: #{gnn_forward.9} parent=11 // pred_region
        _
      $region36: #{gnn_forward.9} parent=11 // pred_fallthru
        _
    $region12: #{gnn_forward.9} parent=5 // pred_fallthru
      _
    %p387 = scmp.lt.s32.totalorder %s20, 2
    // Predicated region
    $region37: #{gnn_forward.9} parent=5 // pred_check
      %p388 = pneg %p387
    $region38: #{gnn_forward.9} parent=5 // pred_check_branch
      %390 = sbr.rel (%p388) target = $region40
    $region39: #{gnn_forward.9} parent=5 // pred_region
      // Predicated region
      $region41: #{gnn_forward.9} parent=39 // pred_check
        %p391 = pneg %p40
      $region42: #{gnn_forward.9} parent=39 // pred_check_branch
        %393 = sbr.rel (%p391) target = $region44
      $region43: #{gnn_forward.9} parent=39 // pred_region
        %s394 = smul.u32 8, %s20
        %p395 = scmp.lt.s32.totalorder %s394, 15
        %s396 = scalar_select %p395, %s394, 15
        %s397 = smul.addr %s396, 4
        %s398 = scalar_lea.vmem %s0, %s397
        %s399 = smul.u32 8, %s20
      $region44: #{gnn_forward.9} parent=39 // pred_fallthru
        _
      // Predicated region
      $region45: #{gnn_forward.9} parent=39 // pred_check
        %p400 = pneg %p66
      $region46: #{gnn_forward.9} parent=39 // pred_check_branch
        %402 = sbr.rel (%p400) target = $region48
      $region47: #{gnn_forward.9} parent=39 // pred_region
        %s403 = smul.u32 8, %s20
        %p404 = scmp.lt.s32.totalorder %s403, 15
        %s405 = scalar_select %p404, %s403, 15
        %s406 = smul.addr %s405, 8
        %s407 = scalar_lea.vmem %s1, %s406
        %s408 = smul.u32 8, %s20
      $region48: #{gnn_forward.9} parent=39 // pred_fallthru
        _
      // Predicated region
      $region49: #{gnn_forward.9} parent=39 // pred_check
        %p409 = pneg %p92
      $region50: #{gnn_forward.9} parent=39 // pred_check_branch
        %411 = sbr.rel (%p409) target = $region52
      $region51: #{gnn_forward.9} parent=39 // pred_region
        %s412 = smul.u32 8, %s20
        %p413 = scmp.lt.s32.totalorder %s412, 15
        %s414 = scalar_select %p413, %s412, 15
        %s415 = smul.addr %s414, 8
        %s416 = scalar_lea.vmem %s2, %s415
        %s417 = smul.u32 8, %s20
      $region52: #{gnn_forward.9} parent=39 // pred_fallthru
        _
      // Predicated region
      $region53: #{gnn_forward.9} parent=39 // pred_check
        %p418 = pneg %p118
      $region54: #{gnn_forward.9} parent=39 // pred_check_branch
        %420 = sbr.rel (%p418) target = $region56
      $region55: #{gnn_forward.9} parent=39 // pred_region
        %s421 = smul.u32 8, %s20
        %p422 = scmp.lt.s32.totalorder %s421, 15
        %s423 = scalar_select %p422, %s421, 15
        %s424 = smul.addr %s423, 8
        %s425 = scalar_lea.vmem %s3, %s424
        %s426 = smul.u32 8, %s20
      $region56: #{gnn_forward.9} parent=39 // pred_fallthru
        _
      // Predicated region
      $region57: #{gnn_forward.9} parent=39 // pred_check
        %p427 = pneg %p144
      $region58: #{gnn_forward.9} parent=39 // pred_check_branch
        %429 = sbr.rel (%p427) target = $region60
      $region59: #{gnn_forward.9} parent=39 // pred_region
        %s430 = smul.u32 8, %s20
        %p431 = scmp.lt.s32.totalorder %s430, 15
        %s432 = scalar_select %p431, %s430, 15
        %s433 = smul.addr %s432, 8
        %s434 = scalar_lea.vmem %s4, %s433
        %s435 = smul.u32 8, %s20
      $region60: #{gnn_forward.9} parent=39 // pred_fallthru
        _
      // Predicated region
      $region61: #{gnn_forward.9} parent=39 // pred_check
        %p436 = pneg %p170
      $region62: #{gnn_forward.9} parent=39 // pred_check_branch
        %438 = sbr.rel (%p436) target = $region64
      $region63: #{gnn_forward.9} parent=39 // pred_region
        %s439 = smul.u32 8, %s20
        %p440 = scmp.lt.s32.totalorder %s439, 15
        %s441 = scalar_select %p440, %s439, 15
        %s442 = smul.addr %s441, 8
        %s443 = scalar_lea.vmem %s5, %s442
        %s444 = smul.u32 8, %s20
      $region64: #{gnn_forward.9} parent=39 // pred_fallthru
        _
    $region40: #{gnn_forward.9} parent=5 // pred_fallthru
      _
    %p445 = scmp.le.s32.totalorder 1, %s20
    %p446 = scmp.lt.s32.totalorder %s20, 3
    %p447 = pnand %p445, %p446
    %p448 = pneg %p447
    // Predicated region
    $region65: #{gnn_forward.9} parent=5 // pred_check
      _
    $region66: #{gnn_forward.9} parent=5 // pred_check_branch
      %450 = sbr.rel (%p447) target = $region68
    $region67: #{gnn_forward.9} parent=5 // pred_region
      %s451 = ssub.s32 %s20, 1
      %s452 = smul.u32 8, %s25
      %p453 = scmp.lt.s32.totalorder %s452, 15
      %s454 = scalar_select %p453, %s452, 15
      %s455 = smul.addr %s454, 4
      %s456 = scalar_lea.vmem %s0, %s455
      %p457 = pneg %p46
      %p458 = pneg %p43
      %s459 = smul.u32 8, %s25
      %p460 = scmp.lt.s32.totalorder %s459, 15
      %s461 = scalar_select %p460, %s459, 15
      %s462 = smul.addr %s461, 8
      %s463 = scalar_lea.vmem %s1, %s462
      %p464 = pneg %p72
      %p465 = pneg %p69
      %s466 = smul.u32 8, %s25
      %p467 = scmp.lt.s32.totalorder %s466, 15
      %s468 = scalar_select %p467, %s466, 15
      %s469 = smul.addr %s468, 8
      %s470 = scalar_lea.vmem %s2, %s469
      %p471 = pneg %p98
      %p472 = pneg %p95
      %s473 = smul.u32 8, %s25
      %p474 = scmp.lt.s32.totalorder %s473, 15
      %s475 = scalar_select %p474, %s473, 15
      %s476 = smul.addr %s475, 8
      %s477 = scalar_lea.vmem %s3, %s476
      %p478 = pneg %p124
      %p479 = pneg %p121
      %s480 = smul.u32 8, %s25
      %p481 = scmp.lt.s32.totalorder %s480, 15
      %s482 = scalar_select %p481, %s480, 15
      %s483 = smul.addr %s482, 8
      %s484 = scalar_lea.vmem %s4, %s483
      %p485 = pneg %p150
      %p486 = pneg %p147
      %s487 = smul.u32 8, %s25
      %p488 = scmp.lt.s32.totalorder %s487, 15
      %s489 = scalar_select %p488, %s487, 15
      %s490 = smul.addr %s489, 8
      %s491 = scalar_lea.vmem %s5, %s490
      %p492 = pneg %p176
      %p493 = pneg %p173
      %p494 = pneg %p197
      %p495 = pneg %p194
      %p496 = pneg %p218
      %p497 = pneg %p215
      %p498 = pneg %p239
      %p499 = pneg %p236
      %p500 = pneg %p260
      %p501 = pneg %p257
      %p502 = pneg %p281
      %p503 = pneg %p278
      %p504 = pneg %p302
      %p505 = pneg %p299
      %p506 = pneg %p328
      %p507 = pneg %p325
      %s508 = smul.u32 8, %s25
      %p509 = scmp.lt.s32.totalorder %s508, 15
      %s510 = scalar_select %p509, %s508, 15
      %s511 = smul.addr %s510, 8
      %s512 = scalar_lea.vmem %s12, %s511
      %p513 = pneg %p354
      %p514 = pneg %p351
      %s515 = smul.u32 8, %s25
      %p516 = scmp.lt.s32.totalorder %s515, 15
      %s517 = scalar_select %p516, %s515, 15
      %s518 = smul.addr %s517, 8
      %s519 = scalar_lea.vmem %s13, %s518
      %s520 = smul.u32 8, %s25
      %p521 = scmp.lt.s32.totalorder %s520, 15
      %s522 = scalar_select %p521, %s520, 15
      %s523 = smul.addr %s522, 4
      %s524 = scalar_lea.vmem %s0, %s523
      %s525 = smul.u32 8, %s25
      %s526 = smul.u32 8, %s25
      %p527 = scmp.lt.s32.totalorder %s526, 15
      %s528 = scalar_select %p527, %s526, 15
      %s529 = smul.addr %s528, 8
      %s530 = scalar_lea.vmem %s1, %s529
      %s531 = smul.u32 8, %s25
      %s532 = smul.u32 8, %s25
      %p533 = scmp.lt.s32.totalorder %s532, 15
      %s534 = scalar_select %p533, %s532, 15
      %s535 = smul.addr %s534, 8
      %s536 = scalar_lea.vmem %s2, %s535
      %s537 = smul.u32 8, %s25
      %s538 = smul.u32 8, %s25
      %p539 = scmp.lt.s32.totalorder %s538, 15
      %s540 = scalar_select %p539, %s538, 15
      %s541 = smul.addr %s540, 8
      %s542 = scalar_lea.vmem %s3, %s541
      %s543 = smul.u32 8, %s25
      %s544 = smul.u32 8, %s25
      %p545 = scmp.lt.s32.totalorder %s544, 15
      %s546 = scalar_select %p545, %s544, 15
      %s547 = smul.addr %s546, 8
      %s548 = scalar_lea.vmem %s4, %s547
      %s549 = smul.u32 8, %s25
      %s550 = smul.u32 8, %s25
      %p551 = scmp.lt.s32.totalorder %s550, 15
      %s552 = scalar_select %p551, %s550, 15
      %s553 = smul.addr %s552, 8
      %s554 = scalar_lea.vmem %s5, %s553
      %s555 = smul.u32 8, %s25
      %s556 = smul.u32 8, %s25
      %p557 = scmp.lt.s32.totalorder %s556, 15
      %s558 = scalar_select %p557, %s556, 15
      %s559 = smul.addr %s558, 8
      %s560 = scalar_lea.vmem %s12, %s559
      %s561 = smul.u32 8, %s25
      %s562 = smul.u32 8, %s25
      %p563 = scmp.lt.s32.totalorder %s562, 15
      %s564 = scalar_select %p563, %s562, 15
      %s565 = smul.addr %s564, 8
      %s566 = scalar_lea.vmem %s13, %s565
      %s567 = smul.u32 8, %s25
      %v569 = vld [vmem:[%s524] sm:$0xf]
      %v570 = vld [vmem:[%s524 + $0x4] sm:$0xf]
      %v571 = vld [vmem:[%s524 + $0x8] sm:$0xf]
      %v572 = vld [vmem:[%s524 + $0xc] sm:$0xf]
      %v573 = vld [vmem:[%s524 + $0x10] sm:$0xf]
      %v574 = vld [vmem:[%s524 + $0x14] sm:$0xf]
      %v575 = vld [vmem:[%s524 + $0x18] sm:$0xf]
      %v576 = vld [vmem:[%s524 + $0x1c] sm:$0xf]
      %v577 = vld [vmem:[%s6] sm:$0xf]
      %v578 = vld [vmem:[%s6 + $0x4] sm:$0xf]
      %v579 = vld [vmem:[%s6 + $0x8] sm:$0xf]
      %v580 = vld [vmem:[%s6 + $0xc] sm:$0xf]
      %v581 = vld [vmem:[%s6 + $0x10] sm:$0xf]
      %v582 = vld [vmem:[%s6 + $0x14] sm:$0xf]
      %v583 = vld [vmem:[%s6 + $0x18] sm:$0xf]
      %v584 = vld [vmem:[%s6 + $0x1c] sm:$0xf]
      %v585 = vld [vmem:[%s7] sm:$0x1]
      %v587 = vperm.slane %v585, 0
      %v597 = vunpack.c.l.b16 %v569
      %v598 = vunpack.c.l.b16 %v570
      %v599 = vunpack.c.l.b16 %v571
      %v600 = vunpack.c.l.b16 %v572
      %v601 = vunpack.c.l.b16 %v573
      %v602 = vunpack.c.l.b16 %v574
      %v603 = vunpack.c.l.b16 %v575
      %v604 = vunpack.c.l.b16 %v576
      %v605 = vpack.c.b16 %v598, %v597
      %v606 = vpack.c.b16 %v600, %v599
      %v607 = vpack.c.b16 %v602, %v601
      %v608 = vpack.c.b16 %v604, %v603
      %v617 = vunpack.c.l.b16 %v577
      %v618 = vunpack.c.l.b16 %v578
      %v619 = vunpack.c.l.b16 %v579
      %v620 = vunpack.c.l.b16 %v580
      %v621 = vunpack.c.l.b16 %v581
      %v622 = vunpack.c.l.b16 %v582
      %v623 = vunpack.c.l.b16 %v583
      %v624 = vunpack.c.l.b16 %v584
      %v625 = vpack.c.b16 %v618, %v617
      %v626 = vpack.c.b16 %v620, %v619
      %v627 = vpack.c.b16 %v622, %v621
      %v628 = vpack.c.b16 %v624, %v623
      %vm633 = vcmask 523264
      %v635 = vsel %vm633, %v605, 0
      %v638 = vsel %vm633, %v606, 0
      %v641 = vsel %vm633, %v607, 0
      %v644 = vsel %vm633, %v608, 0
      %646 = vmatpush.bf16.msra.mxu0 0
      %647 = vmatpush.bf16.msra.mxu0 0
      %648 = vmatpush.bf16.msra.mxu0 0
      %649 = vmatpush.bf16.msra.mxu0 0
      %650 = vmatpush.bf16.msra.mxu0 %v628
      %651 = vmatpush.bf16.msra.mxu0 %v627
      %652 = vmatpush.bf16.msra.mxu0 %v626
      %653 = vmatpush.bf16.msra.mxu0 %v625
      %654 = vmatmul.bf16.gmra.mxu0 %v635
      %v655 = vpop.f32.mrf.mxu0
      %v656 = vadd.f32 %v587, %v655
      %v657 = vpop.f32.mrf.mxu0
      %v658 = vadd.f32 %v587, %v657
      %659 = vmatmul.bf16.gmra.mxu0 %v638
      %v660 = vpop.f32.mrf.mxu0
      %v661 = vadd.f32 %v587, %v660
      %v662 = vpop.f32.mrf.mxu0
      %v663 = vadd.f32 %v587, %v662
      %664 = vmatmul.bf16.gmra.mxu0 %v641
      %v665 = vpop.f32.mrf.mxu0
      %v666 = vadd.f32 %v587, %v665
      %v667 = vpop.f32.mrf.mxu0
      %v668 = vadd.f32 %v587, %v667
      %669 = vmatmul.bf16.gmra.mxu0 %v644
      %v670 = vpop.f32.mrf.mxu0
      %v671 = vadd.f32 %v587, %v670
      %v672 = vpop.f32.mrf.mxu0
      %v673 = vadd.f32 %v587, %v672
      %674 = vdwg.mxu0
      %v675 = vld [vmem:[%s530] sm:$0xff]
      %v676 = vld [vmem:[%s530 + $0x8] sm:$0xff]
      %v677 = vld [vmem:[%s530 + $0x10] sm:$0xff]
      %v678 = vld [vmem:[%s530 + $0x18] sm:$0xff]
      %v679 = vld [vmem:[%s530 + $0x20] sm:$0xff]
      %v680 = vld [vmem:[%s530 + $0x28] sm:$0xff]
      %v681 = vld [vmem:[%s530 + $0x30] sm:$0xff]
      %v682 = vld [vmem:[%s530 + $0x38] sm:$0xff]
      %v683 = vadd.f32 %v675, %v656
      %v684 = vadd.f32 %v676, %v658
      %v685 = vadd.f32 %v677, %v661
      %v686 = vadd.f32 %v678, %v663
      %v687 = vadd.f32 %v679, %v666
      %v688 = vadd.f32 %v680, %v668
      %v689 = vadd.f32 %v681, %v671
      %v690 = vadd.f32 %v682, %v673
      %v691 = vpack.c.bf16 %v684, %v683
      %v692 = vpack.c.bf16 %v686, %v685
      %v693 = vpack.c.bf16 %v688, %v687
      %v694 = vpack.c.bf16 %v690, %v689
      %v695 = vld [vmem:[%s8] sm:$0xf]
      %v696 = vld [vmem:[%s8 + $0x4] sm:$0xf]
      %v697 = vld [vmem:[%s8 + $0x8] sm:$0xf]
      %v698 = vld [vmem:[%s8 + $0xc] sm:$0xf]
      %v699 = vld [vmem:[%s9] sm:$0x1]
      %v701 = vperm.slane %v699, 0
      %v707 = vunpack.c.l.b16 %v695
      %v708 = vunpack.c.l.b16 %v696
      %v709 = vunpack.c.l.b16 %v697
      %v710 = vunpack.c.l.b16 %v698
      %v711 = vpack.c.b16 %v708, %v707
      %v712 = vpack.c.b16 %v710, %v709
      %vm715 = vcmask 261120
      %v717 = vsel %vm715, %v691, 0
      %v720 = vsel %vm715, %v692, 0
      %v723 = vsel %vm715, %v693, 0
      %v726 = vsel %vm715, %v694, 0
      %728 = vmatpush.bf16.msra.mxu0 0
      %729 = vmatpush.bf16.msra.mxu0 0
      %730 = vmatpush.bf16.msra.mxu0 0
      %731 = vmatpush.bf16.msra.mxu0 0
      %732 = vmatpush.bf16.msra.mxu0 0
      %733 = vmatpush.bf16.msra.mxu0 0
      %734 = vmatpush.bf16.msra.mxu0 %v712
      %735 = vmatpush.bf16.msra.mxu0 %v711
      %736 = vmatmul.bf16.gmra.mxu0 %v717
      %v737 = vpop.f32.mrf.mxu0
      %v738 = vadd.f32 %v701, %v737
      %v739 = vpop.f32.mrf.mxu0
      %v740 = vadd.f32 %v701, %v739
      %741 = vmatmul.bf16.gmra.mxu0 %v720
      %v742 = vpop.f32.mrf.mxu0
      %v743 = vadd.f32 %v701, %v742
      %v744 = vpop.f32.mrf.mxu0
      %v745 = vadd.f32 %v701, %v744
      %746 = vmatmul.bf16.gmra.mxu0 %v723
      %v747 = vpop.f32.mrf.mxu0
      %v748 = vadd.f32 %v701, %v747
      %v749 = vpop.f32.mrf.mxu0
      %v750 = vadd.f32 %v701, %v749
      %751 = vmatmul.bf16.gmra.mxu0 %v726
      %v752 = vpop.f32.mrf.mxu0
      %v753 = vadd.f32 %v701, %v752
      %v754 = vpop.f32.mrf.mxu0
      %v755 = vadd.f32 %v701, %v754
      %756 = vdwg.mxu0
      %v757 = vld [vmem:[%s542] sm:$0xff]
      %v758 = vld [vmem:[%s542 + $0x8] sm:$0xff]
      %v759 = vld [vmem:[%s542 + $0x10] sm:$0xff]
      %v760 = vld [vmem:[%s542 + $0x18] sm:$0xff]
      %v761 = vld [vmem:[%s542 + $0x20] sm:$0xff]
      %v762 = vld [vmem:[%s542 + $0x28] sm:$0xff]
      %v763 = vld [vmem:[%s542 + $0x30] sm:$0xff]
      %v764 = vld [vmem:[%s542 + $0x38] sm:$0xff]
      %766 = vset.pattern.permute.xlu0 0
      %767 = vperm.xlu0 %766, %v757
      %v768 = vpop.permute.xlu0 %767
      %771 = vset.pattern.permute.xlu0 0
      %772 = vperm.xlu0 %771, %v758
      %v773 = vpop.permute.xlu0 %772
      %776 = vset.pattern.permute.xlu0 0
      %777 = vperm.xlu0 %776, %v759
      %v778 = vpop.permute.xlu0 %777
      %781 = vset.pattern.permute.xlu0 0
      %782 = vperm.xlu0 %781, %v760
      %v783 = vpop.permute.xlu0 %782
      %786 = vset.pattern.permute.xlu0 0
      %787 = vperm.xlu0 %786, %v761
      %v788 = vpop.permute.xlu0 %787
      %791 = vset.pattern.permute.xlu0 0
      %792 = vperm.xlu0 %791, %v762
      %v793 = vpop.permute.xlu0 %792
      %796 = vset.pattern.permute.xlu0 0
      %797 = vperm.xlu0 %796, %v763
      %v798 = vpop.permute.xlu0 %797
      %801 = vset.pattern.permute.xlu0 0
      %802 = vperm.xlu0 %801, %v764
      %v803 = vpop.permute.xlu0 %802
      %v805 = vmul.f32 %v768, %v738
      %v806 = vmul.f32 %v773, %v740
      %v807 = vmul.f32 %v778, %v743
      %v808 = vmul.f32 %v783, %v745
      %v809 = vmul.f32 %v788, %v748
      %v810 = vmul.f32 %v793, %v750
      %v811 = vmul.f32 %v798, %v753
      %v812 = vmul.f32 %v803, %v755
      %v813 = vadd.f32 %v805, 0.0
      %v814 = vadd.f32 %v806, 0.0
      %v815 = vadd.f32 %v807, 0.0
      %v816 = vadd.f32 %v808, 0.0
      %v817 = vadd.f32 %v809, 0.0
      %v818 = vadd.f32 %v810, 0.0
      %v819 = vadd.f32 %v811, 0.0
      %v820 = vadd.f32 %v812, 0.0
      %s821 = scalar_lea.vmem %s8, 16
      %v822 = vld [vmem:[%s821] sm:$0xf]
      %v823 = vld [vmem:[%s821 + $0x4] sm:$0xf]
      %v824 = vld [vmem:[%s821 + $0x8] sm:$0xf]
      %v825 = vld [vmem:[%s821 + $0xc] sm:$0xf]
      %s826 = scalar_lea.vmem %s9, 1
      %v827 = vld [vmem:[%s826] sm:$0x1]
      %v829 = vperm.slane %v827, 0
      %v835 = vunpack.c.l.b16 %v822
      %v836 = vunpack.c.l.b16 %v823
      %v837 = vunpack.c.l.b16 %v824
      %v838 = vunpack.c.l.b16 %v825
      %v839 = vpack.c.b16 %v836, %v835
      %v840 = vpack.c.b16 %v838, %v837
      %843 = vmatpush.bf16.msra.mxu0 0
      %844 = vmatpush.bf16.msra.mxu0 0
      %845 = vmatpush.bf16.msra.mxu0 0
      %846 = vmatpush.bf16.msra.mxu0 0
      %847 = vmatpush.bf16.msra.mxu0 0
      %848 = vmatpush.bf16.msra.mxu0 0
      %849 = vmatpush.bf16.msra.mxu0 %v840
      %850 = vmatpush.bf16.msra.mxu0 %v839
      %851 = vmatmul.bf16.gmra.mxu0 %v717
      %v852 = vpop.f32.mrf.mxu0
      %v853 = vadd.f32 %v829, %v852
      %v854 = vpop.f32.mrf.mxu0
      %v855 = vadd.f32 %v829, %v854
      %856 = vmatmul.bf16.gmra.mxu0 %v720
      %v857 = vpop.f32.mrf.mxu0
      %v858 = vadd.f32 %v829, %v857
      %v859 = vpop.f32.mrf.mxu0
      %v860 = vadd.f32 %v829, %v859
      %861 = vmatmul.bf16.gmra.mxu0 %v723
      %v862 = vpop.f32.mrf.mxu0
      %v863 = vadd.f32 %v829, %v862
      %v864 = vpop.f32.mrf.mxu0
      %v865 = vadd.f32 %v829, %v864
      %866 = vmatmul.bf16.gmra.mxu0 %v726
      %v867 = vpop.f32.mrf.mxu0
      %v868 = vadd.f32 %v829, %v867
      %v869 = vpop.f32.mrf.mxu0
      %v870 = vadd.f32 %v829, %v869
      %871 = vdwg.mxu0
      %872 = vset.pattern.permute.xlu0 1
      %873 = vperm.xlu0 %872, %v757
      %v874 = vpop.permute.xlu0 %873
      %876 = vset.pattern.permute.xlu0 1
      %877 = vperm.xlu0 %876, %v758
      %v878 = vpop.permute.xlu0 %877
      %880 = vset.pattern.permute.xlu0 1
      %881 = vperm.xlu0 %880, %v759
      %v882 = vpop.permute.xlu0 %881
      %884 = vset.pattern.permute.xlu0 1
      %885 = vperm.xlu0 %884, %v760
      %v886 = vpop.permute.xlu0 %885
      %888 = vset.pattern.permute.xlu0 1
      %889 = vperm.xlu0 %888, %v761
      %v890 = vpop.permute.xlu0 %889
      %892 = vset.pattern.permute.xlu0 1
      %893 = vperm.xlu0 %892, %v762
      %v894 = vpop.permute.xlu0 %893
      %896 = vset.pattern.permute.xlu0 1
      %897 = vperm.xlu0 %896, %v763
      %v898 = vpop.permute.xlu0 %897
      %900 = vset.pattern.permute.xlu0 1
      %901 = vperm.xlu0 %900, %v764
      %v902 = vpop.permute.xlu0 %901
      %v904 = vmul.f32 %v874, %v853
      %v905 = vmul.f32 %v878, %v855
      %v906 = vmul.f32 %v882, %v858
      %v907 = vmul.f32 %v886, %v860
      %v908 = vmul.f32 %v890, %v863
      %v909 = vmul.f32 %v894, %v865
      %v910 = vmul.f32 %v898, %v868
      %v911 = vmul.f32 %v902, %v870
      %v912 = vadd.f32 %v813, %v904
      %v913 = vadd.f32 %v814, %v905
      %v914 = vadd.f32 %v815, %v906
      %v915 = vadd.f32 %v816, %v907
      %v916 = vadd.f32 %v817, %v908
      %v917 = vadd.f32 %v818, %v909
      %v918 = vadd.f32 %v819, %v910
      %v919 = vadd.f32 %v820, %v911
      %v920 = vld [vmem:[%s536] sm:$0xff]
      %v921 = vld [vmem:[%s536 + $0x8] sm:$0xff]
      %v922 = vld [vmem:[%s536 + $0x10] sm:$0xff]
      %v923 = vld [vmem:[%s536 + $0x18] sm:$0xff]
      %v924 = vld [vmem:[%s536 + $0x20] sm:$0xff]
      %v925 = vld [vmem:[%s536 + $0x28] sm:$0xff]
      %v926 = vld [vmem:[%s536 + $0x30] sm:$0xff]
      %v927 = vld [vmem:[%s536 + $0x38] sm:$0xff]
      %v928 = vld [vmem:[%s548] sm:$0xff]
      %v929 = vld [vmem:[%s548 + $0x8] sm:$0xff]
      %v930 = vld [vmem:[%s548 + $0x10] sm:$0xff]
      %v931 = vld [vmem:[%s548 + $0x18] sm:$0xff]
      %v932 = vld [vmem:[%s548 + $0x20] sm:$0xff]
      %v933 = vld [vmem:[%s548 + $0x28] sm:$0xff]
      %v934 = vld [vmem:[%s548 + $0x30] sm:$0xff]
      %v935 = vld [vmem:[%s548 + $0x38] sm:$0xff]
      %v936 = vld [vmem:[%s10] sm:$0xff]
      %v937 = vld [vmem:[%s11] sm:$0xff]
      %vm938 = vcmask 64512
      %v940 = vsel %vm938, %v912, 0
      %v943 = vsel %vm938, %v913, 0
      %v946 = vsel %vm938, %v914, 0
      %v949 = vsel %vm938, %v915, 0
      %v952 = vsel %vm938, %v916, 0
      %v955 = vsel %vm938, %v917, 0
      %v958 = vsel %vm938, %v918, 0
      %v961 = vsel %vm938, %v919, 0
      %963 = vmatpush.msra.mxu0 0.0
      %964 = vmatpush.msra.mxu0 0.0
      %965 = vmatpush.msra.mxu0 0.0
      %966 = vmatpush.msra.mxu0 0.0
      %967 = vmatpush.msra.mxu0 0.0
      %968 = vmatpush.msra.mxu0 0.0
      %969 = vmatpush.msra.mxu0 0.0
      %970 = vmatpush.msra.mxu0 0.0
      %971 = vmatpush.msra.mxu0 0.0
      %972 = vmatpush.msra.mxu0 0.0
      %973 = vmatpush.msra.mxu0 0.0
      %974 = vmatpush.msra.mxu0 0.0
      %975 = vmatpush.msra.mxu0 0.0
      %976 = vmatpush.msra.mxu0 0.0
      %977 = vmatpush.msra.mxu0 0.0
      %978 = vmatpush.msra.mxu0 %v936
      %979 = vmatmul.f32.gmra.mxu0 %v940
      %v980 = vpop.f32.mrf.mxu0
      %v981 = vadd.f32 0.0, %v980
      %982 = vmatmul.f32.gmra.mxu0 %v943
      %v983 = vpop.f32.mrf.mxu0
      %v984 = vadd.f32 0.0, %v983
      %985 = vmatmul.f32.gmra.mxu0 %v946
      %v986 = vpop.f32.mrf.mxu0
      %v987 = vadd.f32 0.0, %v986
      %988 = vmatmul.f32.gmra.mxu0 %v949
      %v989 = vpop.f32.mrf.mxu0
      %v990 = vadd.f32 0.0, %v989
      %991 = vmatmul.f32.gmra.mxu0 %v952
      %v992 = vpop.f32.mrf.mxu0
      %v993 = vadd.f32 0.0, %v992
      %994 = vmatmul.f32.gmra.mxu0 %v955
      %v995 = vpop.f32.mrf.mxu0
      %v996 = vadd.f32 0.0, %v995
      %997 = vmatmul.f32.gmra.mxu0 %v958
      %v998 = vpop.f32.mrf.mxu0
      %v999 = vadd.f32 0.0, %v998
      %1000 = vmatmul.f32.gmra.mxu0 %v961
      %v1001 = vpop.f32.mrf.mxu0
      %v1002 = vadd.f32 0.0, %v1001
      %1003 = vdwg.mxu0
      %1005 = vset.pattern.permute.xlu0 0
      %1006 = vperm.xlu0 %1005, %v928
      %v1007 = vpop.permute.xlu0 %1006
      %1010 = vset.pattern.permute.xlu0 0
      %1011 = vperm.xlu0 %1010, %v929
      %v1012 = vpop.permute.xlu0 %1011
      %1015 = vset.pattern.permute.xlu0 0
      %1016 = vperm.xlu0 %1015, %v930
      %v1017 = vpop.permute.xlu0 %1016
      %1020 = vset.pattern.permute.xlu0 0
      %1021 = vperm.xlu0 %1020, %v931
      %v1022 = vpop.permute.xlu0 %1021
      %1025 = vset.pattern.permute.xlu0 0
      %1026 = vperm.xlu0 %1025, %v932
      %v1027 = vpop.permute.xlu0 %1026
      %1030 = vset.pattern.permute.xlu0 0
      %1031 = vperm.xlu0 %1030, %v933
      %v1032 = vpop.permute.xlu0 %1031
      %1035 = vset.pattern.permute.xlu0 0
      %1036 = vperm.xlu0 %1035, %v934
      %v1037 = vpop.permute.xlu0 %1036
      %1040 = vset.pattern.permute.xlu0 0
      %1041 = vperm.xlu0 %1040, %v935
      %v1042 = vpop.permute.xlu0 %1041
      %v1044 = vmul.f32 %v1007, %v981
      %v1045 = vmul.f32 %v1012, %v984
      %v1046 = vmul.f32 %v1017, %v987
      %v1047 = vmul.f32 %v1022, %v990
      %v1048 = vmul.f32 %v1027, %v993
      %v1049 = vmul.f32 %v1032, %v996
      %v1050 = vmul.f32 %v1037, %v999
      %v1051 = vmul.f32 %v1042, %v1002
      %v1052 = vadd.f32 %v1044, 0.0
      %v1053 = vadd.f32 %v1045, 0.0
      %v1054 = vadd.f32 %v1046, 0.0
      %v1055 = vadd.f32 %v1047, 0.0
      %v1056 = vadd.f32 %v1048, 0.0
      %v1057 = vadd.f32 %v1049, 0.0
      %v1058 = vadd.f32 %v1050, 0.0
      %v1059 = vadd.f32 %v1051, 0.0
      %1060 = vrot.lane.b32.xlu0 %v912, 96
      %v1061 = vpop.permute.xlu0 %1060
      %1062 = vrot.lane.b32.xlu0 %v913, 96
      %v1063 = vpop.permute.xlu0 %1062
      %1064 = vrot.lane.b32.xlu0 %v914, 96
      %v1065 = vpop.permute.xlu0 %1064
      %1066 = vrot.lane.b32.xlu0 %v915, 96
      %v1067 = vpop.permute.xlu0 %1066
      %1068 = vrot.lane.b32.xlu0 %v916, 96
      %v1069 = vpop.permute.xlu0 %1068
      %1070 = vrot.lane.b32.xlu0 %v917, 96
      %v1071 = vpop.permute.xlu0 %1070
      %1072 = vrot.lane.b32.xlu0 %v918, 96
      %v1073 = vpop.permute.xlu0 %1072
      %1074 = vrot.lane.b32.xlu0 %v919, 96
      %v1075 = vpop.permute.xlu0 %1074
      %v1076 = vsel %vm938, %v1061, 0
      %v1078 = vsel %vm938, %v1063, 0
      %v1080 = vsel %vm938, %v1065, 0
      %v1082 = vsel %vm938, %v1067, 0
      %v1084 = vsel %vm938, %v1069, 0
      %v1086 = vsel %vm938, %v1071, 0
      %v1088 = vsel %vm938, %v1073, 0
      %v1090 = vsel %vm938, %v1075, 0
      %1092 = vmatpush.msra.mxu0 0.0
      %1093 = vmatpush.msra.mxu0 0.0
      %1094 = vmatpush.msra.mxu0 0.0
      %1095 = vmatpush.msra.mxu0 0.0
      %1096 = vmatpush.msra.mxu0 0.0
      %1097 = vmatpush.msra.mxu0 0.0
      %1098 = vmatpush.msra.mxu0 0.0
      %1099 = vmatpush.msra.mxu0 0.0
      %1100 = vmatpush.msra.mxu0 0.0
      %1101 = vmatpush.msra.mxu0 0.0
      %1102 = vmatpush.msra.mxu0 0.0
      %1103 = vmatpush.msra.mxu0 0.0
      %1104 = vmatpush.msra.mxu0 0.0
      %1105 = vmatpush.msra.mxu0 0.0
      %1106 = vmatpush.msra.mxu0 0.0
      %1107 = vmatpush.msra.mxu0 %v937
      %1108 = vmatmul.f32.gmra.mxu0 %v1076
      %v1109 = vpop.f32.mrf.mxu0
      %v1110 = vadd.f32 0.0, %v1109
      %1111 = vmatmul.f32.gmra.mxu0 %v1078
      %v1112 = vpop.f32.mrf.mxu0
      %v1113 = vadd.f32 0.0, %v1112
      %1114 = vmatmul.f32.gmra.mxu0 %v1080
      %v1115 = vpop.f32.mrf.mxu0
      %v1116 = vadd.f32 0.0, %v1115
      %1117 = vmatmul.f32.gmra.mxu0 %v1082
      %v1118 = vpop.f32.mrf.mxu0
      %v1119 = vadd.f32 0.0, %v1118
      %1120 = vmatmul.f32.gmra.mxu0 %v1084
      %v1121 = vpop.f32.mrf.mxu0
      %v1122 = vadd.f32 0.0, %v1121
      %1123 = vmatmul.f32.gmra.mxu0 %v1086
      %v1124 = vpop.f32.mrf.mxu0
      %v1125 = vadd.f32 0.0, %v1124
      %1126 = vmatmul.f32.gmra.mxu0 %v1088
      %v1127 = vpop.f32.mrf.mxu0
      %v1128 = vadd.f32 0.0, %v1127
      %1129 = vmatmul.f32.gmra.mxu0 %v1090
      %v1130 = vpop.f32.mrf.mxu0
      %v1131 = vadd.f32 0.0, %v1130
      %1132 = vdwg.mxu0
      %v1133 = vmul.f32 %v1007, %v1110
      %v1134 = vmul.f32 %v1012, %v1113
      %v1135 = vmul.f32 %v1017, %v1116
      %v1136 = vmul.f32 %v1022, %v1119
      %v1137 = vmul.f32 %v1027, %v1122
      %v1138 = vmul.f32 %v1032, %v1125
      %v1139 = vmul.f32 %v1037, %v1128
      %v1140 = vmul.f32 %v1042, %v1131
      %v1141 = vadd.f32 %v1133, 0.0
      %v1142 = vadd.f32 %v1134, 0.0
      %v1143 = vadd.f32 %v1135, 0.0
      %v1144 = vadd.f32 %v1136, 0.0
      %v1145 = vadd.f32 %v1137, 0.0
      %v1146 = vadd.f32 %v1138, 0.0
      %v1147 = vadd.f32 %v1139, 0.0
      %v1148 = vadd.f32 %v1140, 0.0
      %s1149 = scalar_lea.vmem %s10, 32
      %v1150 = vld [vmem:[%s1149] sm:$0xff]
      %s1151 = scalar_lea.vmem %s11, 32
      %v1152 = vld [vmem:[%s1151] sm:$0xff]
      %1153 = vmatpush.msra.mxu0 0.0
      %1154 = vmatpush.msra.mxu0 0.0
      %1155 = vmatpush.msra.mxu0 0.0
      %1156 = vmatpush.msra.mxu0 0.0
      %1157 = vmatpush.msra.mxu0 0.0
      %1158 = vmatpush.msra.mxu0 0.0
      %1159 = vmatpush.msra.mxu0 0.0
      %1160 = vmatpush.msra.mxu0 0.0
      %1161 = vmatpush.msra.mxu0 0.0
      %1162 = vmatpush.msra.mxu0 0.0
      %1163 = vmatpush.msra.mxu0 0.0
      %1164 = vmatpush.msra.mxu0 0.0
      %1165 = vmatpush.msra.mxu0 0.0
      %1166 = vmatpush.msra.mxu0 0.0
      %1167 = vmatpush.msra.mxu0 0.0
      %1168 = vmatpush.msra.mxu0 %v1150
      %1169 = vmatmul.f32.gmra.mxu0 %v940
      %v1170 = vpop.f32.mrf.mxu0
      %v1171 = vadd.f32 0.0, %v1170
      %1172 = vmatmul.f32.gmra.mxu0 %v943
      %v1173 = vpop.f32.mrf.mxu0
      %v1174 = vadd.f32 0.0, %v1173
      %1175 = vmatmul.f32.gmra.mxu0 %v946
      %v1176 = vpop.f32.mrf.mxu0
      %v1177 = vadd.f32 0.0, %v1176
      %1178 = vmatmul.f32.gmra.mxu0 %v949
      %v1179 = vpop.f32.mrf.mxu0
      %v1180 = vadd.f32 0.0, %v1179
      %1181 = vmatmul.f32.gmra.mxu0 %v952
      %v1182 = vpop.f32.mrf.mxu0
      %v1183 = vadd.f32 0.0, %v1182
      %1184 = vmatmul.f32.gmra.mxu0 %v955
      %v1185 = vpop.f32.mrf.mxu0
      %v1186 = vadd.f32 0.0, %v1185
      %1187 = vmatmul.f32.gmra.mxu0 %v958
      %v1188 = vpop.f32.mrf.mxu0
      %v1189 = vadd.f32 0.0, %v1188
      %1190 = vmatmul.f32.gmra.mxu0 %v961
      %v1191 = vpop.f32.mrf.mxu0
      %v1192 = vadd.f32 0.0, %v1191
      %1193 = vdwg.mxu0
      %1194 = vset.pattern.permute.xlu0 1
      %1195 = vperm.xlu0 %1194, %v928
      %v1196 = vpop.permute.xlu0 %1195
      %1198 = vset.pattern.permute.xlu0 1
      %1199 = vperm.xlu0 %1198, %v929
      %v1200 = vpop.permute.xlu0 %1199
      %1202 = vset.pattern.permute.xlu0 1
      %1203 = vperm.xlu0 %1202, %v930
      %v1204 = vpop.permute.xlu0 %1203
      %1206 = vset.pattern.permute.xlu0 1
      %1207 = vperm.xlu0 %1206, %v931
      %v1208 = vpop.permute.xlu0 %1207
      %1210 = vset.pattern.permute.xlu0 1
      %1211 = vperm.xlu0 %1210, %v932
      %v1212 = vpop.permute.xlu0 %1211
      %1214 = vset.pattern.permute.xlu0 1
      %1215 = vperm.xlu0 %1214, %v933
      %v1216 = vpop.permute.xlu0 %1215
      %1218 = vset.pattern.permute.xlu0 1
      %1219 = vperm.xlu0 %1218, %v934
      %v1220 = vpop.permute.xlu0 %1219
      %1222 = vset.pattern.permute.xlu0 1
      %1223 = vperm.xlu0 %1222, %v935
      %v1224 = vpop.permute.xlu0 %1223
      %v1226 = vmul.f32 %v1196, %v1171
      %v1227 = vmul.f32 %v1200, %v1174
      %v1228 = vmul.f32 %v1204, %v1177
      %v1229 = vmul.f32 %v1208, %v1180
      %v1230 = vmul.f32 %v1212, %v1183
      %v1231 = vmul.f32 %v1216, %v1186
      %v1232 = vmul.f32 %v1220, %v1189
      %v1233 = vmul.f32 %v1224, %v1192
      %v1234 = vadd.f32 %v1052, %v1226
      %v1235 = vadd.f32 %v1053, %v1227
      %v1236 = vadd.f32 %v1054, %v1228
      %v1237 = vadd.f32 %v1055, %v1229
      %v1238 = vadd.f32 %v1056, %v1230
      %v1239 = vadd.f32 %v1057, %v1231
      %v1240 = vadd.f32 %v1058, %v1232
      %v1241 = vadd.f32 %v1059, %v1233
      %1242 = vmatpush.msra.mxu0 0.0
      %1243 = vmatpush.msra.mxu0 0.0
      %1244 = vmatpush.msra.mxu0 0.0
      %1245 = vmatpush.msra.mxu0 0.0
      %1246 = vmatpush.msra.mxu0 0.0
      %1247 = vmatpush.msra.mxu0 0.0
      %1248 = vmatpush.msra.mxu0 0.0
      %1249 = vmatpush.msra.mxu0 0.0
      %1250 = vmatpush.msra.mxu0 0.0
      %1251 = vmatpush.msra.mxu0 0.0
      %1252 = vmatpush.msra.mxu0 0.0
      %1253 = vmatpush.msra.mxu0 0.0
      %1254 = vmatpush.msra.mxu0 0.0
      %1255 = vmatpush.msra.mxu0 0.0
      %1256 = vmatpush.msra.mxu0 0.0
      %1257 = vmatpush.msra.mxu0 %v1152
      %1258 = vmatmul.f32.gmra.mxu0 %v1076
      %v1259 = vpop.f32.mrf.mxu0
      %v1260 = vadd.f32 0.0, %v1259
      %1261 = vmatmul.f32.gmra.mxu0 %v1078
      %v1262 = vpop.f32.mrf.mxu0
      %v1263 = vadd.f32 0.0, %v1262
      %1264 = vmatmul.f32.gmra.mxu0 %v1080
      %v1265 = vpop.f32.mrf.mxu0
      %v1266 = vadd.f32 0.0, %v1265
      %1267 = vmatmul.f32.gmra.mxu0 %v1082
      %v1268 = vpop.f32.mrf.mxu0
      %v1269 = vadd.f32 0.0, %v1268
      %1270 = vmatmul.f32.gmra.mxu0 %v1084
      %v1271 = vpop.f32.mrf.mxu0
      %v1272 = vadd.f32 0.0, %v1271
      %1273 = vmatmul.f32.gmra.mxu0 %v1086
      %v1274 = vpop.f32.mrf.mxu0
      %v1275 = vadd.f32 0.0, %v1274
      %1276 = vmatmul.f32.gmra.mxu0 %v1088
      %v1277 = vpop.f32.mrf.mxu0
      %v1278 = vadd.f32 0.0, %v1277
      %1279 = vmatmul.f32.gmra.mxu0 %v1090
      %v1280 = vpop.f32.mrf.mxu0
      %v1281 = vadd.f32 0.0, %v1280
      %1282 = vdwg.mxu0
      %v1283 = vmul.f32 %v1196, %v1260
      %v1284 = vmul.f32 %v1200, %v1263
      %v1285 = vmul.f32 %v1204, %v1266
      %v1286 = vmul.f32 %v1208, %v1269
      %v1287 = vmul.f32 %v1212, %v1272
      %v1288 = vmul.f32 %v1216, %v1275
      %v1289 = vmul.f32 %v1220, %v1278
      %v1290 = vmul.f32 %v1224, %v1281
      %v1291 = vadd.f32 %v1141, %v1283
      %v1292 = vadd.f32 %v1142, %v1284
      %v1293 = vadd.f32 %v1143, %v1285
      %v1294 = vadd.f32 %v1144, %v1286
      %v1295 = vadd.f32 %v1145, %v1287
      %v1296 = vadd.f32 %v1146, %v1288
      %v1297 = vadd.f32 %v1147, %v1289
      %v1298 = vadd.f32 %v1148, %v1290
      %v1299 = vmul.f32 %v920, %v1234
      %v1300 = vmul.f32 %v921, %v1235
      %v1301 = vmul.f32 %v922, %v1236
      %v1302 = vmul.f32 %v923, %v1237
      %v1303 = vmul.f32 %v924, %v1238
      %v1304 = vmul.f32 %v925, %v1239
      %v1305 = vmul.f32 %v926, %v1240
      %v1306 = vmul.f32 %v927, %v1241
      %v1307 = vsel %vm938, %v1299, 0.0
      %1308 = vadd.xlane.f32.xlu0 %v1307
      %v1309 = vpop.xlane.xlu0 %1308
      %v1310 = vsel %vm938, %v1300, 0.0
      %1311 = vadd.xlane.f32.xlu0 %v1310
      %v1312 = vpop.xlane.xlu0 %1311
      %v1313 = vsel %vm938, %v1301, 0.0
      %1314 = vadd.xlane.f32.xlu0 %v1313
      %v1315 = vpop.xlane.xlu0 %1314
      %v1316 = vsel %vm938, %v1302, 0.0
      %1317 = vadd.xlane.f32.xlu0 %v1316
      %v1318 = vpop.xlane.xlu0 %1317
      %v1319 = vsel %vm938, %v1303, 0.0
      %1320 = vadd.xlane.f32.xlu0 %v1319
      %v1321 = vpop.xlane.xlu0 %1320
      %v1322 = vsel %vm938, %v1304, 0.0
      %1323 = vadd.xlane.f32.xlu0 %v1322
      %v1324 = vpop.xlane.xlu0 %1323
      %v1325 = vsel %vm938, %v1305, 0.0
      %1326 = vadd.xlane.f32.xlu0 %v1325
      %v1327 = vpop.xlane.xlu0 %1326
      %v1328 = vsel %vm938, %v1306, 0.0
      %1329 = vadd.xlane.f32.xlu0 %v1328
      %v1330 = vpop.xlane.xlu0 %1329
      %s1331 = scalar_lea.vmem %s10, 8
      %v1332 = vld [vmem:[%s1331] sm:$0xff]
      %s1333 = scalar_lea.vmem %s11, 8
      %v1334 = vld [vmem:[%s1333] sm:$0xff]
      %1335 = vrot.lane.b32.xlu0 %v912, 120
      %v1336 = vpop.permute.xlu0 %1335
      %1337 = vrot.lane.b32.xlu0 %v913, 120
      %v1338 = vpop.permute.xlu0 %1337
      %1339 = vrot.lane.b32.xlu0 %v914, 120
      %v1340 = vpop.permute.xlu0 %1339
      %1341 = vrot.lane.b32.xlu0 %v915, 120
      %v1342 = vpop.permute.xlu0 %1341
      %1343 = vrot.lane.b32.xlu0 %v916, 120
      %v1344 = vpop.permute.xlu0 %1343
      %1345 = vrot.lane.b32.xlu0 %v917, 120
      %v1346 = vpop.permute.xlu0 %1345
      %1347 = vrot.lane.b32.xlu0 %v918, 120
      %v1348 = vpop.permute.xlu0 %1347
      %1349 = vrot.lane.b32.xlu0 %v919, 120
      %v1350 = vpop.permute.xlu0 %1349
      %v1351 = vsel %vm938, %v1336, 0
      %v1353 = vsel %vm938, %v1338, 0
      %v1355 = vsel %vm938, %v1340, 0
      %v1357 = vsel %vm938, %v1342, 0
      %v1359 = vsel %vm938, %v1344, 0
      %v1361 = vsel %vm938, %v1346, 0
      %v1363 = vsel %vm938, %v1348, 0
      %v1365 = vsel %vm938, %v1350, 0
      %1367 = vmatpush.msra.mxu0 0.0
      %1368 = vmatpush.msra.mxu0 0.0
      %1369 = vmatpush.msra.mxu0 0.0
      %1370 = vmatpush.msra.mxu0 0.0
      %1371 = vmatpush.msra.mxu0 0.0
      %1372 = vmatpush.msra.mxu0 0.0
      %1373 = vmatpush.msra.mxu0 0.0
      %1374 = vmatpush.msra.mxu0 0.0
      %1375 = vmatpush.msra.mxu0 0.0
      %1376 = vmatpush.msra.mxu0 0.0
      %1377 = vmatpush.msra.mxu0 0.0
      %1378 = vmatpush.msra.mxu0 0.0
      %1379 = vmatpush.msra.mxu0 0.0
      %1380 = vmatpush.msra.mxu0 0.0
      %1381 = vmatpush.msra.mxu0 0.0
      %1382 = vmatpush.msra.mxu0 %v1332
      %1383 = vmatmul.f32.gmra.mxu0 %v1351
      %v1384 = vpop.f32.mrf.mxu0
      %v1385 = vadd.f32 0.0, %v1384
      %1386 = vmatmul.f32.gmra.mxu0 %v1353
      %v1387 = vpop.f32.mrf.mxu0
      %v1388 = vadd.f32 0.0, %v1387
      %1389 = vmatmul.f32.gmra.mxu0 %v1355
      %v1390 = vpop.f32.mrf.mxu0
      %v1391 = vadd.f32 0.0, %v1390
      %1392 = vmatmul.f32.gmra.mxu0 %v1357
      %v1393 = vpop.f32.mrf.mxu0
      %v1394 = vadd.f32 0.0, %v1393
      %1395 = vmatmul.f32.gmra.mxu0 %v1359
      %v1396 = vpop.f32.mrf.mxu0
      %v1397 = vadd.f32 0.0, %v1396
      %1398 = vmatmul.f32.gmra.mxu0 %v1361
      %v1399 = vpop.f32.mrf.mxu0
      %v1400 = vadd.f32 0.0, %v1399
      %1401 = vmatmul.f32.gmra.mxu0 %v1363
      %v1402 = vpop.f32.mrf.mxu0
      %v1403 = vadd.f32 0.0, %v1402
      %1404 = vmatmul.f32.gmra.mxu0 %v1365
      %v1405 = vpop.f32.mrf.mxu0
      %v1406 = vadd.f32 0.0, %v1405
      %1407 = vdwg.mxu0
      %v1408 = vmul.f32 %v1007, %v1385
      %v1409 = vmul.f32 %v1012, %v1388
      %v1410 = vmul.f32 %v1017, %v1391
      %v1411 = vmul.f32 %v1022, %v1394
      %v1412 = vmul.f32 %v1027, %v1397
      %v1413 = vmul.f32 %v1032, %v1400
      %v1414 = vmul.f32 %v1037, %v1403
      %v1415 = vmul.f32 %v1042, %v1406
      %v1416 = vadd.f32 %v1408, 0.0
      %v1417 = vadd.f32 %v1409, 0.0
      %v1418 = vadd.f32 %v1410, 0.0
      %v1419 = vadd.f32 %v1411, 0.0
      %v1420 = vadd.f32 %v1412, 0.0
      %v1421 = vadd.f32 %v1413, 0.0
      %v1422 = vadd.f32 %v1414, 0.0
      %v1423 = vadd.f32 %v1415, 0.0
      %1424 = vrot.lane.b32.xlu0 %v912, 88
      %v1425 = vpop.permute.xlu0 %1424
      %1426 = vrot.lane.b32.xlu0 %v913, 88
      %v1427 = vpop.permute.xlu0 %1426
      %1428 = vrot.lane.b32.xlu0 %v914, 88
      %v1429 = vpop.permute.xlu0 %1428
      %1430 = vrot.lane.b32.xlu0 %v915, 88
      %v1431 = vpop.permute.xlu0 %1430
      %1432 = vrot.lane.b32.xlu0 %v916, 88
      %v1433 = vpop.permute.xlu0 %1432
      %1434 = vrot.lane.b32.xlu0 %v917, 88
      %v1435 = vpop.permute.xlu0 %1434
      %1436 = vrot.lane.b32.xlu0 %v918, 88
      %v1437 = vpop.permute.xlu0 %1436
      %1438 = vrot.lane.b32.xlu0 %v919, 88
      %v1439 = vpop.permute.xlu0 %1438
      %v1440 = vsel %vm938, %v1425, 0
      %v1442 = vsel %vm938, %v1427, 0
      %v1444 = vsel %vm938, %v1429, 0
      %v1446 = vsel %vm938, %v1431, 0
      %v1448 = vsel %vm938, %v1433, 0
      %v1450 = vsel %vm938, %v1435, 0
      %v1452 = vsel %vm938, %v1437, 0
      %v1454 = vsel %vm938, %v1439, 0
      %1456 = vmatpush.msra.mxu0 0.0
      %1457 = vmatpush.msra.mxu0 0.0
      %1458 = vmatpush.msra.mxu0 0.0
      %1459 = vmatpush.msra.mxu0 0.0
      %1460 = vmatpush.msra.mxu0 0.0
      %1461 = vmatpush.msra.mxu0 0.0
      %1462 = vmatpush.msra.mxu0 0.0
      %1463 = vmatpush.msra.mxu0 0.0
      %1464 = vmatpush.msra.mxu0 0.0
      %1465 = vmatpush.msra.mxu0 0.0
      %1466 = vmatpush.msra.mxu0 0.0
      %1467 = vmatpush.msra.mxu0 0.0
      %1468 = vmatpush.msra.mxu0 0.0
      %1469 = vmatpush.msra.mxu0 0.0
      %1470 = vmatpush.msra.mxu0 0.0
      %1471 = vmatpush.msra.mxu0 %v1334
      %1472 = vmatmul.f32.gmra.mxu0 %v1440
      %v1473 = vpop.f32.mrf.mxu0
      %v1474 = vadd.f32 0.0, %v1473
      %1475 = vmatmul.f32.gmra.mxu0 %v1442
      %v1476 = vpop.f32.mrf.mxu0
      %v1477 = vadd.f32 0.0, %v1476
      %1478 = vmatmul.f32.gmra.mxu0 %v1444
      %v1479 = vpop.f32.mrf.mxu0
      %v1480 = vadd.f32 0.0, %v1479
      %1481 = vmatmul.f32.gmra.mxu0 %v1446
      %v1482 = vpop.f32.mrf.mxu0
      %v1483 = vadd.f32 0.0, %v1482
      %1484 = vmatmul.f32.gmra.mxu0 %v1448
      %v1485 = vpop.f32.mrf.mxu0
      %v1486 = vadd.f32 0.0, %v1485
      %1487 = vmatmul.f32.gmra.mxu0 %v1450
      %v1488 = vpop.f32.mrf.mxu0
      %v1489 = vadd.f32 0.0, %v1488
      %1490 = vmatmul.f32.gmra.mxu0 %v1452
      %v1491 = vpop.f32.mrf.mxu0
      %v1492 = vadd.f32 0.0, %v1491
      %1493 = vmatmul.f32.gmra.mxu0 %v1454
      %v1494 = vpop.f32.mrf.mxu0
      %v1495 = vadd.f32 0.0, %v1494
      %1496 = vdwg.mxu0
      %v1497 = vmul.f32 %v1007, %v1474
      %v1498 = vmul.f32 %v1012, %v1477
      %v1499 = vmul.f32 %v1017, %v1480
      %v1500 = vmul.f32 %v1022, %v1483
      %v1501 = vmul.f32 %v1027, %v1486
      %v1502 = vmul.f32 %v1032, %v1489
      %v1503 = vmul.f32 %v1037, %v1492
      %v1504 = vmul.f32 %v1042, %v1495
      %v1505 = vadd.f32 %v1497, 0.0
      %v1506 = vadd.f32 %v1498, 0.0
      %v1507 = vadd.f32 %v1499, 0.0
      %v1508 = vadd.f32 %v1500, 0.0
      %v1509 = vadd.f32 %v1501, 0.0
      %v1510 = vadd.f32 %v1502, 0.0
      %v1511 = vadd.f32 %v1503, 0.0
      %v1512 = vadd.f32 %v1504, 0.0
      %s1513 = scalar_lea.vmem %s10, 40
      %v1514 = vld [vmem:[%s1513] sm:$0xff]
      %s1515 = scalar_lea.vmem %s11, 40
      %v1516 = vld [vmem:[%s1515] sm:$0xff]
      %1517 = vmatpush.msra.mxu0 0.0
      %1518 = vmatpush.msra.mxu0 0.0
      %1519 = vmatpush.msra.mxu0 0.0
      %1520 = vmatpush.msra.mxu0 0.0
      %1521 = vmatpush.msra.mxu0 0.0
      %1522 = vmatpush.msra.mxu0 0.0
      %1523 = vmatpush.msra.mxu0 0.0
      %1524 = vmatpush.msra.mxu0 0.0
      %1525 = vmatpush.msra.mxu0 0.0
      %1526 = vmatpush.msra.mxu0 0.0
      %1527 = vmatpush.msra.mxu0 0.0
      %1528 = vmatpush.msra.mxu0 0.0
      %1529 = vmatpush.msra.mxu0 0.0
      %1530 = vmatpush.msra.mxu0 0.0
      %1531 = vmatpush.msra.mxu0 0.0
      %1532 = vmatpush.msra.mxu0 %v1514
      %1533 = vmatmul.f32.gmra.mxu0 %v1351
      %v1534 = vpop.f32.mrf.mxu0
      %v1535 = vadd.f32 0.0, %v1534
      %1536 = vmatmul.f32.gmra.mxu0 %v1353
      %v1537 = vpop.f32.mrf.mxu0
      %v1538 = vadd.f32 0.0, %v1537
      %1539 = vmatmul.f32.gmra.mxu0 %v1355
      %v1540 = vpop.f32.mrf.mxu0
      %v1541 = vadd.f32 0.0, %v1540
      %1542 = vmatmul.f32.gmra.mxu0 %v1357
      %v1543 = vpop.f32.mrf.mxu0
      %v1544 = vadd.f32 0.0, %v1543
      %1545 = vmatmul.f32.gmra.mxu0 %v1359
      %v1546 = vpop.f32.mrf.mxu0
      %v1547 = vadd.f32 0.0, %v1546
      %1548 = vmatmul.f32.gmra.mxu0 %v1361
      %v1549 = vpop.f32.mrf.mxu0
      %v1550 = vadd.f32 0.0, %v1549
      %1551 = vmatmul.f32.gmra.mxu0 %v1363
      %v1552 = vpop.f32.mrf.mxu0
      %v1553 = vadd.f32 0.0, %v1552
      %1554 = vmatmul.f32.gmra.mxu0 %v1365
      %v1555 = vpop.f32.mrf.mxu0
      %v1556 = vadd.f32 0.0, %v1555
      %1557 = vdwg.mxu0
      %v1558 = vmul.f32 %v1196, %v1535
      %v1559 = vmul.f32 %v1200, %v1538
      %v1560 = vmul.f32 %v1204, %v1541
      %v1561 = vmul.f32 %v1208, %v1544
      %v1562 = vmul.f32 %v1212, %v1547
      %v1563 = vmul.f32 %v1216, %v1550
      %v1564 = vmul.f32 %v1220, %v1553
      %v1565 = vmul.f32 %v1224, %v1556
      %v1566 = vadd.f32 %v1416, %v1558
      %v1567 = vadd.f32 %v1417, %v1559
      %v1568 = vadd.f32 %v1418, %v1560
      %v1569 = vadd.f32 %v1419, %v1561
      %v1570 = vadd.f32 %v1420, %v1562
      %v1571 = vadd.f32 %v1421, %v1563
      %v1572 = vadd.f32 %v1422, %v1564
      %v1573 = vadd.f32 %v1423, %v1565
      %1574 = vmatpush.msra.mxu0 0.0
      %1575 = vmatpush.msra.mxu0 0.0
      %1576 = vmatpush.msra.mxu0 0.0
      %1577 = vmatpush.msra.mxu0 0.0
      %1578 = vmatpush.msra.mxu0 0.0
      %1579 = vmatpush.msra.mxu0 0.0
      %1580 = vmatpush.msra.mxu0 0.0
      %1581 = vmatpush.msra.mxu0 0.0
      %1582 = vmatpush.msra.mxu0 0.0
      %1583 = vmatpush.msra.mxu0 0.0
      %1584 = vmatpush.msra.mxu0 0.0
      %1585 = vmatpush.msra.mxu0 0.0
      %1586 = vmatpush.msra.mxu0 0.0
      %1587 = vmatpush.msra.mxu0 0.0
      %1588 = vmatpush.msra.mxu0 0.0
      %1589 = vmatpush.msra.mxu0 %v1516
      %1590 = vmatmul.f32.gmra.mxu0 %v1440
      %v1591 = vpop.f32.mrf.mxu0
      %v1592 = vadd.f32 0.0, %v1591
      %1593 = vmatmul.f32.gmra.mxu0 %v1442
      %v1594 = vpop.f32.mrf.mxu0
      %v1595 = vadd.f32 0.0, %v1594
      %1596 = vmatmul.f32.gmra.mxu0 %v1444
      %v1597 = vpop.f32.mrf.mxu0
      %v1598 = vadd.f32 0.0, %v1597
      %1599 = vmatmul.f32.gmra.mxu0 %v1446
      %v1600 = vpop.f32.mrf.mxu0
      %v1601 = vadd.f32 0.0, %v1600
      %1602 = vmatmul.f32.gmra.mxu0 %v1448
      %v1603 = vpop.f32.mrf.mxu0
      %v1604 = vadd.f32 0.0, %v1603
      %1605 = vmatmul.f32.gmra.mxu0 %v1450
      %v1606 = vpop.f32.mrf.mxu0
      %v1607 = vadd.f32 0.0, %v1606
      %1608 = vmatmul.f32.gmra.mxu0 %v1452
      %v1609 = vpop.f32.mrf.mxu0
      %v1610 = vadd.f32 0.0, %v1609
      %1611 = vmatmul.f32.gmra.mxu0 %v1454
      %v1612 = vpop.f32.mrf.mxu0
      %v1613 = vadd.f32 0.0, %v1612
      %1614 = vdwg.mxu0
      %v1615 = vmul.f32 %v1196, %v1592
      %v1616 = vmul.f32 %v1200, %v1595
      %v1617 = vmul.f32 %v1204, %v1598
      %v1618 = vmul.f32 %v1208, %v1601
      %v1619 = vmul.f32 %v1212, %v1604
      %v1620 = vmul.f32 %v1216, %v1607
      %v1621 = vmul.f32 %v1220, %v1610
      %v1622 = vmul.f32 %v1224, %v1613
      %v1623 = vadd.f32 %v1505, %v1615
      %v1624 = vadd.f32 %v1506, %v1616
      %v1625 = vadd.f32 %v1507, %v1617
      %v1626 = vadd.f32 %v1508, %v1618
      %v1627 = vadd.f32 %v1509, %v1619
      %v1628 = vadd.f32 %v1510, %v1620
      %v1629 = vadd.f32 %v1511, %v1621
      %v1630 = vadd.f32 %v1512, %v1622
      %1639 = vrot.lane.b32.xlu0 %v1566, 8
      %v1640 = vpop.permute.xlu0 %1639
      %1641 = vrot.lane.b32.xlu0 %v1567, 8
      %v1642 = vpop.permute.xlu0 %1641
      %1643 = vrot.lane.b32.xlu0 %v1568, 8
      %v1644 = vpop.permute.xlu0 %1643
      %1645 = vrot.lane.b32.xlu0 %v1569, 8
      %v1646 = vpop.permute.xlu0 %1645
      %1647 = vrot.lane.b32.xlu0 %v1570, 8
      %v1648 = vpop.permute.xlu0 %1647
      %1649 = vrot.lane.b32.xlu0 %v1571, 8
      %v1650 = vpop.permute.xlu0 %1649
      %1651 = vrot.lane.b32.xlu0 %v1572, 8
      %v1652 = vpop.permute.xlu0 %1651
      %1653 = vrot.lane.b32.xlu0 %v1573, 8
      %v1654 = vpop.permute.xlu0 %1653
      %v1663 = vmul.f32 %v920, %v1640
      %v1664 = vmul.f32 %v921, %v1642
      %v1665 = vmul.f32 %v922, %v1644
      %v1666 = vmul.f32 %v923, %v1646
      %v1667 = vmul.f32 %v924, %v1648
      %v1668 = vmul.f32 %v925, %v1650
      %v1669 = vmul.f32 %v926, %v1652
      %v1670 = vmul.f32 %v927, %v1654
      %1679 = vrot.lane.b32.xlu0 %v1663, 120
      %v1680 = vpop.permute.xlu0 %1679
      %1681 = vrot.lane.b32.xlu0 %v1664, 120
      %v1682 = vpop.permute.xlu0 %1681
      %1683 = vrot.lane.b32.xlu0 %v1665, 120
      %v1684 = vpop.permute.xlu0 %1683
      %1685 = vrot.lane.b32.xlu0 %v1666, 120
      %v1686 = vpop.permute.xlu0 %1685
      %1687 = vrot.lane.b32.xlu0 %v1667, 120
      %v1688 = vpop.permute.xlu0 %1687
      %1689 = vrot.lane.b32.xlu0 %v1668, 120
      %v1690 = vpop.permute.xlu0 %1689
      %1691 = vrot.lane.b32.xlu0 %v1669, 120
      %v1692 = vpop.permute.xlu0 %1691
      %1693 = vrot.lane.b32.xlu0 %v1670, 120
      %v1694 = vpop.permute.xlu0 %1693
      %v1703 = vsel %vm938, %v1680, 0.0
      %1704 = vadd.xlane.f32.xlu0 %v1703
      %v1705 = vpop.xlane.xlu0 %1704
      %v1706 = vsel %vm938, %v1682, 0.0
      %1707 = vadd.xlane.f32.xlu0 %v1706
      %v1708 = vpop.xlane.xlu0 %1707
      %v1709 = vsel %vm938, %v1684, 0.0
      %1710 = vadd.xlane.f32.xlu0 %v1709
      %v1711 = vpop.xlane.xlu0 %1710
      %v1712 = vsel %vm938, %v1686, 0.0
      %1713 = vadd.xlane.f32.xlu0 %v1712
      %v1714 = vpop.xlane.xlu0 %1713
      %v1715 = vsel %vm938, %v1688, 0.0
      %1716 = vadd.xlane.f32.xlu0 %v1715
      %v1717 = vpop.xlane.xlu0 %1716
      %v1718 = vsel %vm938, %v1690, 0.0
      %1719 = vadd.xlane.f32.xlu0 %v1718
      %v1720 = vpop.xlane.xlu0 %1719
      %v1721 = vsel %vm938, %v1692, 0.0
      %1722 = vadd.xlane.f32.xlu0 %v1721
      %v1723 = vpop.xlane.xlu0 %1722
      %v1724 = vsel %vm938, %v1694, 0.0
      %1725 = vadd.xlane.f32.xlu0 %v1724
      %v1726 = vpop.xlane.xlu0 %1725
      %s1727 = scalar_lea.vmem %s10, 16
      %v1728 = vld [vmem:[%s1727] sm:$0xff]
      %s1729 = scalar_lea.vmem %s11, 16
      %v1730 = vld [vmem:[%s1729] sm:$0xff]
      %1731 = vrot.lane.b32.xlu0 %v912, 112
      %v1732 = vpop.permute.xlu0 %1731
      %1733 = vrot.lane.b32.xlu0 %v913, 112
      %v1734 = vpop.permute.xlu0 %1733
      %1735 = vrot.lane.b32.xlu0 %v914, 112
      %v1736 = vpop.permute.xlu0 %1735
      %1737 = vrot.lane.b32.xlu0 %v915, 112
      %v1738 = vpop.permute.xlu0 %1737
      %1739 = vrot.lane.b32.xlu0 %v916, 112
      %v1740 = vpop.permute.xlu0 %1739
      %1741 = vrot.lane.b32.xlu0 %v917, 112
      %v1742 = vpop.permute.xlu0 %1741
      %1743 = vrot.lane.b32.xlu0 %v918, 112
      %v1744 = vpop.permute.xlu0 %1743
      %1745 = vrot.lane.b32.xlu0 %v919, 112
      %v1746 = vpop.permute.xlu0 %1745
      %v1747 = vsel %vm938, %v1732, 0
      %v1749 = vsel %vm938, %v1734, 0
      %v1751 = vsel %vm938, %v1736, 0
      %v1753 = vsel %vm938, %v1738, 0
      %v1755 = vsel %vm938, %v1740, 0
      %v1757 = vsel %vm938, %v1742, 0
      %v1759 = vsel %vm938, %v1744, 0
      %v1761 = vsel %vm938, %v1746, 0
      %1763 = vmatpush.msra.mxu0 0.0
      %1764 = vmatpush.msra.mxu0 0.0
      %1765 = vmatpush.msra.mxu0 0.0
      %1766 = vmatpush.msra.mxu0 0.0
      %1767 = vmatpush.msra.mxu0 0.0
      %1768 = vmatpush.msra.mxu0 0.0
      %1769 = vmatpush.msra.mxu0 0.0
      %1770 = vmatpush.msra.mxu0 0.0
      %1771 = vmatpush.msra.mxu0 0.0
      %1772 = vmatpush.msra.mxu0 0.0
      %1773 = vmatpush.msra.mxu0 0.0
      %1774 = vmatpush.msra.mxu0 0.0
      %1775 = vmatpush.msra.mxu0 0.0
      %1776 = vmatpush.msra.mxu0 0.0
      %1777 = vmatpush.msra.mxu0 0.0
      %1778 = vmatpush.msra.mxu0 %v1728
      %1779 = vmatmul.f32.gmra.mxu0 %v1747
      %v1780 = vpop.f32.mrf.mxu0
      %v1781 = vadd.f32 0.0, %v1780
      %1782 = vmatmul.f32.gmra.mxu0 %v1749
      %v1783 = vpop.f32.mrf.mxu0
      %v1784 = vadd.f32 0.0, %v1783
      %1785 = vmatmul.f32.gmra.mxu0 %v1751
      %v1786 = vpop.f32.mrf.mxu0
      %v1787 = vadd.f32 0.0, %v1786
      %1788 = vmatmul.f32.gmra.mxu0 %v1753
      %v1789 = vpop.f32.mrf.mxu0
      %v1790 = vadd.f32 0.0, %v1789
      %1791 = vmatmul.f32.gmra.mxu0 %v1755
      %v1792 = vpop.f32.mrf.mxu0
      %v1793 = vadd.f32 0.0, %v1792
      %1794 = vmatmul.f32.gmra.mxu0 %v1757
      %v1795 = vpop.f32.mrf.mxu0
      %v1796 = vadd.f32 0.0, %v1795
      %1797 = vmatmul.f32.gmra.mxu0 %v1759
      %v1798 = vpop.f32.mrf.mxu0
      %v1799 = vadd.f32 0.0, %v1798
      %1800 = vmatmul.f32.gmra.mxu0 %v1761
      %v1801 = vpop.f32.mrf.mxu0
      %v1802 = vadd.f32 0.0, %v1801
      %1803 = vdwg.mxu0
      %v1804 = vmul.f32 %v1007, %v1781
      %v1805 = vmul.f32 %v1012, %v1784
      %v1806 = vmul.f32 %v1017, %v1787
      %v1807 = vmul.f32 %v1022, %v1790
      %v1808 = vmul.f32 %v1027, %v1793
      %v1809 = vmul.f32 %v1032, %v1796
      %v1810 = vmul.f32 %v1037, %v1799
      %v1811 = vmul.f32 %v1042, %v1802
      %v1812 = vadd.f32 %v1804, 0.0
      %v1813 = vadd.f32 %v1805, 0.0
      %v1814 = vadd.f32 %v1806, 0.0
      %v1815 = vadd.f32 %v1807, 0.0
      %v1816 = vadd.f32 %v1808, 0.0
      %v1817 = vadd.f32 %v1809, 0.0
      %v1818 = vadd.f32 %v1810, 0.0
      %v1819 = vadd.f32 %v1811, 0.0
      %1820 = vrot.lane.b32.xlu0 %v912, 80
      %v1821 = vpop.permute.xlu0 %1820
      %1822 = vrot.lane.b32.xlu0 %v913, 80
      %v1823 = vpop.permute.xlu0 %1822
      %1824 = vrot.lane.b32.xlu0 %v914, 80
      %v1825 = vpop.permute.xlu0 %1824
      %1826 = vrot.lane.b32.xlu0 %v915, 80
      %v1827 = vpop.permute.xlu0 %1826
      %1828 = vrot.lane.b32.xlu0 %v916, 80
      %v1829 = vpop.permute.xlu0 %1828
      %1830 = vrot.lane.b32.xlu0 %v917, 80
      %v1831 = vpop.permute.xlu0 %1830
      %1832 = vrot.lane.b32.xlu0 %v918, 80
      %v1833 = vpop.permute.xlu0 %1832
      %1834 = vrot.lane.b32.xlu0 %v919, 80
      %v1835 = vpop.permute.xlu0 %1834
      %v1836 = vsel %vm938, %v1821, 0
      %v1838 = vsel %vm938, %v1823, 0
      %v1840 = vsel %vm938, %v1825, 0
      %v1842 = vsel %vm938, %v1827, 0
      %v1844 = vsel %vm938, %v1829, 0
      %v1846 = vsel %vm938, %v1831, 0
      %v1848 = vsel %vm938, %v1833, 0
      %v1850 = vsel %vm938, %v1835, 0
      %1852 = vmatpush.msra.mxu0 0.0
      %1853 = vmatpush.msra.mxu0 0.0
      %1854 = vmatpush.msra.mxu0 0.0
      %1855 = vmatpush.msra.mxu0 0.0
      %1856 = vmatpush.msra.mxu0 0.0
      %1857 = vmatpush.msra.mxu0 0.0
      %1858 = vmatpush.msra.mxu0 0.0
      %1859 = vmatpush.msra.mxu0 0.0
      %1860 = vmatpush.msra.mxu0 0.0
      %1861 = vmatpush.msra.mxu0 0.0
      %1862 = vmatpush.msra.mxu0 0.0
      %1863 = vmatpush.msra.mxu0 0.0
      %1864 = vmatpush.msra.mxu0 0.0
      %1865 = vmatpush.msra.mxu0 0.0
      %1866 = vmatpush.msra.mxu0 0.0
      %1867 = vmatpush.msra.mxu0 %v1730
      %1868 = vmatmul.f32.gmra.mxu0 %v1836
      %v1869 = vpop.f32.mrf.mxu0
      %v1870 = vadd.f32 0.0, %v1869
      %1871 = vmatmul.f32.gmra.mxu0 %v1838
      %v1872 = vpop.f32.mrf.mxu0
      %v1873 = vadd.f32 0.0, %v1872
      %1874 = vmatmul.f32.gmra.mxu0 %v1840
      %v1875 = vpop.f32.mrf.mxu0
      %v1876 = vadd.f32 0.0, %v1875
      %1877 = vmatmul.f32.gmra.mxu0 %v1842
      %v1878 = vpop.f32.mrf.mxu0
      %v1879 = vadd.f32 0.0, %v1878
      %1880 = vmatmul.f32.gmra.mxu0 %v1844
      %v1881 = vpop.f32.mrf.mxu0
      %v1882 = vadd.f32 0.0, %v1881
      %1883 = vmatmul.f32.gmra.mxu0 %v1846
      %v1884 = vpop.f32.mrf.mxu0
      %v1885 = vadd.f32 0.0, %v1884
      %1886 = vmatmul.f32.gmra.mxu0 %v1848
      %v1887 = vpop.f32.mrf.mxu0
      %v1888 = vadd.f32 0.0, %v1887
      %1889 = vmatmul.f32.gmra.mxu0 %v1850
      %v1890 = vpop.f32.mrf.mxu0
      %v1891 = vadd.f32 0.0, %v1890
      %1892 = vdwg.mxu0
      %v1893 = vmul.f32 %v1007, %v1870
      %v1894 = vmul.f32 %v1012, %v1873
      %v1895 = vmul.f32 %v1017, %v1876
      %v1896 = vmul.f32 %v1022, %v1879
      %v1897 = vmul.f32 %v1027, %v1882
      %v1898 = vmul.f32 %v1032, %v1885
      %v1899 = vmul.f32 %v1037, %v1888
      %v1900 = vmul.f32 %v1042, %v1891
      %v1901 = vadd.f32 %v1893, 0.0
      %v1902 = vadd.f32 %v1894, 0.0
      %v1903 = vadd.f32 %v1895, 0.0
      %v1904 = vadd.f32 %v1896, 0.0
      %v1905 = vadd.f32 %v1897, 0.0
      %v1906 = vadd.f32 %v1898, 0.0
      %v1907 = vadd.f32 %v1899, 0.0
      %v1908 = vadd.f32 %v1900, 0.0
      %s1909 = scalar_lea.vmem %s10, 48
      %v1910 = vld [vmem:[%s1909] sm:$0xff]
      %s1911 = scalar_lea.vmem %s11, 48
      %v1912 = vld [vmem:[%s1911] sm:$0xff]
      %1913 = vmatpush.msra.mxu0 0.0
      %1914 = vmatpush.msra.mxu0 0.0
      %1915 = vmatpush.msra.mxu0 0.0
      %1916 = vmatpush.msra.mxu0 0.0
      %1917 = vmatpush.msra.mxu0 0.0
      %1918 = vmatpush.msra.mxu0 0.0
      %1919 = vmatpush.msra.mxu0 0.0
      %1920 = vmatpush.msra.mxu0 0.0
      %1921 = vmatpush.msra.mxu0 0.0
      %1922 = vmatpush.msra.mxu0 0.0
      %1923 = vmatpush.msra.mxu0 0.0
      %1924 = vmatpush.msra.mxu0 0.0
      %1925 = vmatpush.msra.mxu0 0.0
      %1926 = vmatpush.msra.mxu0 0.0
      %1927 = vmatpush.msra.mxu0 0.0
      %1928 = vmatpush.msra.mxu0 %v1910
      %1929 = vmatmul.f32.gmra.mxu0 %v1747
      %v1930 = vpop.f32.mrf.mxu0
      %v1931 = vadd.f32 0.0, %v1930
      %1932 = vmatmul.f32.gmra.mxu0 %v1749
      %v1933 = vpop.f32.mrf.mxu0
      %v1934 = vadd.f32 0.0, %v1933
      %1935 = vmatmul.f32.gmra.mxu0 %v1751
      %v1936 = vpop.f32.mrf.mxu0
      %v1937 = vadd.f32 0.0, %v1936
      %1938 = vmatmul.f32.gmra.mxu0 %v1753
      %v1939 = vpop.f32.mrf.mxu0
      %v1940 = vadd.f32 0.0, %v1939
      %1941 = vmatmul.f32.gmra.mxu0 %v1755
      %v1942 = vpop.f32.mrf.mxu0
      %v1943 = vadd.f32 0.0, %v1942
      %1944 = vmatmul.f32.gmra.mxu0 %v1757
      %v1945 = vpop.f32.mrf.mxu0
      %v1946 = vadd.f32 0.0, %v1945
      %1947 = vmatmul.f32.gmra.mxu0 %v1759
      %v1948 = vpop.f32.mrf.mxu0
      %v1949 = vadd.f32 0.0, %v1948
      %1950 = vmatmul.f32.gmra.mxu0 %v1761
      %v1951 = vpop.f32.mrf.mxu0
      %v1952 = vadd.f32 0.0, %v1951
      %1953 = vdwg.mxu0
      %v1954 = vmul.f32 %v1196, %v1931
      %v1955 = vmul.f32 %v1200, %v1934
      %v1956 = vmul.f32 %v1204, %v1937
      %v1957 = vmul.f32 %v1208, %v1940
      %v1958 = vmul.f32 %v1212, %v1943
      %v1959 = vmul.f32 %v1216, %v1946
      %v1960 = vmul.f32 %v1220, %v1949
      %v1961 = vmul.f32 %v1224, %v1952
      %v1962 = vadd.f32 %v1812, %v1954
      %v1963 = vadd.f32 %v1813, %v1955
      %v1964 = vadd.f32 %v1814, %v1956
      %v1965 = vadd.f32 %v1815, %v1957
      %v1966 = vadd.f32 %v1816, %v1958
      %v1967 = vadd.f32 %v1817, %v1959
      %v1968 = vadd.f32 %v1818, %v1960
      %v1969 = vadd.f32 %v1819, %v1961
      %1970 = vmatpush.msra.mxu0 0.0
      %1971 = vmatpush.msra.mxu0 0.0
      %1972 = vmatpush.msra.mxu0 0.0
      %1973 = vmatpush.msra.mxu0 0.0
      %1974 = vmatpush.msra.mxu0 0.0
      %1975 = vmatpush.msra.mxu0 0.0
      %1976 = vmatpush.msra.mxu0 0.0
      %1977 = vmatpush.msra.mxu0 0.0
      %1978 = vmatpush.msra.mxu0 0.0
      %1979 = vmatpush.msra.mxu0 0.0
      %1980 = vmatpush.msra.mxu0 0.0
      %1981 = vmatpush.msra.mxu0 0.0
      %1982 = vmatpush.msra.mxu0 0.0
      %1983 = vmatpush.msra.mxu0 0.0
      %1984 = vmatpush.msra.mxu0 0.0
      %1985 = vmatpush.msra.mxu0 %v1912
      %1986 = vmatmul.f32.gmra.mxu0 %v1836
      %v1987 = vpop.f32.mrf.mxu0
      %v1988 = vadd.f32 0.0, %v1987
      %1989 = vmatmul.f32.gmra.mxu0 %v1838
      %v1990 = vpop.f32.mrf.mxu0
      %v1991 = vadd.f32 0.0, %v1990
      %1992 = vmatmul.f32.gmra.mxu0 %v1840
      %v1993 = vpop.f32.mrf.mxu0
      %v1994 = vadd.f32 0.0, %v1993
      %1995 = vmatmul.f32.gmra.mxu0 %v1842
      %v1996 = vpop.f32.mrf.mxu0
      %v1997 = vadd.f32 0.0, %v1996
      %1998 = vmatmul.f32.gmra.mxu0 %v1844
      %v1999 = vpop.f32.mrf.mxu0
      %v2000 = vadd.f32 0.0, %v1999
      %2001 = vmatmul.f32.gmra.mxu0 %v1846
      %v2002 = vpop.f32.mrf.mxu0
      %v2003 = vadd.f32 0.0, %v2002
      %2004 = vmatmul.f32.gmra.mxu0 %v1848
      %v2005 = vpop.f32.mrf.mxu0
      %v2006 = vadd.f32 0.0, %v2005
      %2007 = vmatmul.f32.gmra.mxu0 %v1850
      %v2008 = vpop.f32.mrf.mxu0
      %v2009 = vadd.f32 0.0, %v2008
      %2010 = vdwg.mxu0
      %v2011 = vmul.f32 %v1196, %v1988
      %v2012 = vmul.f32 %v1200, %v1991
      %v2013 = vmul.f32 %v1204, %v1994
      %v2014 = vmul.f32 %v1208, %v1997
      %v2015 = vmul.f32 %v1212, %v2000
      %v2016 = vmul.f32 %v1216, %v2003
      %v2017 = vmul.f32 %v1220, %v2006
      %v2018 = vmul.f32 %v1224, %v2009
      %v2019 = vadd.f32 %v1901, %v2011
      %v2020 = vadd.f32 %v1902, %v2012
      %v2021 = vadd.f32 %v1903, %v2013
      %v2022 = vadd.f32 %v1904, %v2014
      %v2023 = vadd.f32 %v1905, %v2015
      %v2024 = vadd.f32 %v1906, %v2016
      %v2025 = vadd.f32 %v1907, %v2017
      %v2026 = vadd.f32 %v1908, %v2018
      %2035 = vrot.lane.b32.xlu0 %v1962, 16
      %v2036 = vpop.permute.xlu0 %2035
      %2037 = vrot.lane.b32.xlu0 %v1963, 16
      %v2038 = vpop.permute.xlu0 %2037
      %2039 = vrot.lane.b32.xlu0 %v1964, 16
      %v2040 = vpop.permute.xlu0 %2039
      %2041 = vrot.lane.b32.xlu0 %v1965, 16
      %v2042 = vpop.permute.xlu0 %2041
      %2043 = vrot.lane.b32.xlu0 %v1966, 16
      %v2044 = vpop.permute.xlu0 %2043
      %2045 = vrot.lane.b32.xlu0 %v1967, 16
      %v2046 = vpop.permute.xlu0 %2045
      %2047 = vrot.lane.b32.xlu0 %v1968, 16
      %v2048 = vpop.permute.xlu0 %2047
      %2049 = vrot.lane.b32.xlu0 %v1969, 16
      %v2050 = vpop.permute.xlu0 %2049
      %v2059 = vmul.f32 %v920, %v2036
      %v2060 = vmul.f32 %v921, %v2038
      %v2061 = vmul.f32 %v922, %v2040
      %v2062 = vmul.f32 %v923, %v2042
      %v2063 = vmul.f32 %v924, %v2044
      %v2064 = vmul.f32 %v925, %v2046
      %v2065 = vmul.f32 %v926, %v2048
      %v2066 = vmul.f32 %v927, %v2050
      %2075 = vrot.lane.b32.xlu0 %v2059, 112
      %v2076 = vpop.permute.xlu0 %2075
      %2077 = vrot.lane.b32.xlu0 %v2060, 112
      %v2078 = vpop.permute.xlu0 %2077
      %2079 = vrot.lane.b32.xlu0 %v2061, 112
      %v2080 = vpop.permute.xlu0 %2079
      %2081 = vrot.lane.b32.xlu0 %v2062, 112
      %v2082 = vpop.permute.xlu0 %2081
      %2083 = vrot.lane.b32.xlu0 %v2063, 112
      %v2084 = vpop.permute.xlu0 %2083
      %2085 = vrot.lane.b32.xlu0 %v2064, 112
      %v2086 = vpop.permute.xlu0 %2085
      %2087 = vrot.lane.b32.xlu0 %v2065, 112
      %v2088 = vpop.permute.xlu0 %2087
      %2089 = vrot.lane.b32.xlu0 %v2066, 112
      %v2090 = vpop.permute.xlu0 %2089
      %v2099 = vsel %vm938, %v2076, 0.0
      %2100 = vadd.xlane.f32.xlu0 %v2099
      %v2101 = vpop.xlane.xlu0 %2100
      %v2102 = vsel %vm938, %v2078, 0.0
      %2103 = vadd.xlane.f32.xlu0 %v2102
      %v2104 = vpop.xlane.xlu0 %2103
      %v2105 = vsel %vm938, %v2080, 0.0
      %2106 = vadd.xlane.f32.xlu0 %v2105
      %v2107 = vpop.xlane.xlu0 %2106
      %v2108 = vsel %vm938, %v2082, 0.0
      %2109 = vadd.xlane.f32.xlu0 %v2108
      %v2110 = vpop.xlane.xlu0 %2109
      %v2111 = vsel %vm938, %v2084, 0.0
      %2112 = vadd.xlane.f32.xlu0 %v2111
      %v2113 = vpop.xlane.xlu0 %2112
      %v2114 = vsel %vm938, %v2086, 0.0
      %2115 = vadd.xlane.f32.xlu0 %v2114
      %v2116 = vpop.xlane.xlu0 %2115
      %v2117 = vsel %vm938, %v2088, 0.0
      %2118 = vadd.xlane.f32.xlu0 %v2117
      %v2119 = vpop.xlane.xlu0 %2118
      %v2120 = vsel %vm938, %v2090, 0.0
      %2121 = vadd.xlane.f32.xlu0 %v2120
      %v2122 = vpop.xlane.xlu0 %2121
      %s2123 = scalar_lea.vmem %s10, 24
      %v2124 = vld [vmem:[%s2123] sm:$0xff]
      %s2125 = scalar_lea.vmem %s11, 24
      %v2126 = vld [vmem:[%s2125] sm:$0xff]
      %2127 = vrot.lane.b32.xlu0 %v912, 104
      %v2128 = vpop.permute.xlu0 %2127
      %2129 = vrot.lane.b32.xlu0 %v913, 104
      %v2130 = vpop.permute.xlu0 %2129
      %2131 = vrot.lane.b32.xlu0 %v914, 104
      %v2132 = vpop.permute.xlu0 %2131
      %2133 = vrot.lane.b32.xlu0 %v915, 104
      %v2134 = vpop.permute.xlu0 %2133
      %2135 = vrot.lane.b32.xlu0 %v916, 104
      %v2136 = vpop.permute.xlu0 %2135
      %2137 = vrot.lane.b32.xlu0 %v917, 104
      %v2138 = vpop.permute.xlu0 %2137
      %2139 = vrot.lane.b32.xlu0 %v918, 104
      %v2140 = vpop.permute.xlu0 %2139
      %2141 = vrot.lane.b32.xlu0 %v919, 104
      %v2142 = vpop.permute.xlu0 %2141
      %v2143 = vsel %vm938, %v2128, 0
      %v2145 = vsel %vm938, %v2130, 0
      %v2147 = vsel %vm938, %v2132, 0
      %v2149 = vsel %vm938, %v2134, 0
      %v2151 = vsel %vm938, %v2136, 0
      %v2153 = vsel %vm938, %v2138, 0
      %v2155 = vsel %vm938, %v2140, 0
      %v2157 = vsel %vm938, %v2142, 0
      %2159 = vmatpush.msra.mxu0 0.0
      %2160 = vmatpush.msra.mxu0 0.0
      %2161 = vmatpush.msra.mxu0 0.0
      %2162 = vmatpush.msra.mxu0 0.0
      %2163 = vmatpush.msra.mxu0 0.0
      %2164 = vmatpush.msra.mxu0 0.0
      %2165 = vmatpush.msra.mxu0 0.0
      %2166 = vmatpush.msra.mxu0 0.0
      %2167 = vmatpush.msra.mxu0 0.0
      %2168 = vmatpush.msra.mxu0 0.0
      %2169 = vmatpush.msra.mxu0 0.0
      %2170 = vmatpush.msra.mxu0 0.0
      %2171 = vmatpush.msra.mxu0 0.0
      %2172 = vmatpush.msra.mxu0 0.0
      %2173 = vmatpush.msra.mxu0 0.0
      %2174 = vmatpush.msra.mxu0 %v2124
      %2175 = vmatmul.f32.gmra.mxu0 %v2143
      %v2176 = vpop.f32.mrf.mxu0
      %v2177 = vadd.f32 0.0, %v2176
      %2178 = vmatmul.f32.gmra.mxu0 %v2145
      %v2179 = vpop.f32.mrf.mxu0
      %v2180 = vadd.f32 0.0, %v2179
      %2181 = vmatmul.f32.gmra.mxu0 %v2147
      %v2182 = vpop.f32.mrf.mxu0
      %v2183 = vadd.f32 0.0, %v2182
      %2184 = vmatmul.f32.gmra.mxu0 %v2149
      %v2185 = vpop.f32.mrf.mxu0
      %v2186 = vadd.f32 0.0, %v2185
      %2187 = vmatmul.f32.gmra.mxu0 %v2151
      %v2188 = vpop.f32.mrf.mxu0
      %v2189 = vadd.f32 0.0, %v2188
      %2190 = vmatmul.f32.gmra.mxu0 %v2153
      %v2191 = vpop.f32.mrf.mxu0
      %v2192 = vadd.f32 0.0, %v2191
      %2193 = vmatmul.f32.gmra.mxu0 %v2155
      %v2194 = vpop.f32.mrf.mxu0
      %v2195 = vadd.f32 0.0, %v2194
      %2196 = vmatmul.f32.gmra.mxu0 %v2157
      %v2197 = vpop.f32.mrf.mxu0
      %v2198 = vadd.f32 0.0, %v2197
      %2199 = vdwg.mxu0
      %v2200 = vmul.f32 %v1007, %v2177
      %v2201 = vmul.f32 %v1012, %v2180
      %v2202 = vmul.f32 %v1017, %v2183
      %v2203 = vmul.f32 %v1022, %v2186
      %v2204 = vmul.f32 %v1027, %v2189
      %v2205 = vmul.f32 %v1032, %v2192
      %v2206 = vmul.f32 %v1037, %v2195
      %v2207 = vmul.f32 %v1042, %v2198
      %v2208 = vadd.f32 %v2200, 0.0
      %v2209 = vadd.f32 %v2201, 0.0
      %v2210 = vadd.f32 %v2202, 0.0
      %v2211 = vadd.f32 %v2203, 0.0
      %v2212 = vadd.f32 %v2204, 0.0
      %v2213 = vadd.f32 %v2205, 0.0
      %v2214 = vadd.f32 %v2206, 0.0
      %v2215 = vadd.f32 %v2207, 0.0
      %2216 = vrot.lane.b32.xlu0 %v912, 72
      %v2217 = vpop.permute.xlu0 %2216
      %2218 = vrot.lane.b32.xlu0 %v913, 72
      %v2219 = vpop.permute.xlu0 %2218
      %2220 = vrot.lane.b32.xlu0 %v914, 72
      %v2221 = vpop.permute.xlu0 %2220
      %2222 = vrot.lane.b32.xlu0 %v915, 72
      %v2223 = vpop.permute.xlu0 %2222
      %2224 = vrot.lane.b32.xlu0 %v916, 72
      %v2225 = vpop.permute.xlu0 %2224
      %2226 = vrot.lane.b32.xlu0 %v917, 72
      %v2227 = vpop.permute.xlu0 %2226
      %2228 = vrot.lane.b32.xlu0 %v918, 72
      %v2229 = vpop.permute.xlu0 %2228
      %2230 = vrot.lane.b32.xlu0 %v919, 72
      %v2231 = vpop.permute.xlu0 %2230
      %v2232 = vsel %vm938, %v2217, 0
      %v2234 = vsel %vm938, %v2219, 0
      %v2236 = vsel %vm938, %v2221, 0
      %v2238 = vsel %vm938, %v2223, 0
      %v2240 = vsel %vm938, %v2225, 0
      %v2242 = vsel %vm938, %v2227, 0
      %v2244 = vsel %vm938, %v2229, 0
      %v2246 = vsel %vm938, %v2231, 0
      %2248 = vmatpush.msra.mxu0 0.0
      %2249 = vmatpush.msra.mxu0 0.0
      %2250 = vmatpush.msra.mxu0 0.0
      %2251 = vmatpush.msra.mxu0 0.0
      %2252 = vmatpush.msra.mxu0 0.0
      %2253 = vmatpush.msra.mxu0 0.0
      %2254 = vmatpush.msra.mxu0 0.0
      %2255 = vmatpush.msra.mxu0 0.0
      %2256 = vmatpush.msra.mxu0 0.0
      %2257 = vmatpush.msra.mxu0 0.0
      %2258 = vmatpush.msra.mxu0 0.0
      %2259 = vmatpush.msra.mxu0 0.0
      %2260 = vmatpush.msra.mxu0 0.0
      %2261 = vmatpush.msra.mxu0 0.0
      %2262 = vmatpush.msra.mxu0 0.0
      %2263 = vmatpush.msra.mxu0 %v2126
      %2264 = vmatmul.f32.gmra.mxu0 %v2232
      %v2265 = vpop.f32.mrf.mxu0
      %v2266 = vadd.f32 0.0, %v2265
      %2267 = vmatmul.f32.gmra.mxu0 %v2234
      %v2268 = vpop.f32.mrf.mxu0
      %v2269 = vadd.f32 0.0, %v2268
      %2270 = vmatmul.f32.gmra.mxu0 %v2236
      %v2271 = vpop.f32.mrf.mxu0
      %v2272 = vadd.f32 0.0, %v2271
      %2273 = vmatmul.f32.gmra.mxu0 %v2238
      %v2274 = vpop.f32.mrf.mxu0
      %v2275 = vadd.f32 0.0, %v2274
      %2276 = vmatmul.f32.gmra.mxu0 %v2240
      %v2277 = vpop.f32.mrf.mxu0
      %v2278 = vadd.f32 0.0, %v2277
      %2279 = vmatmul.f32.gmra.mxu0 %v2242
      %v2280 = vpop.f32.mrf.mxu0
      %v2281 = vadd.f32 0.0, %v2280
      %2282 = vmatmul.f32.gmra.mxu0 %v2244
      %v2283 = vpop.f32.mrf.mxu0
      %v2284 = vadd.f32 0.0, %v2283
      %2285 = vmatmul.f32.gmra.mxu0 %v2246
      %v2286 = vpop.f32.mrf.mxu0
      %v2287 = vadd.f32 0.0, %v2286
      %2288 = vdwg.mxu0
      %v2289 = vmul.f32 %v1007, %v2266
      %v2290 = vmul.f32 %v1012, %v2269
      %v2291 = vmul.f32 %v1017, %v2272
      %v2292 = vmul.f32 %v1022, %v2275
      %v2293 = vmul.f32 %v1027, %v2278
      %v2294 = vmul.f32 %v1032, %v2281
      %v2295 = vmul.f32 %v1037, %v2284
      %v2296 = vmul.f32 %v1042, %v2287
      %v2297 = vadd.f32 %v2289, 0.0
      %v2298 = vadd.f32 %v2290, 0.0
      %v2299 = vadd.f32 %v2291, 0.0
      %v2300 = vadd.f32 %v2292, 0.0
      %v2301 = vadd.f32 %v2293, 0.0
      %v2302 = vadd.f32 %v2294, 0.0
      %v2303 = vadd.f32 %v2295, 0.0
      %v2304 = vadd.f32 %v2296, 0.0
      %s2305 = scalar_lea.vmem %s10, 56
      %v2306 = vld [vmem:[%s2305] sm:$0xff]
      %s2307 = scalar_lea.vmem %s11, 56
      %v2308 = vld [vmem:[%s2307] sm:$0xff]
      %2309 = vmatpush.msra.mxu0 0.0
      %2310 = vmatpush.msra.mxu0 0.0
      %2311 = vmatpush.msra.mxu0 0.0
      %2312 = vmatpush.msra.mxu0 0.0
      %2313 = vmatpush.msra.mxu0 0.0
      %2314 = vmatpush.msra.mxu0 0.0
      %2315 = vmatpush.msra.mxu0 0.0
      %2316 = vmatpush.msra.mxu0 0.0
      %2317 = vmatpush.msra.mxu0 0.0
      %2318 = vmatpush.msra.mxu0 0.0
      %2319 = vmatpush.msra.mxu0 0.0
      %2320 = vmatpush.msra.mxu0 0.0
      %2321 = vmatpush.msra.mxu0 0.0
      %2322 = vmatpush.msra.mxu0 0.0
      %2323 = vmatpush.msra.mxu0 0.0
      %2324 = vmatpush.msra.mxu0 %v2306
      %2325 = vmatmul.f32.gmra.mxu0 %v2143
      %v2326 = vpop.f32.mrf.mxu0
      %v2327 = vadd.f32 0.0, %v2326
      %2328 = vmatmul.f32.gmra.mxu0 %v2145
      %v2329 = vpop.f32.mrf.mxu0
      %v2330 = vadd.f32 0.0, %v2329
      %2331 = vmatmul.f32.gmra.mxu0 %v2147
      %v2332 = vpop.f32.mrf.mxu0
      %v2333 = vadd.f32 0.0, %v2332
      %2334 = vmatmul.f32.gmra.mxu0 %v2149
      %v2335 = vpop.f32.mrf.mxu0
      %v2336 = vadd.f32 0.0, %v2335
      %2337 = vmatmul.f32.gmra.mxu0 %v2151
      %v2338 = vpop.f32.mrf.mxu0
      %v2339 = vadd.f32 0.0, %v2338
      %2340 = vmatmul.f32.gmra.mxu0 %v2153
      %v2341 = vpop.f32.mrf.mxu0
      %v2342 = vadd.f32 0.0, %v2341
      %2343 = vmatmul.f32.gmra.mxu0 %v2155
      %v2344 = vpop.f32.mrf.mxu0
      %v2345 = vadd.f32 0.0, %v2344
      %2346 = vmatmul.f32.gmra.mxu0 %v2157
      %v2347 = vpop.f32.mrf.mxu0
      %v2348 = vadd.f32 0.0, %v2347
      %2349 = vdwg.mxu0
      %v2350 = vmul.f32 %v1196, %v2327
      %v2351 = vmul.f32 %v1200, %v2330
      %v2352 = vmul.f32 %v1204, %v2333
      %v2353 = vmul.f32 %v1208, %v2336
      %v2354 = vmul.f32 %v1212, %v2339
      %v2355 = vmul.f32 %v1216, %v2342
      %v2356 = vmul.f32 %v1220, %v2345
      %v2357 = vmul.f32 %v1224, %v2348
      %v2358 = vadd.f32 %v2208, %v2350
      %v2359 = vadd.f32 %v2209, %v2351
      %v2360 = vadd.f32 %v2210, %v2352
      %v2361 = vadd.f32 %v2211, %v2353
      %v2362 = vadd.f32 %v2212, %v2354
      %v2363 = vadd.f32 %v2213, %v2355
      %v2364 = vadd.f32 %v2214, %v2356
      %v2365 = vadd.f32 %v2215, %v2357
      %2366 = vmatpush.msra.mxu0 0.0
      %2367 = vmatpush.msra.mxu0 0.0
      %2368 = vmatpush.msra.mxu0 0.0
      %2369 = vmatpush.msra.mxu0 0.0
      %2370 = vmatpush.msra.mxu0 0.0
      %2371 = vmatpush.msra.mxu0 0.0
      %2372 = vmatpush.msra.mxu0 0.0
      %2373 = vmatpush.msra.mxu0 0.0
      %2374 = vmatpush.msra.mxu0 0.0
      %2375 = vmatpush.msra.mxu0 0.0
      %2376 = vmatpush.msra.mxu0 0.0
      %2377 = vmatpush.msra.mxu0 0.0
      %2378 = vmatpush.msra.mxu0 0.0
      %2379 = vmatpush.msra.mxu0 0.0
      %2380 = vmatpush.msra.mxu0 0.0
      %2381 = vmatpush.msra.mxu0 %v2308
      %2382 = vmatmul.f32.gmra.mxu0 %v2232
      %v2383 = vpop.f32.mrf.mxu0
      %v2384 = vadd.f32 0.0, %v2383
      %2385 = vmatmul.f32.gmra.mxu0 %v2234
      %v2386 = vpop.f32.mrf.mxu0
      %v2387 = vadd.f32 0.0, %v2386
      %2388 = vmatmul.f32.gmra.mxu0 %v2236
      %v2389 = vpop.f32.mrf.mxu0
      %v2390 = vadd.f32 0.0, %v2389
      %2391 = vmatmul.f32.gmra.mxu0 %v2238
      %v2392 = vpop.f32.mrf.mxu0
      %v2393 = vadd.f32 0.0, %v2392
      %2394 = vmatmul.f32.gmra.mxu0 %v2240
      %v2395 = vpop.f32.mrf.mxu0
      %v2396 = vadd.f32 0.0, %v2395
      %2397 = vmatmul.f32.gmra.mxu0 %v2242
      %v2398 = vpop.f32.mrf.mxu0
      %v2399 = vadd.f32 0.0, %v2398
      %2400 = vmatmul.f32.gmra.mxu0 %v2244
      %v2401 = vpop.f32.mrf.mxu0
      %v2402 = vadd.f32 0.0, %v2401
      %2403 = vmatmul.f32.gmra.mxu0 %v2246
      %v2404 = vpop.f32.mrf.mxu0
      %v2405 = vadd.f32 0.0, %v2404
      %2406 = vdwg.mxu0
      %v2407 = vmul.f32 %v1196, %v2384
      %v2408 = vmul.f32 %v1200, %v2387
      %v2409 = vmul.f32 %v1204, %v2390
      %v2410 = vmul.f32 %v1208, %v2393
      %v2411 = vmul.f32 %v1212, %v2396
      %v2412 = vmul.f32 %v1216, %v2399
      %v2413 = vmul.f32 %v1220, %v2402
      %v2414 = vmul.f32 %v1224, %v2405
      %v2415 = vadd.f32 %v2297, %v2407
      %v2416 = vadd.f32 %v2298, %v2408
      %v2417 = vadd.f32 %v2299, %v2409
      %v2418 = vadd.f32 %v2300, %v2410
      %v2419 = vadd.f32 %v2301, %v2411
      %v2420 = vadd.f32 %v2302, %v2412
      %v2421 = vadd.f32 %v2303, %v2413
      %v2422 = vadd.f32 %v2304, %v2414
      %2431 = vrot.lane.b32.xlu0 %v2358, 24
      %v2432 = vpop.permute.xlu0 %2431
      %2433 = vrot.lane.b32.xlu0 %v2359, 24
      %v2434 = vpop.permute.xlu0 %2433
      %2435 = vrot.lane.b32.xlu0 %v2360, 24
      %v2436 = vpop.permute.xlu0 %2435
      %2437 = vrot.lane.b32.xlu0 %v2361, 24
      %v2438 = vpop.permute.xlu0 %2437
      %2439 = vrot.lane.b32.xlu0 %v2362, 24
      %v2440 = vpop.permute.xlu0 %2439
      %2441 = vrot.lane.b32.xlu0 %v2363, 24
      %v2442 = vpop.permute.xlu0 %2441
      %2443 = vrot.lane.b32.xlu0 %v2364, 24
      %v2444 = vpop.permute.xlu0 %2443
      %2445 = vrot.lane.b32.xlu0 %v2365, 24
      %v2446 = vpop.permute.xlu0 %2445
      %v2455 = vmul.f32 %v920, %v2432
      %v2456 = vmul.f32 %v921, %v2434
      %v2457 = vmul.f32 %v922, %v2436
      %v2458 = vmul.f32 %v923, %v2438
      %v2459 = vmul.f32 %v924, %v2440
      %v2460 = vmul.f32 %v925, %v2442
      %v2461 = vmul.f32 %v926, %v2444
      %v2462 = vmul.f32 %v927, %v2446
      %2471 = vrot.lane.b32.xlu0 %v2455, 104
      %v2472 = vpop.permute.xlu0 %2471
      %2473 = vrot.lane.b32.xlu0 %v2456, 104
      %v2474 = vpop.permute.xlu0 %2473
      %2475 = vrot.lane.b32.xlu0 %v2457, 104
      %v2476 = vpop.permute.xlu0 %2475
      %2477 = vrot.lane.b32.xlu0 %v2458, 104
      %v2478 = vpop.permute.xlu0 %2477
      %2479 = vrot.lane.b32.xlu0 %v2459, 104
      %v2480 = vpop.permute.xlu0 %2479
      %2481 = vrot.lane.b32.xlu0 %v2460, 104
      %v2482 = vpop.permute.xlu0 %2481
      %2483 = vrot.lane.b32.xlu0 %v2461, 104
      %v2484 = vpop.permute.xlu0 %2483
      %2485 = vrot.lane.b32.xlu0 %v2462, 104
      %v2486 = vpop.permute.xlu0 %2485
      %v2495 = vsel %vm938, %v2472, 0.0
      %2496 = vadd.xlane.f32.xlu0 %v2495
      %v2497 = vpop.xlane.xlu0 %2496
      %v2498 = vsel %vm938, %v2474, 0.0
      %2499 = vadd.xlane.f32.xlu0 %v2498
      %v2500 = vpop.xlane.xlu0 %2499
      %v2501 = vsel %vm938, %v2476, 0.0
      %2502 = vadd.xlane.f32.xlu0 %v2501
      %v2503 = vpop.xlane.xlu0 %2502
      %v2504 = vsel %vm938, %v2478, 0.0
      %2505 = vadd.xlane.f32.xlu0 %v2504
      %v2506 = vpop.xlane.xlu0 %2505
      %v2507 = vsel %vm938, %v2480, 0.0
      %2508 = vadd.xlane.f32.xlu0 %v2507
      %v2509 = vpop.xlane.xlu0 %2508
      %v2510 = vsel %vm938, %v2482, 0.0
      %2511 = vadd.xlane.f32.xlu0 %v2510
      %v2512 = vpop.xlane.xlu0 %2511
      %v2513 = vsel %vm938, %v2484, 0.0
      %2514 = vadd.xlane.f32.xlu0 %v2513
      %v2515 = vpop.xlane.xlu0 %2514
      %v2516 = vsel %vm938, %v2486, 0.0
      %2517 = vadd.xlane.f32.xlu0 %v2516
      %v2518 = vpop.xlane.xlu0 %2517
      %vm2519 = vcmask 7168
      %v2520 = vsel %vm2519, %v1309, %v1705
      %v2521 = vsel %vm2519, %v1312, %v1708
      %v2522 = vsel %vm2519, %v1315, %v1711
      %v2523 = vsel %vm2519, %v1318, %v1714
      %v2524 = vsel %vm2519, %v1321, %v1717
      %v2525 = vsel %vm2519, %v1324, %v1720
      %v2526 = vsel %vm2519, %v1327, %v1723
      %v2527 = vsel %vm2519, %v1330, %v1726
      %vm2528 = vcmask 15360
      %v2529 = vsel %vm2528, %v2520, %v2101
      %v2530 = vsel %vm2528, %v2521, %v2104
      %v2531 = vsel %vm2528, %v2522, %v2107
      %v2532 = vsel %vm2528, %v2523, %v2110
      %v2533 = vsel %vm2528, %v2524, %v2113
      %v2534 = vsel %vm2528, %v2525, %v2116
      %v2535 = vsel %vm2528, %v2526, %v2119
      %v2536 = vsel %vm2528, %v2527, %v2122
      %vm2537 = vcmask 23552
      %v2538 = vsel %vm2537, %v2529, %v2497
      %v2539 = vsel %vm2537, %v2530, %v2500
      %v2540 = vsel %vm2537, %v2531, %v2503
      %v2541 = vsel %vm2537, %v2532, %v2506
      %v2542 = vsel %vm2537, %v2533, %v2509
      %v2543 = vsel %vm2537, %v2534, %v2512
      %v2544 = vsel %vm2537, %v2535, %v2515
      %v2545 = vsel %vm2537, %v2536, %v2518
      %v2546 = vld [vmem:[%s554] sm:$0xff]
      %v2547 = vld [vmem:[%s554 + $0x8] sm:$0xff]
      %v2548 = vld [vmem:[%s554 + $0x10] sm:$0xff]
      %v2549 = vld [vmem:[%s554 + $0x18] sm:$0xff]
      %v2550 = vld [vmem:[%s554 + $0x20] sm:$0xff]
      %v2551 = vld [vmem:[%s554 + $0x28] sm:$0xff]
      %v2552 = vld [vmem:[%s554 + $0x30] sm:$0xff]
      %v2553 = vld [vmem:[%s554 + $0x38] sm:$0xff]
      %v2554 = vmul.f32 %v2538, %v2546
      %v2555 = vmul.f32 %v2539, %v2547
      %v2556 = vmul.f32 %v2540, %v2548
      %v2557 = vmul.f32 %v2541, %v2549
      %v2558 = vmul.f32 %v2542, %v2550
      %v2559 = vmul.f32 %v2543, %v2551
      %v2560 = vmul.f32 %v2544, %v2552
      %v2561 = vmul.f32 %v2545, %v2553
      %v2562 = vmul.f32 %v2554, 0.35355338
      %v2563 = vmul.f32 %v2555, 0.35355338
      %v2564 = vmul.f32 %v2556, 0.35355338
      %v2565 = vmul.f32 %v2557, 0.35355338
      %v2566 = vmul.f32 %v2558, 0.35355338
      %v2567 = vmul.f32 %v2559, 0.35355338
      %v2568 = vmul.f32 %v2560, 0.35355338
      %v2569 = vmul.f32 %v2561, 0.35355338
      %vm2570 = vcmask 31744
      %2571 = vst.msk [vmem:[%s566] sm:$0xff] %vm2570, %v2562
      %2572 = vst.msk [vmem:[%s566 + $0x8] sm:$0xff] %vm2570, %v2563
      %2573 = vst.msk [vmem:[%s566 + $0x10] sm:$0xff] %vm2570, %v2564
      %2574 = vst.msk [vmem:[%s566 + $0x18] sm:$0xff] %vm2570, %v2565
      %2575 = vst.msk [vmem:[%s566 + $0x20] sm:$0xff] %vm2570, %v2566
      %2576 = vst.msk [vmem:[%s566 + $0x28] sm:$0xff] %vm2570, %v2567
      %2577 = vst.msk [vmem:[%s566 + $0x30] sm:$0xff] %vm2570, %v2568
      %2578 = vst.msk [vmem:[%s566 + $0x38] sm:$0xff] %vm2570, %v2569
      %2587 = vrot.lane.b32.xlu0 %v1623, 8
      %v2588 = vpop.permute.xlu0 %2587
      %2589 = vrot.lane.b32.xlu0 %v1624, 8
      %v2590 = vpop.permute.xlu0 %2589
      %2591 = vrot.lane.b32.xlu0 %v1625, 8
      %v2592 = vpop.permute.xlu0 %2591
      %2593 = vrot.lane.b32.xlu0 %v1626, 8
      %v2594 = vpop.permute.xlu0 %2593
      %2595 = vrot.lane.b32.xlu0 %v1627, 8
      %v2596 = vpop.permute.xlu0 %2595
      %2597 = vrot.lane.b32.xlu0 %v1628, 8
      %v2598 = vpop.permute.xlu0 %2597
      %2599 = vrot.lane.b32.xlu0 %v1629, 8
      %v2600 = vpop.permute.xlu0 %2599
      %2601 = vrot.lane.b32.xlu0 %v1630, 8
      %v2602 = vpop.permute.xlu0 %2601
      %2619 = vrot.lane.b32.xlu0 %v2019, 16
      %v2620 = vpop.permute.xlu0 %2619
      %2621 = vrot.lane.b32.xlu0 %v2020, 16
      %v2622 = vpop.permute.xlu0 %2621
      %2623 = vrot.lane.b32.xlu0 %v2021, 16
      %v2624 = vpop.permute.xlu0 %2623
      %2625 = vrot.lane.b32.xlu0 %v2022, 16
      %v2626 = vpop.permute.xlu0 %2625
      %2627 = vrot.lane.b32.xlu0 %v2023, 16
      %v2628 = vpop.permute.xlu0 %2627
      %2629 = vrot.lane.b32.xlu0 %v2024, 16
      %v2630 = vpop.permute.xlu0 %2629
      %2631 = vrot.lane.b32.xlu0 %v2025, 16
      %v2632 = vpop.permute.xlu0 %2631
      %2633 = vrot.lane.b32.xlu0 %v2026, 16
      %v2634 = vpop.permute.xlu0 %2633
      %2651 = vrot.lane.b32.xlu0 %v2415, 24
      %v2652 = vpop.permute.xlu0 %2651
      %2653 = vrot.lane.b32.xlu0 %v2416, 24
      %v2654 = vpop.permute.xlu0 %2653
      %2655 = vrot.lane.b32.xlu0 %v2417, 24
      %v2656 = vpop.permute.xlu0 %2655
      %2657 = vrot.lane.b32.xlu0 %v2418, 24
      %v2658 = vpop.permute.xlu0 %2657
      %2659 = vrot.lane.b32.xlu0 %v2419, 24
      %v2660 = vpop.permute.xlu0 %2659
      %2661 = vrot.lane.b32.xlu0 %v2420, 24
      %v2662 = vpop.permute.xlu0 %2661
      %2663 = vrot.lane.b32.xlu0 %v2421, 24
      %v2664 = vpop.permute.xlu0 %2663
      %2665 = vrot.lane.b32.xlu0 %v2422, 24
      %v2666 = vpop.permute.xlu0 %2665
      %v2675 = vsel %vm938, %v1291, %v2588
      %v2676 = vsel %vm938, %v1292, %v2590
      %v2677 = vsel %vm938, %v1293, %v2592
      %v2678 = vsel %vm938, %v1294, %v2594
      %v2679 = vsel %vm938, %v1295, %v2596
      %v2680 = vsel %vm938, %v1296, %v2598
      %v2681 = vsel %vm938, %v1297, %v2600
      %v2682 = vsel %vm938, %v1298, %v2602
      %vm2683 = vcmask 130048
      %v2684 = vsel %vm2683, %v2675, %v2620
      %v2685 = vsel %vm2683, %v2676, %v2622
      %v2686 = vsel %vm2683, %v2677, %v2624
      %v2687 = vsel %vm2683, %v2678, %v2626
      %v2688 = vsel %vm2683, %v2679, %v2628
      %v2689 = vsel %vm2683, %v2680, %v2630
      %v2690 = vsel %vm2683, %v2681, %v2632
      %v2691 = vsel %vm2683, %v2682, %v2634
      %vm2692 = vcmask 195584
      %v2693 = vsel %vm2692, %v2684, %v2652
      %v2694 = vsel %vm2692, %v2685, %v2654
      %v2695 = vsel %vm2692, %v2686, %v2656
      %v2696 = vsel %vm2692, %v2687, %v2658
      %v2697 = vsel %vm2692, %v2688, %v2660
      %v2698 = vsel %vm2692, %v2689, %v2662
      %v2699 = vsel %vm2692, %v2690, %v2664
      %v2700 = vsel %vm2692, %v2691, %v2666
      %2701 = vst.msk [vmem:[%s560] sm:$0xff] %vm715, %v2693
      %2702 = vst.msk [vmem:[%s560 + $0x8] sm:$0xff] %vm715, %v2694
      %2703 = vst.msk [vmem:[%s560 + $0x10] sm:$0xff] %vm715, %v2695
      %2704 = vst.msk [vmem:[%s560 + $0x18] sm:$0xff] %vm715, %v2696
      %2705 = vst.msk [vmem:[%s560 + $0x20] sm:$0xff] %vm715, %v2697
      %2706 = vst.msk [vmem:[%s560 + $0x28] sm:$0xff] %vm715, %v2698
      %2707 = vst.msk [vmem:[%s560 + $0x30] sm:$0xff] %vm715, %v2699
      %2708 = vst.msk [vmem:[%s560 + $0x38] sm:$0xff] %vm715, %v2700
      %s2709 = smul.u32 8, %s25
      %p2710 = scmp.lt.s32.totalorder %s2709, 15
      %s2711 = scalar_select %p2710, %s2709, 15
      %s2712 = smul.addr %s2711, 8
      %s2713 = scalar_lea.vmem %s12, %s2712
      %s2714 = smul.u32 8, %s25
      %p2715 = scmp.lt.s32.totalorder %s2714, 15
      %s2716 = scalar_select %p2715, %s2714, 15
      %s2717 = smul.addr %s2716, 8
      %s2718 = scalar_lea.vmem %s13, %s2717
      // Predicated region
      $region69: #{gnn_forward.9} parent=67 // pred_check
        %p2719 = pneg %p325
      $region70: #{gnn_forward.9} parent=67 // pred_check_branch
        %2721 = sbr.rel (%p2719) target = $region72
      $region71: #{gnn_forward.9} parent=67 // pred_region
        %s2722 = smul.u32 8, %s25
      $region72: #{gnn_forward.9} parent=67 // pred_fallthru
        _
      // Predicated region
      $region73: #{gnn_forward.9} parent=67 // pred_check
        %p2723 = pneg %p351
      $region74: #{gnn_forward.9} parent=67 // pred_check_branch
        %2725 = sbr.rel (%p2723) target = $region76
      $region75: #{gnn_forward.9} parent=67 // pred_region
        %s2726 = smul.u32 8, %s25
      $region76: #{gnn_forward.9} parent=67 // pred_fallthru
        _
    $region68: #{gnn_forward.9} parent=5 // pred_fallthru
      _
    %p2727 = scmp.le.s32.totalorder 2, %s20
    // Predicated region
    $region77: #{gnn_forward.9} parent=5 // pred_check
      %p2728 = pneg %p2727
    $region78: #{gnn_forward.9} parent=5 // pred_check_branch
      %2730 = sbr.rel (%p2728) target = $region80
    $region79: #{gnn_forward.9} parent=5 // pred_region
      %s2731 = ssub.s32 %s20, 2
      // Predicated region
      $region81: #{gnn_forward.9} parent=79 // pred_check
        %p2732 = pneg %p331
      $region82: #{gnn_forward.9} parent=79 // pred_check_branch
        %2734 = sbr.rel (%p2732) target = $region84
      $region83: #{gnn_forward.9} parent=79 // pred_region
        %s2735 = smul.u32 8, %s26
        %p2736 = scmp.lt.s32.totalorder %s2735, 15
        %s2737 = scalar_select %p2736, %s2735, 15
        %s2738 = smul.addr %s2737, 8
        %s2739 = scalar_lea.vmem %s12, %s2738
      $region84: #{gnn_forward.9} parent=79 // pred_fallthru
        _
      // Predicated region
      $region85: #{gnn_forward.9} parent=79 // pred_check
        %p2740 = pneg %p357
      $region86: #{gnn_forward.9} parent=79 // pred_check_branch
        %2742 = sbr.rel (%p2740) target = $region88
      $region87: #{gnn_forward.9} parent=79 // pred_region
        %s2743 = smul.u32 8, %s26
        %p2744 = scmp.lt.s32.totalorder %s2743, 15
        %s2745 = scalar_select %p2744, %s2743, 15
        %s2746 = smul.addr %s2745, 8
        %s2747 = scalar_lea.vmem %s13, %s2746
      $region88: #{gnn_forward.9} parent=79 // pred_fallthru
        _
    $region80: #{gnn_forward.9} parent=5 // pred_fallthru
      _
  $region6: #{gnn_forward.9} parent=0 // loop_footer
    %s24 = sadd.s32 1, %s20
  $region7: #{gnn_forward.9} parent=0 // loop_footer_branch
    %19 = sbr.rel target = $region3
  $region8: #{gnn_forward.9} parent=0 // loop_exit
    _

// kernel: gnn_forward.10
$region0: #{gnn_forward.10}
  #allocation0 [shape = 'u32[]', space=smem, size = 0x4, offset = 0x4, fixed_abs, tag = 'smem constant byte address 0x4 - core index']
  #allocation1 [shape = 'u32[72,128]{1,0:T(1,128)}', space=vmem, size = 0x9000, scoped, tag = 'internal scratch']
  #allocation2 [shape = 's32[1]{0}', space=sflag, size = 0x4, scoped, tag = 'scoped memory for gnn_forward.10']
  #allocation3 [shape = 'u8[512]{0}', space=smem, size = 0x200, scoped, tag = 'prefetched SMEM operand 0']
  %s0 = inlined_call_operand.vmem [shape: s32[4], index: 0, kind: input, shape index: {}]
  %s1 = inlined_call_operand.vmem [shape: bf16[128,32], index: 1, kind: input, shape index: {}]
  %s2 = inlined_call_operand.vmem [shape: f32[128,32], index: 2, kind: input, shape index: {}]
  %s3 = inlined_call_operand.vmem [shape: f32[128,1], index: 3, kind: input, shape index: {}]
  %s4 = inlined_call_operand.vmem [shape: bf16[2,32,32], index: 4, kind: input, shape index: {}]
  %s5 = inlined_call_operand.vmem [shape: f32[2,1,32], index: 5, kind: input, shape index: {}]
  %s6 = inlined_call_operand.vmem [shape: f32[128,32], index: 6, kind: output, shape index: {}]
  %s7 = sld [smem:[#allocation0]]
  $region53: #{gnn_forward.10} parent=0
    _
  %s9 = ssub.s32 1, %s7
  %s10 = scalar_select 0, %s9, %s7
  %s12 = sshll.u32 %s0, 4
  %s13 = int_to_ptr.vmem [resolvable:$true] %s12
  %15 = dma.vmem_to_smem %s13, 16, [#allocation3], [#allocation2]
  %17 = dma.done [#allocation2], 16
  %18 = sfence
  loop: start=0, step=1, limit=6
  $region2: #{gnn_forward.10} parent=0 // loop_pre_header
    _
  $region3: #{gnn_forward.10} parent=0 // loop_header
    %s20 = sphi 0, %s24
    %p21 = scmp.ge.s32.totalorder %s20, 6
    %s30 = sphi 0, %s32
    %s33 = sphi 0, %s30
    %s34 = sphi 0, %s33
    %s50 = sphi 0, %s34
    %s56 = sphi 0, %s58
    %s59 = sphi 0, %s56
    %s60 = sphi 0, %s59
    %s76 = sphi 0, %s60
    %s82 = sphi 0, %s84
    %s85 = sphi 0, %s82
    %s86 = sphi 0, %s85
    %s102 = sphi 0, %s86
    %s110 = sphi 0, %s112
    %s113 = sphi 0, %s110
    %s114 = sphi 0, %s113
    %s130 = sphi 0, %s114
    %s138 = sphi 0, %s140
    %s141 = sphi 0, %s138
    %s142 = sphi 0, %s141
    %s158 = sphi 0, %s142
    %s164 = sphi 0, %s166
    %s167 = sphi 0, %s164
    %s168 = sphi 0, %s167
    %s184 = sphi 0, %s168
  $region4: #{gnn_forward.10} parent=0 // loop_header_branch
    %23 = sbr.rel (%p21) target = $region8
  $region5: #{gnn_forward.10} parent=0 // loop_body
    %s25 = ssub.s32 %s20, 1
    %s26 = ssub.s32 %s20, 2
    %s27 = sadd.s32 %s20, 1
    %s28 = ssub.s32 %s20, %s27
    %p29 = scmp.eq.s32.totalorder %s28, 0
    %s31 = sadd.s32 %s30, 1
    %s32 = scalar_select %p29, %s30, %s31
    %p35 = pneg %p29
    %p36 = scmp.eq.s32.totalorder %s20, 3
    %p37 = por %p35, %p36
    %p38 = scmp.ne.s32.totalorder %s30, %s33
    %p39 = scmp.eq.s32.totalorder %s20, 0
    %p40 = por %p38, %p39
    %p41 = scmp.ne.s32.totalorder %s30, %s33
    %p42 = scmp.eq.s32.totalorder %s25, 3
    %p43 = por %p41, %p42
    %p44 = scmp.ne.s32.totalorder %s33, %s34
    %p45 = scmp.eq.s32.totalorder %s25, 0
    %p46 = por %p44, %p45
    %p47 = scmp.ne.s32.totalorder %s33, %s34
    %p48 = scmp.eq.s32.totalorder %s26, 3
    %p49 = por %p47, %p48
    %p51 = scmp.ne.s32.totalorder %s34, %s50
    %p52 = scmp.eq.s32.totalorder %s26, 0
    %p53 = por %p51, %p52
    %s54 = ssub.s32 %s20, %s27
    %p55 = scmp.eq.s32.totalorder %s54, 0
    %s57 = sadd.s32 %s56, 1
    %s58 = scalar_select %p55, %s56, %s57
    %p61 = pneg %p55
    %p62 = scmp.eq.s32.totalorder %s20, 3
    %p63 = por %p61, %p62
    %p64 = scmp.ne.s32.totalorder %s56, %s59
    %p65 = scmp.eq.s32.totalorder %s20, 0
    %p66 = por %p64, %p65
    %p67 = scmp.ne.s32.totalorder %s56, %s59
    %p68 = scmp.eq.s32.totalorder %s25, 3
    %p69 = por %p67, %p68
    %p70 = scmp.ne.s32.totalorder %s59, %s60
    %p71 = scmp.eq.s32.totalorder %s25, 0
    %p72 = por %p70, %p71
    %p73 = scmp.ne.s32.totalorder %s59, %s60
    %p74 = scmp.eq.s32.totalorder %s26, 3
    %p75 = por %p73, %p74
    %p77 = scmp.ne.s32.totalorder %s60, %s76
    %p78 = scmp.eq.s32.totalorder %s26, 0
    %p79 = por %p77, %p78
    %s80 = ssub.s32 %s20, %s27
    %p81 = scmp.eq.s32.totalorder %s80, 0
    %s83 = sadd.s32 %s82, 1
    %s84 = scalar_select %p81, %s82, %s83
    %p87 = pneg %p81
    %p88 = scmp.eq.s32.totalorder %s20, 3
    %p89 = por %p87, %p88
    %p90 = scmp.ne.s32.totalorder %s82, %s85
    %p91 = scmp.eq.s32.totalorder %s20, 0
    %p92 = por %p90, %p91
    %p93 = scmp.ne.s32.totalorder %s82, %s85
    %p94 = scmp.eq.s32.totalorder %s25, 3
    %p95 = por %p93, %p94
    %p96 = scmp.ne.s32.totalorder %s85, %s86
    %p97 = scmp.eq.s32.totalorder %s25, 0
    %p98 = por %p96, %p97
    %p99 = scmp.ne.s32.totalorder %s85, %s86
    %p100 = scmp.eq.s32.totalorder %s26, 3
    %p101 = por %p99, %p100
    %p103 = scmp.ne.s32.totalorder %s86, %s102
    %p104 = scmp.eq.s32.totalorder %s26, 0
    %p105 = por %p103, %p104
    %s106 = sld [smem:[#allocation3 + %s20]]
    %s107 = sld [smem:[#allocation3 + %s27]]
    %s108 = ssub.s32 %s106, %s107
    %p109 = scmp.eq.s32.totalorder %s108, 0
    %s111 = sadd.s32 %s110, 1
    %s112 = scalar_select %p109, %s110, %s111
    %p115 = pneg %p109
    %p116 = scmp.eq.s32.totalorder %s20, 3
    %p117 = por %p115, %p116
    %p118 = scmp.ne.s32.totalorder %s110, %s113
    %p119 = scmp.eq.s32.totalorder %s20, 0
    %p120 = por %p118, %p119
    %p121 = scmp.ne.s32.totalorder %s110, %s113
    %p122 = scmp.eq.s32.totalorder %s25, 3
    %p123 = por %p121, %p122
    %p124 = scmp.ne.s32.totalorder %s113, %s114
    %p125 = scmp.eq.s32.totalorder %s25, 0
    %p126 = por %p124, %p125
    %p127 = scmp.ne.s32.totalorder %s113, %s114
    %p128 = scmp.eq.s32.totalorder %s26, 3
    %p129 = por %p127, %p128
    %p131 = scmp.ne.s32.totalorder %s114, %s130
    %p132 = scmp.eq.s32.totalorder %s26, 0
    %p133 = por %p131, %p132
    %s134 = sld [smem:[#allocation3 + %s20]]
    %s135 = sld [smem:[#allocation3 + %s27]]
    %s136 = ssub.s32 %s134, %s135
    %p137 = scmp.eq.s32.totalorder %s136, 0
    %s139 = sadd.s32 %s138, 1
    %s140 = scalar_select %p137, %s138, %s139
    %p143 = pneg %p137
    %p144 = scmp.eq.s32.totalorder %s20, 3
    %p145 = por %p143, %p144
    %p146 = scmp.ne.s32.totalorder %s138, %s141
    %p147 = scmp.eq.s32.totalorder %s20, 0
    %p148 = por %p146, %p147
    %p149 = scmp.ne.s32.totalorder %s138, %s141
    %p150 = scmp.eq.s32.totalorder %s25, 3
    %p151 = por %p149, %p150
    %p152 = scmp.ne.s32.totalorder %s141, %s142
    %p153 = scmp.eq.s32.totalorder %s25, 0
    %p154 = por %p152, %p153
    %p155 = scmp.ne.s32.totalorder %s141, %s142
    %p156 = scmp.eq.s32.totalorder %s26, 3
    %p157 = por %p155, %p156
    %p159 = scmp.ne.s32.totalorder %s142, %s158
    %p160 = scmp.eq.s32.totalorder %s26, 0
    %p161 = por %p159, %p160
    %s162 = ssub.s32 %s20, %s27
    %p163 = scmp.eq.s32.totalorder %s162, 0
    %s165 = sadd.s32 %s164, 1
    %s166 = scalar_select %p163, %s164, %s165
    %p169 = pneg %p163
    %p170 = scmp.eq.s32.totalorder %s20, 3
    %p171 = por %p169, %p170
    %p172 = scmp.ne.s32.totalorder %s164, %s167
    %p173 = scmp.eq.s32.totalorder %s20, 0
    %p174 = por %p172, %p173
    %p175 = scmp.ne.s32.totalorder %s164, %s167
    %p176 = scmp.eq.s32.totalorder %s25, 3
    %p177 = por %p175, %p176
    %p178 = scmp.ne.s32.totalorder %s167, %s168
    %p179 = scmp.eq.s32.totalorder %s25, 0
    %p180 = por %p178, %p179
    %p181 = scmp.ne.s32.totalorder %s167, %s168
    %p182 = scmp.eq.s32.totalorder %s26, 3
    %p183 = por %p181, %p182
    %p185 = scmp.ne.s32.totalorder %s168, %s184
    %p186 = scmp.eq.s32.totalorder %s26, 0
    %p187 = por %p185, %p186
    %p188 = scmp.le.s32.totalorder 1, %s20
    %p189 = scmp.lt.s32.totalorder %s20, 5
    %p190 = pnand %p188, %p189
    %p191 = pneg %p190
    // Predicated region
    $region9: #{gnn_forward.10} parent=5 // pred_check
      _
    $region10: #{gnn_forward.10} parent=5 // pred_check_branch
      %193 = sbr.rel (%p190) target = $region12
    $region11: #{gnn_forward.10} parent=5 // pred_region
      %s194 = ssub.s32 %s20, 1
    $region12: #{gnn_forward.10} parent=5 // pred_fallthru
      _
    %p195 = scmp.lt.s32.totalorder %s20, 4
    // Predicated region
    $region13: #{gnn_forward.10} parent=5 // pred_check
      %p196 = pneg %p195
    $region14: #{gnn_forward.10} parent=5 // pred_check_branch
      %198 = sbr.rel (%p196) target = $region16
    $region15: #{gnn_forward.10} parent=5 // pred_region
      // Predicated region
      $region17: #{gnn_forward.10} parent=15 // pred_check
        %p199 = pneg %p40
      $region18: #{gnn_forward.10} parent=15 // pred_check_branch
        %201 = sbr.rel (%p199) target = $region20
      $region19: #{gnn_forward.10} parent=15 // pred_region
        %s202 = smul.u32 4, %s20
        %p203 = scmp.lt.s32.totalorder %s202, 15
        %s204 = scalar_select %p203, %s202, 15
        %s205 = smul.addr %s204, 4
        %s206 = scalar_lea.vmem %s1, %s205
        %s207 = smul.u32 4, %s20
      $region20: #{gnn_forward.10} parent=15 // pred_fallthru
        _
      // Predicated region
      $region21: #{gnn_forward.10} parent=15 // pred_check
        %p208 = pneg %p66
      $region22: #{gnn_forward.10} parent=15 // pred_check_branch
        %210 = sbr.rel (%p208) target = $region24
      $region23: #{gnn_forward.10} parent=15 // pred_region
        %s211 = smul.u32 4, %s20
        %p212 = scmp.lt.s32.totalorder %s211, 15
        %s213 = scalar_select %p212, %s211, 15
        %s214 = smul.addr %s213, 8
        %s215 = scalar_lea.vmem %s2, %s214
        %s216 = smul.u32 4, %s20
      $region24: #{gnn_forward.10} parent=15 // pred_fallthru
        _
      // Predicated region
      $region25: #{gnn_forward.10} parent=15 // pred_check
        %p217 = pneg %p92
      $region26: #{gnn_forward.10} parent=15 // pred_check_branch
        %219 = sbr.rel (%p217) target = $region28
      $region27: #{gnn_forward.10} parent=15 // pred_region
        %s220 = smul.u32 4, %s20
        %p221 = scmp.lt.s32.totalorder %s220, 15
        %s222 = scalar_select %p221, %s220, 15
        %s223 = smul.addr %s222, 8
        %s224 = scalar_lea.vmem %s3, %s223
        %s225 = smul.u32 4, %s20
      $region28: #{gnn_forward.10} parent=15 // pred_fallthru
        _
      // Predicated region
      $region29: #{gnn_forward.10} parent=15 // pred_check
        %p226 = pneg %p120
      $region30: #{gnn_forward.10} parent=15 // pred_check_branch
        %228 = sbr.rel (%p226) target = $region32
      $region31: #{gnn_forward.10} parent=15 // pred_region
        %s229 = sld [smem:[#allocation3 + %s20]]
        %p230 = scmp.lt.s32.totalorder %s229, 1
        %s231 = scalar_select %p230, %s229, 1
        %s232 = smul.addr %s231, 4
        %s233 = smul.addr %s232, 4
        %s234 = scalar_lea.vmem %s4, %s233
        %s235 = sld [smem:[#allocation3 + %s20]]
      $region32: #{gnn_forward.10} parent=15 // pred_fallthru
        _
      // Predicated region
      $region33: #{gnn_forward.10} parent=15 // pred_check
        %p236 = pneg %p148
      $region34: #{gnn_forward.10} parent=15 // pred_check_branch
        %238 = sbr.rel (%p236) target = $region36
      $region35: #{gnn_forward.10} parent=15 // pred_region
        %s239 = sld [smem:[#allocation3 + %s20]]
        %p240 = scmp.lt.s32.totalorder %s239, 1
        %s241 = scalar_select %p240, %s239, 1
        %s242 = scalar_lea.vmem %s5, %s241
        %s243 = sld [smem:[#allocation3 + %s20]]
      $region36: #{gnn_forward.10} parent=15 // pred_fallthru
        _
    $region16: #{gnn_forward.10} parent=5 // pred_fallthru
      _
    %p244 = scmp.le.s32.totalorder 1, %s20
    %p245 = scmp.lt.s32.totalorder %s20, 5
    %p246 = pnand %p244, %p245
    %p247 = pneg %p246
    // Predicated region
    $region37: #{gnn_forward.10} parent=5 // pred_check
      _
    $region38: #{gnn_forward.10} parent=5 // pred_check_branch
      %249 = sbr.rel (%p246) target = $region40
    $region39: #{gnn_forward.10} parent=5 // pred_region
      %s250 = ssub.s32 %s20, 1
      %s251 = smul.u32 4, %s25
      %p252 = scmp.lt.s32.totalorder %s251, 15
      %s253 = scalar_select %p252, %s251, 15
      %s254 = smul.addr %s253, 4
      %s255 = scalar_lea.vmem %s1, %s254
      %p256 = pneg %p46
      %p257 = pneg %p43
      %s258 = smul.u32 4, %s25
      %p259 = scmp.lt.s32.totalorder %s258, 15
      %s260 = scalar_select %p259, %s258, 15
      %s261 = smul.addr %s260, 8
      %s262 = scalar_lea.vmem %s2, %s261
      %p263 = pneg %p72
      %p264 = pneg %p69
      %s265 = smul.u32 4, %s25
      %p266 = scmp.lt.s32.totalorder %s265, 15
      %s267 = scalar_select %p266, %s265, 15
      %s268 = smul.addr %s267, 8
      %s269 = scalar_lea.vmem %s3, %s268
      %p270 = pneg %p98
      %p271 = pneg %p95
      %s272 = sld [smem:[#allocation3 + %s25]]
      %p273 = scmp.lt.s32.totalorder %s272, 1
      %s274 = scalar_select %p273, %s272, 1
      %s275 = smul.addr %s274, 4
      %s276 = smul.addr %s275, 4
      %s277 = scalar_lea.vmem %s4, %s276
      %p278 = pneg %p126
      %p279 = pneg %p123
      %s280 = sld [smem:[#allocation3 + %s25]]
      %p281 = scmp.lt.s32.totalorder %s280, 1
      %s282 = scalar_select %p281, %s280, 1
      %s283 = scalar_lea.vmem %s5, %s282
      %p284 = pneg %p154
      %p285 = pneg %p151
      %p286 = pneg %p180
      %p287 = pneg %p177
      %s288 = smul.u32 4, %s25
      %p289 = scmp.lt.s32.totalorder %s288, 15
      %s290 = scalar_select %p289, %s288, 15
      %s291 = smul.addr %s290, 8
      %s292 = scalar_lea.vmem %s6, %s291
      %s293 = smul.u32 4, %s25
      %p294 = scmp.lt.s32.totalorder %s293, 15
      %s295 = scalar_select %p294, %s293, 15
      %s296 = smul.addr %s295, 4
      %s297 = scalar_lea.vmem %s1, %s296
      %s298 = smul.u32 4, %s25
      %s299 = smul.u32 4, %s25
      %p300 = scmp.lt.s32.totalorder %s299, 15
      %s301 = scalar_select %p300, %s299, 15
      %s302 = smul.addr %s301, 8
      %s303 = scalar_lea.vmem %s2, %s302
      %s304 = smul.u32 4, %s25
      %s305 = smul.u32 4, %s25
      %p306 = scmp.lt.s32.totalorder %s305, 15
      %s307 = scalar_select %p306, %s305, 15
      %s308 = smul.addr %s307, 8
      %s309 = scalar_lea.vmem %s3, %s308
      %s310 = smul.u32 4, %s25
      %s311 = sld [smem:[#allocation3 + %s25]]
      %p312 = scmp.lt.s32.totalorder %s311, 1
      %s313 = scalar_select %p312, %s311, 1
      %s314 = smul.addr %s313, 4
      %s315 = smul.addr %s314, 4
      %s316 = scalar_lea.vmem %s4, %s315
      %s317 = sld [smem:[#allocation3 + %s25]]
      %s318 = sld [smem:[#allocation3 + %s25]]
      %p319 = scmp.lt.s32.totalorder %s318, 1
      %s320 = scalar_select %p319, %s318, 1
      %s321 = scalar_lea.vmem %s5, %s320
      %s322 = sld [smem:[#allocation3 + %s25]]
      %s323 = smul.u32 4, %s25
      %p324 = scmp.lt.s32.totalorder %s323, 15
      %s325 = scalar_select %p324, %s323, 15
      %s326 = smul.addr %s325, 8
      %s327 = scalar_lea.vmem %s6, %s326
      %s328 = smul.u32 4, %s25
      %v330 = vld [vmem:[%s297] sm:$0xf]
      %v331 = vld [vmem:[%s297 + $0x4] sm:$0xf]
      %v332 = vld [vmem:[%s297 + $0x8] sm:$0xf]
      %v333 = vld [vmem:[%s297 + $0xc] sm:$0xf]
      %v334 = vld [vmem:[%s316] sm:$0xf]
      %v335 = vld [vmem:[%s316 + $0x4] sm:$0xf]
      %v336 = vld [vmem:[%s316 + $0x8] sm:$0xf]
      %v337 = vld [vmem:[%s316 + $0xc] sm:$0xf]
      %v338 = vld [vmem:[%s321] sm:$0x1]
      %v340 = vperm.slane %v338, 0
      %v346 = vunpack.c.l.b16 %v330
      %v347 = vunpack.c.l.b16 %v331
      %v348 = vunpack.c.l.b16 %v332
      %v349 = vunpack.c.l.b16 %v333
      %v350 = vpack.c.b16 %v347, %v346
      %v351 = vpack.c.b16 %v349, %v348
      %v356 = vunpack.c.l.b16 %v334
      %v357 = vunpack.c.l.b16 %v335
      %v358 = vunpack.c.l.b16 %v336
      %v359 = vunpack.c.l.b16 %v337
      %v360 = vpack.c.b16 %v357, %v356
      %v361 = vpack.c.b16 %v359, %v358
      %vm364 = vcmask 261120
      %v366 = vsel %vm364, %v350, 0
      %v369 = vsel %vm364, %v351, 0
      %371 = vmatpush.bf16.msra.mxu0 0
      %372 = vmatpush.bf16.msra.mxu0 0
      %373 = vmatpush.bf16.msra.mxu0 0
      %374 = vmatpush.bf16.msra.mxu0 0
      %375 = vmatpush.bf16.msra.mxu0 0
      %376 = vmatpush.bf16.msra.mxu0 0
      %377 = vmatpush.bf16.msra.mxu0 %v361
      %378 = vmatpush.bf16.msra.mxu0 %v360
      %379 = vmatmul.bf16.gmra.mxu0 %v366
      %v380 = vpop.f32.mrf.mxu0
      %v381 = vadd.f32 %v340, %v380
      %v382 = vpop.f32.mrf.mxu0
      %v383 = vadd.f32 %v340, %v382
      %384 = vmatmul.bf16.gmra.mxu0 %v369
      %v385 = vpop.f32.mrf.mxu0
      %v386 = vadd.f32 %v340, %v385
      %v387 = vpop.f32.mrf.mxu0
      %v388 = vadd.f32 %v340, %v387
      %389 = vdwg.mxu0
      %v390 = vld [vmem:[%s309] sm:$0xff]
      %v391 = vld [vmem:[%s309 + $0x8] sm:$0xff]
      %v392 = vld [vmem:[%s309 + $0x10] sm:$0xff]
      %v393 = vld [vmem:[%s309 + $0x18] sm:$0xff]
      %395 = vset.pattern.permute.xlu0 0
      %396 = vperm.xlu0 %395, %v390
      %v397 = vpop.permute.xlu0 %396
      %400 = vset.pattern.permute.xlu0 0
      %401 = vperm.xlu0 %400, %v391
      %v402 = vpop.permute.xlu0 %401
      %405 = vset.pattern.permute.xlu0 0
      %406 = vperm.xlu0 %405, %v392
      %v407 = vpop.permute.xlu0 %406
      %410 = vset.pattern.permute.xlu0 0
      %411 = vperm.xlu0 %410, %v393
      %v412 = vpop.permute.xlu0 %411
      %v414 = vmul.f32 %v381, %v397
      %v415 = vmul.f32 %v383, %v402
      %v416 = vmul.f32 %v386, %v407
      %v417 = vmul.f32 %v388, %v412
      %v418 = vld [vmem:[%s303] sm:$0xff]
      %v419 = vld [vmem:[%s303 + $0x8] sm:$0xff]
      %v420 = vld [vmem:[%s303 + $0x10] sm:$0xff]
      %v421 = vld [vmem:[%s303 + $0x18] sm:$0xff]
      %v422 = vsub.f32 1.0, %v390
      %v423 = vsub.f32 1.0, %v391
      %v424 = vsub.f32 1.0, %v392
      %v425 = vsub.f32 1.0, %v393
      %427 = vset.pattern.permute.xlu0 0
      %428 = vperm.xlu0 %427, %v422
      %v429 = vpop.permute.xlu0 %428
      %432 = vset.pattern.permute.xlu0 0
      %433 = vperm.xlu0 %432, %v423
      %v434 = vpop.permute.xlu0 %433
      %437 = vset.pattern.permute.xlu0 0
      %438 = vperm.xlu0 %437, %v424
      %v439 = vpop.permute.xlu0 %438
      %442 = vset.pattern.permute.xlu0 0
      %443 = vperm.xlu0 %442, %v425
      %v444 = vpop.permute.xlu0 %443
      %v446 = vmul.f32 %v418, %v429
      %v447 = vmul.f32 %v419, %v434
      %v448 = vmul.f32 %v420, %v439
      %v449 = vmul.f32 %v421, %v444
      %v450 = vadd.f32 %v414, %v446
      %v451 = vadd.f32 %v415, %v447
      %v452 = vadd.f32 %v416, %v448
      %v453 = vadd.f32 %v417, %v449
      %454 = vst.msk [vmem:[%s327] sm:$0xff] %vm364, %v450
      %455 = vst.msk [vmem:[%s327 + $0x8] sm:$0xff] %vm364, %v451
      %456 = vst.msk [vmem:[%s327 + $0x10] sm:$0xff] %vm364, %v452
      %457 = vst.msk [vmem:[%s327 + $0x18] sm:$0xff] %vm364, %v453
      %s458 = smul.u32 4, %s25
      %p459 = scmp.lt.s32.totalorder %s458, 15
      %s460 = scalar_select %p459, %s458, 15
      %s461 = smul.addr %s460, 8
      %s462 = scalar_lea.vmem %s6, %s461
      // Predicated region
      $region41: #{gnn_forward.10} parent=39 // pred_check
        %p463 = pneg %p177
      $region42: #{gnn_forward.10} parent=39 // pred_check_branch
        %465 = sbr.rel (%p463) target = $region44
      $region43: #{gnn_forward.10} parent=39 // pred_region
        %s466 = smul.u32 4, %s25
      $region44: #{gnn_forward.10} parent=39 // pred_fallthru
        _
    $region40: #{gnn_forward.10} parent=5 // pred_fallthru
      _
    %p467 = scmp.le.s32.totalorder 2, %s20
    // Predicated region
    $region45: #{gnn_forward.10} parent=5 // pred_check
      %p468 = pneg %p467
    $region46: #{gnn_forward.10} parent=5 // pred_check_branch
      %470 = sbr.rel (%p468) target = $region48
    $region47: #{gnn_forward.10} parent=5 // pred_region
      %s471 = ssub.s32 %s20, 2
      // Predicated region
      $region49: #{gnn_forward.10} parent=47 // pred_check
        %p472 = pneg %p183
      $region50: #{gnn_forward.10} parent=47 // pred_check_branch
        %474 = sbr.rel (%p472) target = $region52
      $region51: #{gnn_forward.10} parent=47 // pred_region
        %s475 = smul.u32 4, %s26
        %p476 = scmp.lt.s32.totalorder %s475, 15
        %s477 = scalar_select %p476, %s475, 15
        %s478 = smul.addr %s477, 8
        %s479 = scalar_lea.vmem %s6, %s478
      $region52: #{gnn_forward.10} parent=47 // pred_fallthru
        _
    $region48: #{gnn_forward.10} parent=5 // pred_fallthru
      _
  $region6: #{gnn_forward.10} parent=0 // loop_footer
    %s24 = sadd.s32 1, %s20
  $region7: #{gnn_forward.10} parent=0 // loop_footer_branch
    %19 = sbr.rel target = $region3
  $region8: #{gnn_forward.10} parent=0 // loop_exit
    _

</llo_original>
